<compile_context>
chip_gen: v5e
topology: v5e:2x2
jax: 0.10.0
libtpu: 0.0.40
codegen_flags: <defaults>
</compile_context>

<pallas_src>
import math
from functools import partial

import jax
import jax.numpy as jnp
from jax.experimental import pallas as pl
from jax.experimental.pallas import tpu as pltpu


def _round_up(x, m):
    return ((x + m - 1) // m) * m


def _pick_strip_rows(H, Wp, m_target=256):
    """Largest divisor of H with SH*Wp <= m_target rows (keeps the f32 accumulator
    <=~128 KB so it stays vreg-resident); small images run as a single strip."""
    sh = 1
    for cand in range(1, H + 1):
        if H % cand == 0 and cand * Wp <= m_target:
            sh = cand
    return sh


def _fold_bn(gamma, beta, mean, var, eps=1e-5):
    scale = (gamma / jnp.sqrt(var + eps)).astype(jnp.float32)
    bias = (beta - mean * scale).astype(jnp.float32)
    return scale.reshape(1, -1), bias.reshape(1, -1)


# ----------------------------------------------------------------------------
# Public forward (NHWC native; NCHW wrapper for PyTorch layout parity)
# ----------------------------------------------------------------------------
@partial(jax.jit, static_argnames=("use_bf16",))
def basic_block_forward_nhwc(x_nhwc, params, use_bf16=False):
    N, H, W, C = x_nhwc.shape
    assert params["w1_hwio"].shape[2] == C and params["w1_hwio"].shape[3] == C, \
        "stride=1 BasicBlock requires inplanes == planes (identity residual)"
    cdt = jnp.bfloat16 if use_bf16 else jnp.float32   # MXU operand dtype

    Wp = _round_up(W + 1, 8)           # >=1 zero pad column on the right, 8-aligned
    SH = _pick_strip_rows(H, Wp)       # rows per strip
    n_strips = H // SH
    M = SH * Wp                        # matmul M per strip (pad cols included)
    NT = C if C <= 128 else 128        # Cout tile (accumulator stays in vregs)
    assert C % NT == 0, "channel count must be <=128 or a multiple of 128"
    n_tiles = C // NT

    w1 = params["w1_hwio"].reshape(9, C, C).astype(cdt)   # tap-major (kh*3+kw, Cin, Cout)
    w2 = params["w2_hwio"].reshape(9, C, C).astype(cdt)
    s1, b1 = _fold_bn(params["bn1_gamma"], params["bn1_beta"],
                      params["bn1_mean"], params["bn1_var"])
    s2, b2 = _fold_bn(params["bn2_gamma"], params["bn2_beta"],
                      params["bn2_mean"], params["bn2_var"])

    def kernel(x_ref, w1_ref, w2_ref, s1_ref, b1_ref, s2_ref, b2_ref,
               out_ref, xp_ref, mid_ref):
        f32 = jnp.float32

        def shift_down(p):   # out[i] = p[i-1], out[0] = 0   (kw=0 / left tap)
            z = jnp.zeros((1, p.shape[1]), p.dtype)
            return jnp.concatenate([z, p[:-1, :]], axis=0)

        def shift_up(p):     # out[i] = p[i+1], out[-1] = 0  (kw=2 / right tap)
            z = jnp.zeros((1, p.shape[1]), p.dtype)
            return jnp.concatenate([p[1:, :], z], axis=0)

        def conv_tile(src_ref, w_ref, h0, t):
            """3x3 conv (stride 1) for output rows [h0, h0+SH), Cout tile t.
            src_ref rows are offset by +1 (row halo); returns (M, NT) f32."""
            sl = slice(t * NT, (t + 1) * NT)
            acc = jnp.zeros((M, NT), f32)
            for kh in range(3):
                # Aligned leading-dim load; flatten is layout-free (Wp % 8 == 0).
                rows = src_ref[pl.ds(h0 + kh, SH), :, :].reshape(M, C)
                ops = (shift_down(rows), rows, shift_up(rows))
                for kw in range(3):
                    acc = acc + jnp.dot(ops[kw].astype(cdt),
                                        w_ref[3 * kh + kw, :, sl],
                                        preferred_element_type=f32)
            return acc

        # --- per-image init: ONLY halo rows + W->Wp pad columns are zeroed ---
        zrow = jnp.zeros((Wp, C), f32)
        xp_ref[0, :, :] = zrow
        xp_ref[H + 1, :, :] = zrow
        mid_ref[0, :, :] = zrow
        mid_ref[H + 1, :, :] = zrow
        xp_ref[1:H + 1, 0:W, :] = x_ref[0].astype(f32)
        xp_ref[1:H + 1, W:Wp, :] = jnp.zeros((H, Wp - W, C), f32)

        # Hoisted loop invariants (BN affine, pad-column mask).
        s1v = s1_ref[...]
        b1v = b1_ref[...]
        s2v = s2_ref[...]
        b2v = b2_ref[...]
        col_mask = (jax.lax.broadcasted_iota(jnp.int32, (M, 1), 0) % Wp < W
                    ).astype(f32)

        # ---- conv1 + bn1 + relu -> mid (never leaves VMEM) ----
        def conv1_body(i, carry):
            h0 = i * SH
            for t in range(n_tiles):
                sl = slice(t * NT, (t + 1) * NT)
                y = conv_tile(xp_ref, w1_ref, h0, t)
                y = jnp.maximum(y * s1v[:, sl] + b1v[:, sl], 0.0) * col_mask
                mid_ref[pl.ds(h0 + 1, SH), :, sl] = y.reshape(SH, Wp, NT)
            return carry

        # ---- conv2 + bn2 + residual add + relu -> output block ----
        def conv2_body(i, carry):
            h0 = i * SH
            for t in range(n_tiles):
                sl = slice(t * NT, (t + 1) * NT)
                y = conv_tile(mid_ref, w2_ref, h0, t)
                res = xp_ref[pl.ds(h0 + 1, SH), :, sl].reshape(M, NT)
                o = jnp.maximum(y * s2v[:, sl] + b2v[:, sl] + res, 0.0)
                o = o.reshape(SH, Wp, NT)[:, 0:W, :]
                out_ref[0, pl.ds(h0, SH), :, sl] = o.astype(out_ref.dtype)
            return carry

        jax.lax.fori_loop(0, n_strips, conv1_body, 0)
        jax.lax.fori_loop(0, n_strips, conv2_body, 0)

    flops = 2 * N * 2 * H * W * 9 * C * C              # 2 convs, 2*MACs
    wbytes = 2 if use_bf16 else 4
    bytes_accessed = 2 * N * H * W * C * 4 + 2 * 9 * C * C * wbytes + 4 * C * 4
    cost = pl.CostEstimate(flops=flops, transcendentals=0,
                           bytes_accessed=bytes_accessed)

    return pl.pallas_call(
        kernel,
        out_shape=jax.ShapeDtypeStruct((N, H, W, C), jnp.float32),
        grid=(N,),
        in_specs=[
            pl.BlockSpec((1, H, W, C), lambda n: (n, 0, 0, 0)),   # x (also residual)
            pl.BlockSpec((9, C, C), lambda n: (0, 0, 0)),         # w1 (tap-major)
            pl.BlockSpec((9, C, C), lambda n: (0, 0, 0)),         # w2
            pl.BlockSpec((1, C), lambda n: (0, 0)),               # bn1 scale
            pl.BlockSpec((1, C), lambda n: (0, 0)),               # bn1 bias
            pl.BlockSpec((1, C), lambda n: (0, 0)),               # bn2 scale
            pl.BlockSpec((1, C), lambda n: (0, 0)),               # bn2 bias
        ],
        out_specs=pl.BlockSpec((1, H, W, C), lambda n: (n, 0, 0, 0)),
        scratch_shapes=[
            pltpu.VMEM((H + 2, Wp, C), jnp.float32),   # row-halo'd, W-padded input
            pltpu.VMEM((H + 2, Wp, C), jnp.float32),   # row-halo'd, W-padded conv1 act
        ],
        compiler_params=pltpu.CompilerParams(
            dimension_semantics=("parallel",),
            vmem_limit_bytes=32 * 1024 * 1024),
        cost_estimate=cost,
    )(x_nhwc.astype(jnp.float32), w1, w2, s1, b1, s2, b2)


@jax.jit
def basic_block_forward(x_nchw, params):
    """PyTorch-layout entry point. Prefer the NHWC path to avoid these transposes."""
    x = jnp.transpose(x_nchw, (0, 2, 3, 1))
    out = basic_block_forward_nhwc(x, params)
    return jnp.transpose(out, (0, 3, 1, 2))


# ----------------------------------------------------------------------------
# Pure-JAX reference (correctness check)
# ----------------------------------------------------------------------------
def ref_forward_nhwc(x, params):
    def conv(x, w_hwio):
        return jax.lax.conv_general_dilated(
            x, w_hwio, window_strides=(1, 1), padding=((1, 1), (1, 1)),
            dimension_numbers=("NHWC", "HWIO", "NHWC"))

    def bn(x, g, b, m, v, eps=1e-5):
        return (x - m) / jnp.sqrt(v + eps) * g + b

    out = jnp.maximum(bn(conv(x, params["w1_hwio"]), params["bn1_gamma"],
                         params["bn1_beta"], params["bn1_mean"], params["bn1_var"]), 0.0)
    out = bn(conv(out, params["w2_hwio"]), params["bn2_gamma"],
             params["bn2_beta"], params["bn2_mean"], params["bn2_var"])
    return jnp.maximum(out + x, 0.0)


# ----------------------------------------------------------------------------
# Deterministic parameter init + smoke test
# ----------------------------------------------------------------------------
def init_params(key, inplanes, planes):
    ks = jax.random.split(key, 8)
    fan1, fan2 = inplanes * 9, planes * 9
    return {
        "w1_hwio": jax.random.normal(ks[0], (3, 3, inplanes, planes), jnp.float32)
        / math.sqrt(fan1),
        "w2_hwio": jax.random.normal(ks[1], (3, 3, planes, planes), jnp.float32)
        / math.sqrt(fan2),
        "bn1_gamma": 1.0 + 0.1 * jax.random.normal(ks[2], (planes,), jnp.float32),
        "bn1_beta": 0.1 * jax.random.normal(ks[3], (planes,), jnp.float32),
        "bn1_mean": 0.05 * jax.random.normal(ks[4], (planes,), jnp.float32),
        "bn1_var": 1.0 + 0.1 * jnp.abs(jax.random.normal(ks[5], (planes,), jnp.float32)),
        "bn2_gamma": 1.0 + 0.1 * jax.random.normal(ks[6], (planes,), jnp.float32),
        "bn2_beta": 0.1 * jax.random.normal(ks[7], (planes,), jnp.float32),
        "bn2_mean": jnp.zeros((planes,), jnp.float32),
        "bn2_var": jnp.ones((planes,), jnp.float32),
    }


if __name__ == "__main__":
    key = jax.random.PRNGKey(0)
    N, C, H, W = 2, 8, 16, 16            # inplanes = planes = 8, stride = 1
    kx, kp = jax.random.split(key)
    params = init_params(kp, inplanes=C, planes=C)

    # Primary NHWC path (f32 MXU operands).
    x_nhwc = jax.random.normal(kx, (N, H, W, C), jnp.float32)
    out = jax.block_until_ready(basic_block_forward_nhwc(x_nhwc, params))
    ref = ref_forward_nhwc(x_nhwc, params)
    assert out.shape == (N, H, W, C)
    assert jnp.allclose(out, ref, atol=1e-4, rtol=1e-4), \
        float(jnp.max(jnp.abs(out - ref)))

    # bf16-MXU operands with f32 accumulation (v6e/v7x fast path; looser tolerance).
    out_bf = jax.block_until_ready(
        basic_block_forward_nhwc(x_nhwc, params, use_bf16=True))
    assert jnp.allclose(out_bf, ref, atol=5e-2, rtol=5e-2), \
        float(jnp.max(jnp.abs(out_bf - ref)))

    # PyTorch-layout (NCHW) wrapper parity.
    x_nchw = jnp.transpose(x_nhwc, (0, 3, 1, 2))
    out_nchw = jax.block_until_ready(basic_block_forward(x_nchw, params))
    ref_nchw = jnp.transpose(ref, (0, 3, 1, 2))
    assert out_nchw.shape == (N, C, H, W)
    assert jnp.allclose(out_nchw, ref_nchw, atol=1e-4, rtol=1e-4), \
        float(jnp.max(jnp.abs(out_nchw - ref_nchw)))

    print("KERNEL_OK")
</pallas_src>

<mosaic_0001>
module attributes {stable_mosaic.version = 11 : i64} {
  func.func @kernel(%arg0: i32, %arg1: memref<1x16x16x8xf32, #tpu.memory_space<vmem>>, %arg2: memref<9x8x8xf32, #tpu.memory_space<vmem>>, %arg3: memref<9x8x8xf32, #tpu.memory_space<vmem>>, %arg4: memref<1x8xf32, #tpu.memory_space<vmem>>, %arg5: memref<1x8xf32, #tpu.memory_space<vmem>>, %arg6: memref<1x8xf32, #tpu.memory_space<vmem>>, %arg7: memref<1x8xf32, #tpu.memory_space<vmem>>, %arg8: memref<1x16x16x8xf32, #tpu.memory_space<vmem>>, %arg9: memref<18x24x8xf32, #tpu.memory_space<vmem>>, %arg10: memref<18x24x8xf32, #tpu.memory_space<vmem>>) attributes {dimension_semantics = [#tpu.dimension_semantics<parallel>], iteration_bounds = array<i64: 2>, scalar_prefetch = 0 : i64, scratch_operands = 2 : i64, tpu.core_type = #tpu.core_type<tc>, window_params = [{transform_indices = @transform_0, window_bounds = array<i64: 1, 16, 16, 8>}, {pipeline_mode = #tpu.pipeline_mode<synchronous>, transform_indices = @transform_1, window_bounds = array<i64: 9, 8, 8>}, {pipeline_mode = #tpu.pipeline_mode<synchronous>, transform_indices = @transform_2, window_bounds = array<i64: 9, 8, 8>}, {pipeline_mode = #tpu.pipeline_mode<synchronous>, transform_indices = @transform_3, window_bounds = array<i64: 1, 8>}, {pipeline_mode = #tpu.pipeline_mode<synchronous>, transform_indices = @transform_4, window_bounds = array<i64: 1, 8>}, {pipeline_mode = #tpu.pipeline_mode<synchronous>, transform_indices = @transform_5, window_bounds = array<i64: 1, 8>}, {pipeline_mode = #tpu.pipeline_mode<synchronous>, transform_indices = @transform_6, window_bounds = array<i64: 1, 8>}, {transform_indices = @transform_7, window_bounds = array<i64: 1, 16, 16, 8>}]} {
    %cst = arith.constant 0.000000e+00 : f32
    %0 = vector.broadcast %cst : f32 to vector<24x8xf32>
    %c0 = arith.constant 0 : index
    %c0_0 = arith.constant 0 : index
    %c0_1 = arith.constant 0 : index
    %1 = vector.load %arg9[%c0, %c0_0, %c0_1] : memref<18x24x8xf32, #tpu.memory_space<vmem>>, vector<1x24x8xf32>
    %2 = vector.shape_cast %1 : vector<1x24x8xf32> to vector<24x8xf32>
    %3 = vector.shape_cast %0 : vector<24x8xf32> to vector<1x24x8xf32>
    tpu.vector_store %arg9[%c0, %c0_0, %c0_1], %3 {strides = array<i32>} : memref<18x24x8xf32, #tpu.memory_space<vmem>>, vector<1x24x8xf32>,
    %c17 = arith.constant 17 : index
    %c0_2 = arith.constant 0 : index
    %c0_3 = arith.constant 0 : index
    %4 = vector.load %arg9[%c17, %c0_2, %c0_3] : memref<18x24x8xf32, #tpu.memory_space<vmem>>, vector<1x24x8xf32>
    %5 = vector.shape_cast %4 : vector<1x24x8xf32> to vector<24x8xf32>
    %6 = vector.shape_cast %0 : vector<24x8xf32> to vector<1x24x8xf32>
    tpu.vector_store %arg9[%c17, %c0_2, %c0_3], %6 {strides = array<i32>} : memref<18x24x8xf32, #tpu.memory_space<vmem>>, vector<1x24x8xf32>,
    %c0_4 = arith.constant 0 : index
    %c0_5 = arith.constant 0 : index
    %c0_6 = arith.constant 0 : index
    %7 = vector.load %arg10[%c0_4, %c0_5, %c0_6] : memref<18x24x8xf32, #tpu.memory_space<vmem>>, vector<1x24x8xf32>
    %8 = vector.shape_cast %7 : vector<1x24x8xf32> to vector<24x8xf32>
    %9 = vector.shape_cast %0 : vector<24x8xf32> to vector<1x24x8xf32>
    tpu.vector_store %arg10[%c0_4, %c0_5, %c0_6], %9 {strides = array<i32>} : memref<18x24x8xf32, #tpu.memory_space<vmem>>, vector<1x24x8xf32>,
    %c17_7 = arith.constant 17 : index
    %c0_8 = arith.constant 0 : index
    %c0_9 = arith.constant 0 : index
    %10 = vector.load %arg10[%c17_7, %c0_8, %c0_9] : memref<18x24x8xf32, #tpu.memory_space<vmem>>, vector<1x24x8xf32>
    %11 = vector.shape_cast %10 : vector<1x24x8xf32> to vector<24x8xf32>
    %12 = vector.shape_cast %0 : vector<24x8xf32> to vector<1x24x8xf32>
    tpu.vector_store %arg10[%c17_7, %c0_8, %c0_9], %12 {strides = array<i32>} : memref<18x24x8xf32, #tpu.memory_space<vmem>>, vector<1x24x8xf32>,
    %c0_10 = arith.constant 0 : index
    %c0_11 = arith.constant 0 : index
    %c0_12 = arith.constant 0 : index
    %c0_13 = arith.constant 0 : index
    %13 = vector.load %arg1[%c0_10, %c0_11, %c0_12, %c0_13] : memref<1x16x16x8xf32, #tpu.memory_space<vmem>>, vector<1x16x16x8xf32>
    %14 = vector.shape_cast %13 : vector<1x16x16x8xf32> to vector<16x16x8xf32>
    %c1 = arith.constant 1 : index
    %c0_14 = arith.constant 0 : index
    %c0_15 = arith.constant 0 : index
    %15 = vector.load %arg9[%c1, %c0_14, %c0_15] : memref<18x24x8xf32, #tpu.memory_space<vmem>>, vector<16x16x8xf32>
    tpu.vector_store %arg9[%c1, %c0_14, %c0_15], %14 {strides = array<i32>} : memref<18x24x8xf32, #tpu.memory_space<vmem>>, vector<16x16x8xf32>,
    %cst_16 = arith.constant 0.000000e+00 : f32
    %16 = vector.broadcast %cst_16 : f32 to vector<16x8x8xf32>
    %c1_17 = arith.constant 1 : index
    %c16 = arith.constant 16 : index
    %c0_18 = arith.constant 0 : index
    %17 = vector.load %arg9[%c1_17, %c16, %c0_18] : memref<18x24x8xf32, #tpu.memory_space<vmem>>, vector<16x8x8xf32>
    tpu.vector_store %arg9[%c1_17, %c16, %c0_18], %16 {strides = array<i32>} : memref<18x24x8xf32, #tpu.memory_space<vmem>>, vector<16x8x8xf32>,
    %c0_19 = arith.constant 0 : index
    %c0_20 = arith.constant 0 : index
    %18 = vector.load %arg4[%c0_19, %c0_20] : memref<1x8xf32, #tpu.memory_space<vmem>>, vector<1x8xf32>
    %c0_21 = arith.constant 0 : index
    %c0_22 = arith.constant 0 : index
    %19 = vector.load %arg5[%c0_21, %c0_22] : memref<1x8xf32, #tpu.memory_space<vmem>>, vector<1x8xf32>
    %c0_23 = arith.constant 0 : index
    %c0_24 = arith.constant 0 : index
    %20 = vector.load %arg6[%c0_23, %c0_24] : memref<1x8xf32, #tpu.memory_space<vmem>>, vector<1x8xf32>
    %c0_25 = arith.constant 0 : index
    %c0_26 = arith.constant 0 : index
    %21 = vector.load %arg7[%c0_25, %c0_26] : memref<1x8xf32, #tpu.memory_space<vmem>>, vector<1x8xf32>
    %22 = tpu.iota {dimensions = array<i32: 0>} : vector<192x1xi32>
    %c24_i32 = arith.constant 24 : i32
    %c0_i32 = arith.constant 0 : i32
    %23 = arith.cmpi eq, %c24_i32, %c0_i32 : i32
    %c1_i32 = arith.constant 1 : i32
    %24 = arith.select %23, %c1_i32, %c24_i32 : i32
    %25 = vector.broadcast %24 : i32 to vector<192x1xi32>
    %26 = arith.remsi %22, %25 : vector<192x1xi32>
    %c0_i32_27 = arith.constant 0 : i32
    %27 = vector.broadcast %c0_i32_27 : i32 to vector<192x1xi32>
    %28 = arith.cmpi ne, %26, %27 : vector<192x1xi32>
    %c0_i32_28 = arith.constant 0 : i32
    %29 = vector.broadcast %c0_i32_28 : i32 to vector<192x1xi32>
    %30 = arith.cmpi slt, %26, %29 : vector<192x1xi32>
    %c0_i32_29 = arith.constant 0 : i32
    %31 = arith.cmpi slt, %24, %c0_i32_29 : i32
    %32 = vector.broadcast %31 : i1 to vector<192x1xi1>
    %33 = vector.broadcast %32 : vector<192x1xi1> to vector<192x1xi1>
    %34 = arith.xori %30, %33 : vector<192x1xi1>
    %35 = arith.andi %34, %28 : vector<192x1xi1>
    %36 = vector.broadcast %24 : i32 to vector<192x1xi32>
    %37 = arith.addi %26, %36 : vector<192x1xi32>
    %38 = arith.select %35, %37, %26 : vector<192x1xi1>, vector<192x1xi32>
    %c16_i32 = arith.constant 16 : i32
    %39 = vector.broadcast %c16_i32 : i32 to vector<192x1xi32>
    %40 = arith.cmpi slt, %38, %39 : vector<192x1xi32>
    %41 = arith.extui %40 : vector<192x1xi1> to vector<192x1xi32>
    %42 = arith.sitofp %41 : vector<192x1xi32> to vector<192x1xf32>
    %c0_i32_30 = arith.constant 0 : i32
    %c2_i32 = arith.constant 2 : i32
    %43 = arith.addi %c0_i32_30, %c2_i32 : i32
    %c1_i32_31 = arith.constant 1 : i32
    scf.for %arg11 = %c0_i32_30 to %43 step %c1_i32_31  : i32 {
      %c8_i32 = arith.constant 8 : i32
      %45 = arith.muli %arg11, %c8_i32 : i32
      %cst_37 = arith.constant 0.000000e+00 : f32
      %46 = vector.broadcast %cst_37 : f32 to vector<192x8xf32>
      %c0_i32_38 = arith.constant 0 : i32
      %47 = arith.addi %45, %c0_i32_38 : i32
      %48 = arith.index_cast %47 : i32 to index
      %c0_39 = arith.constant 0 : index
      %c0_40 = arith.constant 0 : index
      %49 = vector.load %arg9[%48, %c0_39, %c0_40] : memref<18x24x8xf32, #tpu.memory_space<vmem>>, vector<8x24x8xf32>
      %50 = vector.shape_cast %49 : vector<8x24x8xf32> to vector<192x8xf32>
      %cst_41 = arith.constant 0.000000e+00 : f32
      %51 = vector.broadcast %cst_41 : f32 to vector<1x8xf32>
      %52 = vector.extract_strided_slice %50 {offsets = [0, 0], sizes = [191, 8], strides = [1, 1]} : vector<192x8xf32> to vector<191x8xf32>
      %53 = tpu.concatenate %51, %52 in 0 : vector<1x8xf32>, vector<191x8xf32> -> vector<192x8xf32>
      %cst_42 = arith.constant 0.000000e+00 : f32
      %54 = vector.broadcast %cst_42 : f32 to vector<1x8xf32>
      %55 = vector.extract_strided_slice %50 {offsets = [1, 0], sizes = [191, 8], strides = [1, 1]} : vector<192x8xf32> to vector<191x8xf32>
      %56 = tpu.concatenate %55, %54 in 0 : vector<191x8xf32>, vector<1x8xf32> -> vector<192x8xf32>
      %c0_43 = arith.constant 0 : index
      %c0_44 = arith.constant 0 : index
      %c0_45 = arith.constant 0 : index
      %57 = vector.load %arg2[%c0_43, %c0_44, %c0_45] : memref<9x8x8xf32, #tpu.memory_space<vmem>>, vector<1x8x8xf32>
      %58 = vector.shape_cast %57 : vector<1x8x8xf32> to vector<8x8xf32>
      %cst_46 = arith.constant dense<0.000000e+00> : vector<192x8xf32>
      %59 = tpu.matmul %53, %58, %cst_46 {dimension_numbers = #tpu.dot_dimension_numbers<[1], [0], [0], [1], [0, 0, 1, 1], [], []>} : vector<192x8xf32>, vector<8x8xf32>, vector<192x8xf32> -> vector<192x8xf32>
      %60 = arith.addf %46, %59 : vector<192x8xf32>
      %c1_47 = arith.constant 1 : index
      %c0_48 = arith.constant 0 : index
      %c0_49 = arith.constant 0 : index
      %61 = vector.load %arg2[%c1_47, %c0_48, %c0_49] : memref<9x8x8xf32, #tpu.memory_space<vmem>>, vector<1x8x8xf32>
      %62 = vector.shape_cast %61 : vector<1x8x8xf32> to vector<8x8xf32>
      %cst_50 = arith.constant dense<0.000000e+00> : vector<192x8xf32>
      %63 = tpu.matmul %50, %62, %cst_50 {dimension_numbers = #tpu.dot_dimension_numbers<[1], [0], [0], [1], [0, 0, 1, 1], [], []>} : vector<192x8xf32>, vector<8x8xf32>, vector<192x8xf32> -> vector<192x8xf32>
      %64 = arith.addf %60, %63 : vector<192x8xf32>
      %c2 = arith.constant 2 : index
      %c0_51 = arith.constant 0 : index
      %c0_52 = arith.constant 0 : index
      %65 = vector.load %arg2[%c2, %c0_51, %c0_52] : memref<9x8x8xf32, #tpu.memory_space<vmem>>, vector<1x8x8xf32>
      %66 = vector.shape_cast %65 : vector<1x8x8xf32> to vector<8x8xf32>
      %cst_53 = arith.constant dense<0.000000e+00> : vector<192x8xf32>
      %67 = tpu.matmul %56, %66, %cst_53 {dimension_numbers = #tpu.dot_dimension_numbers<[1], [0], [0], [1], [0, 0, 1, 1], [], []>} : vector<192x8xf32>, vector<8x8xf32>, vector<192x8xf32> -> vector<192x8xf32>
      %68 = arith.addf %64, %67 : vector<192x8xf32>
      %c1_i32_54 = arith.constant 1 : i32
      %69 = arith.addi %45, %c1_i32_54 : i32
      %70 = arith.index_cast %69 : i32 to index
      %c0_55 = arith.constant 0 : index
      %c0_56 = arith.constant 0 : index
      %71 = vector.load %arg9[%70, %c0_55, %c0_56] : memref<18x24x8xf32, #tpu.memory_space<vmem>>, vector<8x24x8xf32>
      %72 = vector.shape_cast %71 : vector<8x24x8xf32> to vector<192x8xf32>
      %cst_57 = arith.constant 0.000000e+00 : f32
      %73 = vector.broadcast %cst_57 : f32 to vector<1x8xf32>
      %74 = vector.extract_strided_slice %72 {offsets = [0, 0], sizes = [191, 8], strides = [1, 1]} : vector<192x8xf32> to vector<191x8xf32>
      %75 = tpu.concatenate %73, %74 in 0 : vector<1x8xf32>, vector<191x8xf32> -> vector<192x8xf32>
      %cst_58 = arith.constant 0.000000e+00 : f32
      %76 = vector.broadcast %cst_58 : f32 to vector<1x8xf32>
      %77 = vector.extract_strided_slice %72 {offsets = [1, 0], sizes = [191, 8], strides = [1, 1]} : vector<192x8xf32> to vector<191x8xf32>
      %78 = tpu.concatenate %77, %76 in 0 : vector<191x8xf32>, vector<1x8xf32> -> vector<192x8xf32>
      %c3 = arith.constant 3 : index
      %c0_59 = arith.constant 0 : index
      %c0_60 = arith.constant 0 : index
      %79 = vector.load %arg2[%c3, %c0_59, %c0_60] : memref<9x8x8xf32, #tpu.memory_space<vmem>>, vector<1x8x8xf32>
      %80 = vector.shape_cast %79 : vector<1x8x8xf32> to vector<8x8xf32>
      %cst_61 = arith.constant dense<0.000000e+00> : vector<192x8xf32>
      %81 = tpu.matmul %75, %80, %cst_61 {dimension_numbers = #tpu.dot_dimension_numbers<[1], [0], [0], [1], [0, 0, 1, 1], [], []>} : vector<192x8xf32>, vector<8x8xf32>, vector<192x8xf32> -> vector<192x8xf32>
      %82 = arith.addf %68, %81 : vector<192x8xf32>
      %c4 = arith.constant 4 : index
      %c0_62 = arith.constant 0 : index
      %c0_63 = arith.constant 0 : index
      %83 = vector.load %arg2[%c4, %c0_62, %c0_63] : memref<9x8x8xf32, #tpu.memory_space<vmem>>, vector<1x8x8xf32>
      %84 = vector.shape_cast %83 : vector<1x8x8xf32> to vector<8x8xf32>
      %cst_64 = arith.constant dense<0.000000e+00> : vector<192x8xf32>
      %85 = tpu.matmul %72, %84, %cst_64 {dimension_numbers = #tpu.dot_dimension_numbers<[1], [0], [0], [1], [0, 0, 1, 1], [], []>} : vector<192x8xf32>, vector<8x8xf32>, vector<192x8xf32> -> vector<192x8xf32>
      %86 = arith.addf %82, %85 : vector<192x8xf32>
      %c5 = arith.constant 5 : index
      %c0_65 = arith.constant 0 : index
      %c0_66 = arith.constant 0 : index
      %87 = vector.load %arg2[%c5, %c0_65, %c0_66] : memref<9x8x8xf32, #tpu.memory_space<vmem>>, vector<1x8x8xf32>
      %88 = vector.shape_cast %87 : vector<1x8x8xf32> to vector<8x8xf32>
      %cst_67 = arith.constant dense<0.000000e+00> : vector<192x8xf32>
      %89 = tpu.matmul %78, %88, %cst_67 {dimension_numbers = #tpu.dot_dimension_numbers<[1], [0], [0], [1], [0, 0, 1, 1], [], []>} : vector<192x8xf32>, vector<8x8xf32>, vector<192x8xf32> -> vector<192x8xf32>
      %90 = arith.addf %86, %89 : vector<192x8xf32>
      %c2_i32_68 = arith.constant 2 : i32
      %91 = arith.addi %45, %c2_i32_68 : i32
      %92 = arith.index_cast %91 : i32 to index
      %c0_69 = arith.constant 0 : index
      %c0_70 = arith.constant 0 : index
      %93 = vector.load %arg9[%92, %c0_69, %c0_70] : memref<18x24x8xf32, #tpu.memory_space<vmem>>, vector<8x24x8xf32>
      %94 = vector.shape_cast %93 : vector<8x24x8xf32> to vector<192x8xf32>
      %cst_71 = arith.constant 0.000000e+00 : f32
      %95 = vector.broadcast %cst_71 : f32 to vector<1x8xf32>
      %96 = vector.extract_strided_slice %94 {offsets = [0, 0], sizes = [191, 8], strides = [1, 1]} : vector<192x8xf32> to vector<191x8xf32>
      %97 = tpu.concatenate %95, %96 in 0 : vector<1x8xf32>, vector<191x8xf32> -> vector<192x8xf32>
      %cst_72 = arith.constant 0.000000e+00 : f32
      %98 = vector.broadcast %cst_72 : f32 to vector<1x8xf32>
      %99 = vector.extract_strided_slice %94 {offsets = [1, 0], sizes = [191, 8], strides = [1, 1]} : vector<192x8xf32> to vector<191x8xf32>
      %100 = tpu.concatenate %99, %98 in 0 : vector<191x8xf32>, vector<1x8xf32> -> vector<192x8xf32>
      %c6 = arith.constant 6 : index
      %c0_73 = arith.constant 0 : index
      %c0_74 = arith.constant 0 : index
      %101 = vector.load %arg2[%c6, %c0_73, %c0_74] : memref<9x8x8xf32, #tpu.memory_space<vmem>>, vector<1x8x8xf32>
      %102 = vector.shape_cast %101 : vector<1x8x8xf32> to vector<8x8xf32>
      %cst_75 = arith.constant dense<0.000000e+00> : vector<192x8xf32>
      %103 = tpu.matmul %97, %102, %cst_75 {dimension_numbers = #tpu.dot_dimension_numbers<[1], [0], [0], [1], [0, 0, 1, 1], [], []>} : vector<192x8xf32>, vector<8x8xf32>, vector<192x8xf32> -> vector<192x8xf32>
      %104 = arith.addf %90, %103 : vector<192x8xf32>
      %c7 = arith.constant 7 : index
      %c0_76 = arith.constant 0 : index
      %c0_77 = arith.constant 0 : index
      %105 = vector.load %arg2[%c7, %c0_76, %c0_77] : memref<9x8x8xf32, #tpu.memory_space<vmem>>, vector<1x8x8xf32>
      %106 = vector.shape_cast %105 : vector<1x8x8xf32> to vector<8x8xf32>
      %cst_78 = arith.constant dense<0.000000e+00> : vector<192x8xf32>
      %107 = tpu.matmul %94, %106, %cst_78 {dimension_numbers = #tpu.dot_dimension_numbers<[1], [0], [0], [1], [0, 0, 1, 1], [], []>} : vector<192x8xf32>, vector<8x8xf32>, vector<192x8xf32> -> vector<192x8xf32>
      %108 = arith.addf %104, %107 : vector<192x8xf32>
      %c8 = arith.constant 8 : index
      %c0_79 = arith.constant 0 : index
      %c0_80 = arith.constant 0 : index
      %109 = vector.load %arg2[%c8, %c0_79, %c0_80] : memref<9x8x8xf32, #tpu.memory_space<vmem>>, vector<1x8x8xf32>
      %110 = vector.shape_cast %109 : vector<1x8x8xf32> to vector<8x8xf32>
      %cst_81 = arith.constant dense<0.000000e+00> : vector<192x8xf32>
      %111 = tpu.matmul %100, %110, %cst_81 {dimension_numbers = #tpu.dot_dimension_numbers<[1], [0], [0], [1], [0, 0, 1, 1], [], []>} : vector<192x8xf32>, vector<8x8xf32>, vector<192x8xf32> -> vector<192x8xf32>
      %112 = arith.addf %108, %111 : vector<192x8xf32>
      %113 = vector.broadcast %18 : vector<1x8xf32> to vector<192x8xf32>
      %114 = arith.mulf %112, %113 : vector<192x8xf32>
      %115 = vector.broadcast %19 : vector<1x8xf32> to vector<192x8xf32>
      %116 = arith.addf %114, %115 : vector<192x8xf32>
      %cst_82 = arith.constant 0.000000e+00 : f32
      %117 = vector.broadcast %cst_82 : f32 to vector<192x8xf32>
      %118 = arith.maximumf %116, %117 : vector<192x8xf32>
      %119 = vector.broadcast %42 : vector<192x1xf32> to vector<192x8xf32>
      %120 = arith.mulf %118, %119 : vector<192x8xf32>
      %121 = vector.shape_cast %120 : vector<192x8xf32> to vector<8x24x8xf32>
      %c1_i32_83 = arith.constant 1 : i32
      %122 = arith.addi %45, %c1_i32_83 : i32
      %123 = arith.index_cast %122 : i32 to index
      %c0_84 = arith.constant 0 : index
      %c0_85 = arith.constant 0 : index
      %124 = vector.load %arg10[%123, %c0_84, %c0_85] : memref<18x24x8xf32, #tpu.memory_space<vmem>>, vector<8x24x8xf32>
      tpu.vector_store %arg10[%123, %c0_84, %c0_85], %121 {strides = array<i32>} : memref<18x24x8xf32, #tpu.memory_space<vmem>>, vector<8x24x8xf32>,
    }
    %c2_i32_32 = arith.constant 2 : i32
    %c0_i32_33 = arith.constant 0 : i32
    %c2_i32_34 = arith.constant 2 : i32
    %44 = arith.addi %c0_i32_33, %c2_i32_34 : i32
    %c1_i32_35 = arith.constant 1 : i32
    scf.for %arg11 = %c0_i32_33 to %44 step %c1_i32_35  : i32 {
      %c8_i32 = arith.constant 8 : i32
      %45 = arith.muli %arg11, %c8_i32 : i32
      %cst_37 = arith.constant 0.000000e+00 : f32
      %46 = vector.broadcast %cst_37 : f32 to vector<192x8xf32>
      %c0_i32_38 = arith.constant 0 : i32
      %47 = arith.addi %45, %c0_i32_38 : i32
      %48 = arith.index_cast %47 : i32 to index
      %c0_39 = arith.constant 0 : index
      %c0_40 = arith.constant 0 : index
      %49 = vector.load %arg10[%48, %c0_39, %c0_40] : memref<18x24x8xf32, #tpu.memory_space<vmem>>, vector<8x24x8xf32>
      %50 = vector.shape_cast %49 : vector<8x24x8xf32> to vector<192x8xf32>
      %cst_41 = arith.constant 0.000000e+00 : f32
      %51 = vector.broadcast %cst_41 : f32 to vector<1x8xf32>
      %52 = vector.extract_strided_slice %50 {offsets = [0, 0], sizes = [191, 8], strides = [1, 1]} : vector<192x8xf32> to vector<191x8xf32>
      %53 = tpu.concatenate %51, %52 in 0 : vector<1x8xf32>, vector<191x8xf32> -> vector<192x8xf32>
      %cst_42 = arith.constant 0.000000e+00 : f32
      %54 = vector.broadcast %cst_42 : f32 to vector<1x8xf32>
      %55 = vector.extract_strided_slice %50 {offsets = [1, 0], sizes = [191, 8], strides = [1, 1]} : vector<192x8xf32> to vector<191x8xf32>
      %56 = tpu.concatenate %55, %54 in 0 : vector<191x8xf32>, vector<1x8xf32> -> vector<192x8xf32>
      %c0_43 = arith.constant 0 : index
      %c0_44 = arith.constant 0 : index
      %c0_45 = arith.constant 0 : index
      %57 = vector.load %arg3[%c0_43, %c0_44, %c0_45] : memref<9x8x8xf32, #tpu.memory_space<vmem>>, vector<1x8x8xf32>
      %58 = vector.shape_cast %57 : vector<1x8x8xf32> to vector<8x8xf32>
      %cst_46 = arith.constant dense<0.000000e+00> : vector<192x8xf32>
      %59 = tpu.matmul %53, %58, %cst_46 {dimension_numbers = #tpu.dot_dimension_numbers<[1], [0], [0], [1], [0, 0, 1, 1], [], []>} : vector<192x8xf32>, vector<8x8xf32>, vector<192x8xf32> -> vector<192x8xf32>
      %60 = arith.addf %46, %59 : vector<192x8xf32>
      %c1_47 = arith.constant 1 : index
      %c0_48 = arith.constant 0 : index
      %c0_49 = arith.constant 0 : index
      %61 = vector.load %arg3[%c1_47, %c0_48, %c0_49] : memref<9x8x8xf32, #tpu.memory_space<vmem>>, vector<1x8x8xf32>
      %62 = vector.shape_cast %61 : vector<1x8x8xf32> to vector<8x8xf32>
      %cst_50 = arith.constant dense<0.000000e+00> : vector<192x8xf32>
      %63 = tpu.matmul %50, %62, %cst_50 {dimension_numbers = #tpu.dot_dimension_numbers<[1], [0], [0], [1], [0, 0, 1, 1], [], []>} : vector<192x8xf32>, vector<8x8xf32>, vector<192x8xf32> -> vector<192x8xf32>
      %64 = arith.addf %60, %63 : vector<192x8xf32>
      %c2 = arith.constant 2 : index
      %c0_51 = arith.constant 0 : index
      %c0_52 = arith.constant 0 : index
      %65 = vector.load %arg3[%c2, %c0_51, %c0_52] : memref<9x8x8xf32, #tpu.memory_space<vmem>>, vector<1x8x8xf32>
      %66 = vector.shape_cast %65 : vector<1x8x8xf32> to vector<8x8xf32>
      %cst_53 = arith.constant dense<0.000000e+00> : vector<192x8xf32>
      %67 = tpu.matmul %56, %66, %cst_53 {dimension_numbers = #tpu.dot_dimension_numbers<[1], [0], [0], [1], [0, 0, 1, 1], [], []>} : vector<192x8xf32>, vector<8x8xf32>, vector<192x8xf32> -> vector<192x8xf32>
      %68 = arith.addf %64, %67 : vector<192x8xf32>
      %c1_i32_54 = arith.constant 1 : i32
      %69 = arith.addi %45, %c1_i32_54 : i32
      %70 = arith.index_cast %69 : i32 to index
      %c0_55 = arith.constant 0 : index
      %c0_56 = arith.constant 0 : index
      %71 = vector.load %arg10[%70, %c0_55, %c0_56] : memref<18x24x8xf32, #tpu.memory_space<vmem>>, vector<8x24x8xf32>
      %72 = vector.shape_cast %71 : vector<8x24x8xf32> to vector<192x8xf32>
      %cst_57 = arith.constant 0.000000e+00 : f32
      %73 = vector.broadcast %cst_57 : f32 to vector<1x8xf32>
      %74 = vector.extract_strided_slice %72 {offsets = [0, 0], sizes = [191, 8], strides = [1, 1]} : vector<192x8xf32> to vector<191x8xf32>
      %75 = tpu.concatenate %73, %74 in 0 : vector<1x8xf32>, vector<191x8xf32> -> vector<192x8xf32>
      %cst_58 = arith.constant 0.000000e+00 : f32
      %76 = vector.broadcast %cst_58 : f32 to vector<1x8xf32>
      %77 = vector.extract_strided_slice %72 {offsets = [1, 0], sizes = [191, 8], strides = [1, 1]} : vector<192x8xf32> to vector<191x8xf32>
      %78 = tpu.concatenate %77, %76 in 0 : vector<191x8xf32>, vector<1x8xf32> -> vector<192x8xf32>
      %c3 = arith.constant 3 : index
      %c0_59 = arith.constant 0 : index
      %c0_60 = arith.constant 0 : index
      %79 = vector.load %arg3[%c3, %c0_59, %c0_60] : memref<9x8x8xf32, #tpu.memory_space<vmem>>, vector<1x8x8xf32>
      %80 = vector.shape_cast %79 : vector<1x8x8xf32> to vector<8x8xf32>
      %cst_61 = arith.constant dense<0.000000e+00> : vector<192x8xf32>
      %81 = tpu.matmul %75, %80, %cst_61 {dimension_numbers = #tpu.dot_dimension_numbers<[1], [0], [0], [1], [0, 0, 1, 1], [], []>} : vector<192x8xf32>, vector<8x8xf32>, vector<192x8xf32> -> vector<192x8xf32>
      %82 = arith.addf %68, %81 : vector<192x8xf32>
      %c4 = arith.constant 4 : index
      %c0_62 = arith.constant 0 : index
      %c0_63 = arith.constant 0 : index
      %83 = vector.load %arg3[%c4, %c0_62, %c0_63] : memref<9x8x8xf32, #tpu.memory_space<vmem>>, vector<1x8x8xf32>
      %84 = vector.shape_cast %83 : vector<1x8x8xf32> to vector<8x8xf32>
      %cst_64 = arith.constant dense<0.000000e+00> : vector<192x8xf32>
      %85 = tpu.matmul %72, %84, %cst_64 {dimension_numbers = #tpu.dot_dimension_numbers<[1], [0], [0], [1], [0, 0, 1, 1], [], []>} : vector<192x8xf32>, vector<8x8xf32>, vector<192x8xf32> -> vector<192x8xf32>
      %86 = arith.addf %82, %85 : vector<192x8xf32>
      %c5 = arith.constant 5 : index
      %c0_65 = arith.constant 0 : index
      %c0_66 = arith.constant 0 : index
      %87 = vector.load %arg3[%c5, %c0_65, %c0_66] : memref<9x8x8xf32, #tpu.memory_space<vmem>>, vector<1x8x8xf32>
      %88 = vector.shape_cast %87 : vector<1x8x8xf32> to vector<8x8xf32>
      %cst_67 = arith.constant dense<0.000000e+00> : vector<192x8xf32>
      %89 = tpu.matmul %78, %88, %cst_67 {dimension_numbers = #tpu.dot_dimension_numbers<[1], [0], [0], [1], [0, 0, 1, 1], [], []>} : vector<192x8xf32>, vector<8x8xf32>, vector<192x8xf32> -> vector<192x8xf32>
      %90 = arith.addf %86, %89 : vector<192x8xf32>
      %c2_i32_68 = arith.constant 2 : i32
      %91 = arith.addi %45, %c2_i32_68 : i32
      %92 = arith.index_cast %91 : i32 to index
      %c0_69 = arith.constant 0 : index
      %c0_70 = arith.constant 0 : index
      %93 = vector.load %arg10[%92, %c0_69, %c0_70] : memref<18x24x8xf32, #tpu.memory_space<vmem>>, vector<8x24x8xf32>
      %94 = vector.shape_cast %93 : vector<8x24x8xf32> to vector<192x8xf32>
      %cst_71 = arith.constant 0.000000e+00 : f32
      %95 = vector.broadcast %cst_71 : f32 to vector<1x8xf32>
      %96 = vector.extract_strided_slice %94 {offsets = [0, 0], sizes = [191, 8], strides = [1, 1]} : vector<192x8xf32> to vector<191x8xf32>
      %97 = tpu.concatenate %95, %96 in 0 : vector<1x8xf32>, vector<191x8xf32> -> vector<192x8xf32>
      %cst_72 = arith.constant 0.000000e+00 : f32
      %98 = vector.broadcast %cst_72 : f32 to vector<1x8xf32>
      %99 = vector.extract_strided_slice %94 {offsets = [1, 0], sizes = [191, 8], strides = [1, 1]} : vector<192x8xf32> to vector<191x8xf32>
      %100 = tpu.concatenate %99, %98 in 0 : vector<191x8xf32>, vector<1x8xf32> -> vector<192x8xf32>
      %c6 = arith.constant 6 : index
      %c0_73 = arith.constant 0 : index
      %c0_74 = arith.constant 0 : index
      %101 = vector.load %arg3[%c6, %c0_73, %c0_74] : memref<9x8x8xf32, #tpu.memory_space<vmem>>, vector<1x8x8xf32>
      %102 = vector.shape_cast %101 : vector<1x8x8xf32> to vector<8x8xf32>
      %cst_75 = arith.constant dense<0.000000e+00> : vector<192x8xf32>
      %103 = tpu.matmul %97, %102, %cst_75 {dimension_numbers = #tpu.dot_dimension_numbers<[1], [0], [0], [1], [0, 0, 1, 1], [], []>} : vector<192x8xf32>, vector<8x8xf32>, vector<192x8xf32> -> vector<192x8xf32>
      %104 = arith.addf %90, %103 : vector<192x8xf32>
      %c7 = arith.constant 7 : index
      %c0_76 = arith.constant 0 : index
      %c0_77 = arith.constant 0 : index
      %105 = vector.load %arg3[%c7, %c0_76, %c0_77] : memref<9x8x8xf32, #tpu.memory_space<vmem>>, vector<1x8x8xf32>
      %106 = vector.shape_cast %105 : vector<1x8x8xf32> to vector<8x8xf32>
      %cst_78 = arith.constant dense<0.000000e+00> : vector<192x8xf32>
      %107 = tpu.matmul %94, %106, %cst_78 {dimension_numbers = #tpu.dot_dimension_numbers<[1], [0], [0], [1], [0, 0, 1, 1], [], []>} : vector<192x8xf32>, vector<8x8xf32>, vector<192x8xf32> -> vector<192x8xf32>
      %108 = arith.addf %104, %107 : vector<192x8xf32>
      %c8 = arith.constant 8 : index
      %c0_79 = arith.constant 0 : index
      %c0_80 = arith.constant 0 : index
      %109 = vector.load %arg3[%c8, %c0_79, %c0_80] : memref<9x8x8xf32, #tpu.memory_space<vmem>>, vector<1x8x8xf32>
      %110 = vector.shape_cast %109 : vector<1x8x8xf32> to vector<8x8xf32>
      %cst_81 = arith.constant dense<0.000000e+00> : vector<192x8xf32>
      %111 = tpu.matmul %100, %110, %cst_81 {dimension_numbers = #tpu.dot_dimension_numbers<[1], [0], [0], [1], [0, 0, 1, 1], [], []>} : vector<192x8xf32>, vector<8x8xf32>, vector<192x8xf32> -> vector<192x8xf32>
      %112 = arith.addf %108, %111 : vector<192x8xf32>
      %c1_i32_82 = arith.constant 1 : i32
      %113 = arith.addi %45, %c1_i32_82 : i32
      %114 = arith.index_cast %113 : i32 to index
      %c0_83 = arith.constant 0 : index
      %c0_84 = arith.constant 0 : index
      %115 = vector.load %arg9[%114, %c0_83, %c0_84] : memref<18x24x8xf32, #tpu.memory_space<vmem>>, vector<8x24x8xf32>
      %116 = vector.shape_cast %115 : vector<8x24x8xf32> to vector<192x8xf32>
      %117 = vector.broadcast %20 : vector<1x8xf32> to vector<192x8xf32>
      %118 = arith.mulf %112, %117 : vector<192x8xf32>
      %119 = vector.broadcast %21 : vector<1x8xf32> to vector<192x8xf32>
      %120 = arith.addf %118, %119 : vector<192x8xf32>
      %121 = arith.addf %120, %116 : vector<192x8xf32>
      %cst_85 = arith.constant 0.000000e+00 : f32
      %122 = vector.broadcast %cst_85 : f32 to vector<192x8xf32>
      %123 = arith.maximumf %121, %122 : vector<192x8xf32>
      %124 = vector.shape_cast %123 : vector<192x8xf32> to vector<8x24x8xf32>
      %125 = vector.extract_strided_slice %124 {offsets = [0, 0, 0], sizes = [8, 16, 8], strides = [1, 1, 1]} : vector<8x24x8xf32> to vector<8x16x8xf32>
      %c0_86 = arith.constant 0 : index
      %126 = arith.index_cast %45 : i32 to index
      %c0_87 = arith.constant 0 : index
      %c0_88 = arith.constant 0 : index
      %127 = vector.load %arg8[%c0_86, %126, %c0_87, %c0_88] : memref<1x16x16x8xf32, #tpu.memory_space<vmem>>, vector<1x8x16x8xf32>
      %128 = vector.shape_cast %127 : vector<1x8x16x8xf32> to vector<8x16x8xf32>
      %129 = vector.shape_cast %125 : vector<8x16x8xf32> to vector<1x8x16x8xf32>
      tpu.vector_store %arg8[%c0_86, %126, %c0_87, %c0_88], %129 {strides = array<i32>} : memref<1x16x16x8xf32, #tpu.memory_space<vmem>>, vector<1x8x16x8xf32>,
    }
    %c2_i32_36 = arith.constant 2 : i32
    return
  }
  func.func @transform_0(%arg0: i32) -> (i32, i32, i32, i32) {
    %c0_i32 = arith.constant 0 : i32
    %c0_i32_0 = arith.constant 0 : i32
    %c0_i32_1 = arith.constant 0 : i32
    %c0_i32_2 = arith.constant 0 : i32
    return %arg0, %c0_i32, %c0_i32_0, %c0_i32_1 : i32, i32, i32, i32
  }
  func.func @transform_1(%arg0: i32) -> (i32, i32, i32) {
    %c0_i32 = arith.constant 0 : i32
    %c0_i32_0 = arith.constant 0 : i32
    %c0_i32_1 = arith.constant 0 : i32
    %c0_i32_2 = arith.constant 0 : i32
    return %c0_i32, %c0_i32_0, %c0_i32_1 : i32, i32, i32
  }
  func.func @transform_2(%arg0: i32) -> (i32, i32, i32) {
    %c0_i32 = arith.constant 0 : i32
    %c0_i32_0 = arith.constant 0 : i32
    %c0_i32_1 = arith.constant 0 : i32
    %c0_i32_2 = arith.constant 0 : i32
    return %c0_i32, %c0_i32_0, %c0_i32_1 : i32, i32, i32
  }
  func.func @transform_3(%arg0: i32) -> (i32, i32) {
    %c0_i32 = arith.constant 0 : i32
    %c0_i32_0 = arith.constant 0 : i32
    %c0_i32_1 = arith.constant 0 : i32
    return %c0_i32, %c0_i32_0 : i32, i32
  }
  func.func @transform_4(%arg0: i32) -> (i32, i32) {
    %c0_i32 = arith.constant 0 : i32
    %c0_i32_0 = arith.constant 0 : i32
    %c0_i32_1 = arith.constant 0 : i32
    return %c0_i32, %c0_i32_0 : i32, i32
  }
  func.func @transform_5(%arg0: i32) -> (i32, i32) {
    %c0_i32 = arith.constant 0 : i32
    %c0_i32_0 = arith.constant 0 : i32
    %c0_i32_1 = arith.constant 0 : i32
    return %c0_i32, %c0_i32_0 : i32, i32
  }
  func.func @transform_6(%arg0: i32) -> (i32, i32) {
    %c0_i32 = arith.constant 0 : i32
    %c0_i32_0 = arith.constant 0 : i32
    %c0_i32_1 = arith.constant 0 : i32
    return %c0_i32, %c0_i32_0 : i32, i32
  }
  func.func @transform_7(%arg0: i32) -> (i32, i32, i32, i32) {
    %c0_i32 = arith.constant 0 : i32
    %c0_i32_0 = arith.constant 0 : i32
    %c0_i32_1 = arith.constant 0 : i32
    %c0_i32_2 = arith.constant 0 : i32
    return %arg0, %c0_i32, %c0_i32_0, %c0_i32_1 : i32, i32, i32, i32
  }
}

</mosaic_0001>

<llo_original>
// kernel: basic_block_forward_nhwc.1
$region0: #{basic_block_forward_nhwc.1}
  #allocation0 [shape = 'u32[]', space=smem, size = 0x4, offset = 0x4, fixed_abs, tag = 'smem constant byte address 0x4 - core index']
  #allocation1 [shape = 'u32[72,128]{1,0:T(1,128)}', space=vmem, size = 0x9000, scoped, tag = 'internal scratch']
  #allocation2 [shape = 'f32[18,24,8]{2,1,0:T(8,128)}', space=vmem, size = 0x36000, scoped, tag = 'scratch operand']
  #allocation3 [shape = 'f32[18,24,8]{2,1,0:T(8,128)}', space=vmem, size = 0x36000, scoped, tag = 'scratch operand']
  %s0 = inlined_call_operand.vmem [shape: f32[2,16,16,8], index: 0, kind: input, shape index: {}]
  %s1 = inlined_call_operand.vmem [shape: f32[9,8,8], index: 1, kind: input, shape index: {}]
  %s2 = inlined_call_operand.vmem [shape: f32[9,8,8], index: 2, kind: input, shape index: {}]
  %s3 = inlined_call_operand.vmem [shape: f32[1,8], index: 3, kind: input, shape index: {}]
  %s4 = inlined_call_operand.vmem [shape: f32[1,8], index: 4, kind: input, shape index: {}]
  %s5 = inlined_call_operand.vmem [shape: f32[1,8], index: 5, kind: input, shape index: {}]
  %s6 = inlined_call_operand.vmem [shape: f32[1,8], index: 6, kind: input, shape index: {}]
  %s7 = inlined_call_operand.vmem [shape: f32[2,16,16,8], index: 7, kind: output, shape index: {}]
  %s8 = sld [smem:[#allocation0]]
  $region75: #{basic_block_forward_nhwc.1} parent=0
    _
  %s10 = ssub.s32 1, %s8
  %s11 = scalar_select 0, %s10, %s8
  loop: start=0, step=1, limit=4
  $region2: #{basic_block_forward_nhwc.1} parent=0 // loop_pre_header
    _
  $region3: #{basic_block_forward_nhwc.1} parent=0 // loop_header
    %s13 = sphi 0, %s17
    %p14 = scmp.ge.s32.totalorder %s13, 4
    %s23 = sphi 0, %s25
    %s26 = sphi 0, %s23
    %s27 = sphi 0, %s26
    %s43 = sphi 0, %s27
    %s47 = sphi 0, %s47
    %s49 = sphi 0, %s47
    %s50 = sphi 0, %s49
    %s64 = sphi 0, %s50
    %s68 = sphi 0, %s68
    %s70 = sphi 0, %s68
    %s71 = sphi 0, %s70
    %s85 = sphi 0, %s71
    %s89 = sphi 0, %s89
    %s91 = sphi 0, %s89
    %s92 = sphi 0, %s91
    %s106 = sphi 0, %s92
    %s110 = sphi 0, %s110
    %s112 = sphi 0, %s110
    %s113 = sphi 0, %s112
    %s127 = sphi 0, %s113
    %s131 = sphi 0, %s131
    %s133 = sphi 0, %s131
    %s134 = sphi 0, %s133
    %s148 = sphi 0, %s134
    %s152 = sphi 0, %s152
    %s154 = sphi 0, %s152
    %s155 = sphi 0, %s154
    %s169 = sphi 0, %s155
    %s175 = sphi 0, %s177
    %s178 = sphi 0, %s175
    %s179 = sphi 0, %s178
    %s195 = sphi 0, %s179
  $region4: #{basic_block_forward_nhwc.1} parent=0 // loop_header_branch
    %16 = sbr.rel (%p14) target = $region8
  $region5: #{basic_block_forward_nhwc.1} parent=0 // loop_body
    %s18 = ssub.s32 %s13, 1
    %s19 = ssub.s32 %s13, 2
    %s20 = sadd.s32 %s13, 1
    %s21 = ssub.s32 %s13, %s20
    %p22 = scmp.eq.s32.totalorder %s21, 0
    %s24 = sadd.s32 %s23, 1
    %s25 = scalar_select %p22, %s23, %s24
    %p28 = pneg %p22
    %p29 = scmp.eq.s32.totalorder %s13, 1
    %p30 = por %p28, %p29
    %p31 = scmp.ne.s32.totalorder %s23, %s26
    %p32 = scmp.eq.s32.totalorder %s13, 0
    %p33 = por %p31, %p32
    %p34 = scmp.ne.s32.totalorder %s23, %s26
    %p35 = scmp.eq.s32.totalorder %s18, 1
    %p36 = por %p34, %p35
    %p37 = scmp.ne.s32.totalorder %s26, %s27
    %p38 = scmp.eq.s32.totalorder %s18, 0
    %p39 = por %p37, %p38
    %p40 = scmp.ne.s32.totalorder %s26, %s27
    %p41 = scmp.eq.s32.totalorder %s19, 1
    %p42 = por %p40, %p41
    %p44 = scmp.ne.s32.totalorder %s27, %s43
    %p45 = scmp.eq.s32.totalorder %s19, 0
    %p46 = por %p44, %p45
    %s48 = sadd.s32 %s47, 1
    %p51 = scmp.eq.s32.totalorder %s13, 1
    %p52 = scmp.ne.s32.totalorder %s47, %s49
    %p53 = scmp.eq.s32.totalorder %s13, 0
    %p54 = por %p52, %p53
    %p55 = scmp.ne.s32.totalorder %s47, %s49
    %p56 = scmp.eq.s32.totalorder %s18, 1
    %p57 = por %p55, %p56
    %p58 = scmp.ne.s32.totalorder %s49, %s50
    %p59 = scmp.eq.s32.totalorder %s18, 0
    %p60 = por %p58, %p59
    %p61 = scmp.ne.s32.totalorder %s49, %s50
    %p62 = scmp.eq.s32.totalorder %s19, 1
    %p63 = por %p61, %p62
    %p65 = scmp.ne.s32.totalorder %s50, %s64
    %p66 = scmp.eq.s32.totalorder %s19, 0
    %p67 = por %p65, %p66
    %s69 = sadd.s32 %s68, 1
    %p72 = scmp.eq.s32.totalorder %s13, 1
    %p73 = scmp.ne.s32.totalorder %s68, %s70
    %p74 = scmp.eq.s32.totalorder %s13, 0
    %p75 = por %p73, %p74
    %p76 = scmp.ne.s32.totalorder %s68, %s70
    %p77 = scmp.eq.s32.totalorder %s18, 1
    %p78 = por %p76, %p77
    %p79 = scmp.ne.s32.totalorder %s70, %s71
    %p80 = scmp.eq.s32.totalorder %s18, 0
    %p81 = por %p79, %p80
    %p82 = scmp.ne.s32.totalorder %s70, %s71
    %p83 = scmp.eq.s32.totalorder %s19, 1
    %p84 = por %p82, %p83
    %p86 = scmp.ne.s32.totalorder %s71, %s85
    %p87 = scmp.eq.s32.totalorder %s19, 0
    %p88 = por %p86, %p87
    %s90 = sadd.s32 %s89, 1
    %p93 = scmp.eq.s32.totalorder %s13, 1
    %p94 = scmp.ne.s32.totalorder %s89, %s91
    %p95 = scmp.eq.s32.totalorder %s13, 0
    %p96 = por %p94, %p95
    %p97 = scmp.ne.s32.totalorder %s89, %s91
    %p98 = scmp.eq.s32.totalorder %s18, 1
    %p99 = por %p97, %p98
    %p100 = scmp.ne.s32.totalorder %s91, %s92
    %p101 = scmp.eq.s32.totalorder %s18, 0
    %p102 = por %p100, %p101
    %p103 = scmp.ne.s32.totalorder %s91, %s92
    %p104 = scmp.eq.s32.totalorder %s19, 1
    %p105 = por %p103, %p104
    %p107 = scmp.ne.s32.totalorder %s92, %s106
    %p108 = scmp.eq.s32.totalorder %s19, 0
    %p109 = por %p107, %p108
    %s111 = sadd.s32 %s110, 1
    %p114 = scmp.eq.s32.totalorder %s13, 1
    %p115 = scmp.ne.s32.totalorder %s110, %s112
    %p116 = scmp.eq.s32.totalorder %s13, 0
    %p117 = por %p115, %p116
    %p118 = scmp.ne.s32.totalorder %s110, %s112
    %p119 = scmp.eq.s32.totalorder %s18, 1
    %p120 = por %p118, %p119
    %p121 = scmp.ne.s32.totalorder %s112, %s113
    %p122 = scmp.eq.s32.totalorder %s18, 0
    %p123 = por %p121, %p122
    %p124 = scmp.ne.s32.totalorder %s112, %s113
    %p125 = scmp.eq.s32.totalorder %s19, 1
    %p126 = por %p124, %p125
    %p128 = scmp.ne.s32.totalorder %s113, %s127
    %p129 = scmp.eq.s32.totalorder %s19, 0
    %p130 = por %p128, %p129
    %s132 = sadd.s32 %s131, 1
    %p135 = scmp.eq.s32.totalorder %s13, 1
    %p136 = scmp.ne.s32.totalorder %s131, %s133
    %p137 = scmp.eq.s32.totalorder %s13, 0
    %p138 = por %p136, %p137
    %p139 = scmp.ne.s32.totalorder %s131, %s133
    %p140 = scmp.eq.s32.totalorder %s18, 1
    %p141 = por %p139, %p140
    %p142 = scmp.ne.s32.totalorder %s133, %s134
    %p143 = scmp.eq.s32.totalorder %s18, 0
    %p144 = por %p142, %p143
    %p145 = scmp.ne.s32.totalorder %s133, %s134
    %p146 = scmp.eq.s32.totalorder %s19, 1
    %p147 = por %p145, %p146
    %p149 = scmp.ne.s32.totalorder %s134, %s148
    %p150 = scmp.eq.s32.totalorder %s19, 0
    %p151 = por %p149, %p150
    %s153 = sadd.s32 %s152, 1
    %p156 = scmp.eq.s32.totalorder %s13, 1
    %p157 = scmp.ne.s32.totalorder %s152, %s154
    %p158 = scmp.eq.s32.totalorder %s13, 0
    %p159 = por %p157, %p158
    %p160 = scmp.ne.s32.totalorder %s152, %s154
    %p161 = scmp.eq.s32.totalorder %s18, 1
    %p162 = por %p160, %p161
    %p163 = scmp.ne.s32.totalorder %s154, %s155
    %p164 = scmp.eq.s32.totalorder %s18, 0
    %p165 = por %p163, %p164
    %p166 = scmp.ne.s32.totalorder %s154, %s155
    %p167 = scmp.eq.s32.totalorder %s19, 1
    %p168 = por %p166, %p167
    %p170 = scmp.ne.s32.totalorder %s155, %s169
    %p171 = scmp.eq.s32.totalorder %s19, 0
    %p172 = por %p170, %p171
    %s173 = ssub.s32 %s13, %s20
    %p174 = scmp.eq.s32.totalorder %s173, 0
    %s176 = sadd.s32 %s175, 1
    %s177 = scalar_select %p174, %s175, %s176
    %p180 = pneg %p174
    %p181 = scmp.eq.s32.totalorder %s13, 1
    %p182 = por %p180, %p181
    %p183 = scmp.ne.s32.totalorder %s175, %s178
    %p184 = scmp.eq.s32.totalorder %s13, 0
    %p185 = por %p183, %p184
    %p186 = scmp.ne.s32.totalorder %s175, %s178
    %p187 = scmp.eq.s32.totalorder %s18, 1
    %p188 = por %p186, %p187
    %p189 = scmp.ne.s32.totalorder %s178, %s179
    %p190 = scmp.eq.s32.totalorder %s18, 0
    %p191 = por %p189, %p190
    %p192 = scmp.ne.s32.totalorder %s178, %s179
    %p193 = scmp.eq.s32.totalorder %s19, 1
    %p194 = por %p192, %p193
    %p196 = scmp.ne.s32.totalorder %s179, %s195
    %p197 = scmp.eq.s32.totalorder %s19, 0
    %p198 = por %p196, %p197
    %p199 = scmp.le.s32.totalorder 1, %s13
    %p200 = scmp.lt.s32.totalorder %s13, 3
    %p201 = pnand %p199, %p200
    %p202 = pneg %p201
    // Predicated region
    $region9: #{basic_block_forward_nhwc.1} parent=5 // pred_check
      _
    $region10: #{basic_block_forward_nhwc.1} parent=5 // pred_check_branch
      %204 = sbr.rel (%p201) target = $region12
    $region11: #{basic_block_forward_nhwc.1} parent=5 // pred_region
      %s205 = ssub.s32 %s13, 1
      // Predicated region
      $region13: #{basic_block_forward_nhwc.1} parent=11 // pred_check
        %p206 = pneg %p60
      $region14: #{basic_block_forward_nhwc.1} parent=11 // pred_check_branch
        %208 = sbr.rel (%p206) target = $region16
      $region15: #{basic_block_forward_nhwc.1} parent=11 // pred_region
        _
      $region16: #{basic_block_forward_nhwc.1} parent=11 // pred_fallthru
        _
      // Predicated region
      $region17: #{basic_block_forward_nhwc.1} parent=11 // pred_check
        %p209 = pneg %p81
      $region18: #{basic_block_forward_nhwc.1} parent=11 // pred_check_branch
        %211 = sbr.rel (%p209) target = $region20
      $region19: #{basic_block_forward_nhwc.1} parent=11 // pred_region
        _
      $region20: #{basic_block_forward_nhwc.1} parent=11 // pred_fallthru
        _
      // Predicated region
      $region21: #{basic_block_forward_nhwc.1} parent=11 // pred_check
        %p212 = pneg %p102
      $region22: #{basic_block_forward_nhwc.1} parent=11 // pred_check_branch
        %214 = sbr.rel (%p212) target = $region24
      $region23: #{basic_block_forward_nhwc.1} parent=11 // pred_region
        _
      $region24: #{basic_block_forward_nhwc.1} parent=11 // pred_fallthru
        _
      // Predicated region
      $region25: #{basic_block_forward_nhwc.1} parent=11 // pred_check
        %p215 = pneg %p123
      $region26: #{basic_block_forward_nhwc.1} parent=11 // pred_check_branch
        %217 = sbr.rel (%p215) target = $region28
      $region27: #{basic_block_forward_nhwc.1} parent=11 // pred_region
        _
      $region28: #{basic_block_forward_nhwc.1} parent=11 // pred_fallthru
        _
      // Predicated region
      $region29: #{basic_block_forward_nhwc.1} parent=11 // pred_check
        %p218 = pneg %p144
      $region30: #{basic_block_forward_nhwc.1} parent=11 // pred_check_branch
        %220 = sbr.rel (%p218) target = $region32
      $region31: #{basic_block_forward_nhwc.1} parent=11 // pred_region
        _
      $region32: #{basic_block_forward_nhwc.1} parent=11 // pred_fallthru
        _
      // Predicated region
      $region33: #{basic_block_forward_nhwc.1} parent=11 // pred_check
        %p221 = pneg %p165
      $region34: #{basic_block_forward_nhwc.1} parent=11 // pred_check_branch
        %223 = sbr.rel (%p221) target = $region36
      $region35: #{basic_block_forward_nhwc.1} parent=11 // pred_region
        _
      $region36: #{basic_block_forward_nhwc.1} parent=11 // pred_fallthru
        _
    $region12: #{basic_block_forward_nhwc.1} parent=5 // pred_fallthru
      _
    %p224 = scmp.lt.s32.totalorder %s13, 2
    // Predicated region
    $region37: #{basic_block_forward_nhwc.1} parent=5 // pred_check
      %p225 = pneg %p224
    $region38: #{basic_block_forward_nhwc.1} parent=5 // pred_check_branch
      %227 = sbr.rel (%p225) target = $region40
    $region39: #{basic_block_forward_nhwc.1} parent=5 // pred_region
      // Predicated region
      $region41: #{basic_block_forward_nhwc.1} parent=39 // pred_check
        %p228 = pneg %p33
      $region42: #{basic_block_forward_nhwc.1} parent=39 // pred_check_branch
        %230 = sbr.rel (%p228) target = $region44
      $region43: #{basic_block_forward_nhwc.1} parent=39 // pred_region
        %p231 = scmp.lt.s32.totalorder %s13, 1
        %s232 = scalar_select %p231, %s13, 1
        %s233 = smul.addr %s232, 32
        %s234 = smul.addr %s233, 8
        %s235 = scalar_lea.vmem %s0, %s234
      $region44: #{basic_block_forward_nhwc.1} parent=39 // pred_fallthru
        _
    $region40: #{basic_block_forward_nhwc.1} parent=5 // pred_fallthru
      _
    %p236 = scmp.le.s32.totalorder 1, %s13
    %p237 = scmp.lt.s32.totalorder %s13, 3
    %p238 = pnand %p236, %p237
    %p239 = pneg %p238
    // Predicated region
    $region45: #{basic_block_forward_nhwc.1} parent=5 // pred_check
      _
    $region46: #{basic_block_forward_nhwc.1} parent=5 // pred_check_branch
      %241 = sbr.rel (%p238) target = $region48
    $region47: #{basic_block_forward_nhwc.1} parent=5 // pred_region
      %s242 = ssub.s32 %s13, 1
      %p243 = scmp.lt.s32.totalorder %s18, 1
      %s244 = scalar_select %p243, %s18, 1
      %s245 = smul.addr %s244, 32
      %s246 = smul.addr %s245, 8
      %s247 = scalar_lea.vmem %s0, %s246
      %p248 = pneg %p39
      %p249 = pneg %p36
      %p250 = pneg %p60
      %p251 = pneg %p57
      %p252 = pneg %p81
      %p253 = pneg %p78
      %p254 = pneg %p102
      %p255 = pneg %p99
      %p256 = pneg %p123
      %p257 = pneg %p120
      %p258 = pneg %p144
      %p259 = pneg %p141
      %p260 = pneg %p165
      %p261 = pneg %p162
      %p262 = pneg %p191
      %p263 = pneg %p188
      %p264 = scmp.lt.s32.totalorder %s18, 1
      %s265 = scalar_select %p264, %s18, 1
      %s266 = smul.addr %s265, 32
      %s267 = smul.addr %s266, 8
      %s268 = scalar_lea.vmem %s7, %s267
      %p269 = scmp.lt.s32.totalorder %s18, 1
      %s270 = scalar_select %p269, %s18, 1
      %s271 = smul.addr %s270, 32
      %s272 = smul.addr %s271, 8
      %s273 = scalar_lea.vmem %s0, %s272
      %p274 = scmp.lt.s32.totalorder %s18, 1
      %s275 = scalar_select %p274, %s18, 1
      %s276 = smul.addr %s275, 32
      %s277 = smul.addr %s276, 8
      %s278 = scalar_lea.vmem %s7, %s277
      %vm279 = vcmask 64512
      %280 = vst.msk [vmem:[#allocation2] sm:$0xff] %vm279, 0.0
      %281 = vst.msk [vmem:[#allocation2 + $0x8] sm:$0xff] %vm279, 0.0
      %282 = vst.msk [vmem:[#allocation2 + $0x10] sm:$0xff] %vm279, 0.0
      %s283 = scalar_lea.vmem [#allocation2], 408
      %284 = vst.msk [vmem:[%s283] sm:$0xff] %vm279, 0.0
      %285 = vst.msk [vmem:[%s283 + $0x8] sm:$0xff] %vm279, 0.0
      %286 = vst.msk [vmem:[%s283 + $0x10] sm:$0xff] %vm279, 0.0
      %287 = vst.msk [vmem:[#allocation3] sm:$0xff] %vm279, 0.0
      %288 = vst.msk [vmem:[#allocation3 + $0x8] sm:$0xff] %vm279, 0.0
      %289 = vst.msk [vmem:[#allocation3 + $0x10] sm:$0xff] %vm279, 0.0
      %s290 = scalar_lea.vmem [#allocation3], 408
      %291 = vst.msk [vmem:[%s290] sm:$0xff] %vm279, 0.0
      %292 = vst.msk [vmem:[%s290 + $0x8] sm:$0xff] %vm279, 0.0
      %293 = vst.msk [vmem:[%s290 + $0x10] sm:$0xff] %vm279, 0.0
      %v294 = vld [vmem:[%s273] sm:$0xff]
      %v295 = vld [vmem:[%s273 + $0x8] sm:$0xff]
      %v296 = vld [vmem:[%s273 + $0x10] sm:$0xff]
      %v297 = vld [vmem:[%s273 + $0x18] sm:$0xff]
      %v298 = vld [vmem:[%s273 + $0x20] sm:$0xff]
      %v299 = vld [vmem:[%s273 + $0x28] sm:$0xff]
      %v300 = vld [vmem:[%s273 + $0x30] sm:$0xff]
      %v301 = vld [vmem:[%s273 + $0x38] sm:$0xff]
      %v302 = vld [vmem:[%s273 + $0x40] sm:$0xff]
      %v303 = vld [vmem:[%s273 + $0x48] sm:$0xff]
      %v304 = vld [vmem:[%s273 + $0x50] sm:$0xff]
      %v305 = vld [vmem:[%s273 + $0x58] sm:$0xff]
      %v306 = vld [vmem:[%s273 + $0x60] sm:$0xff]
      %v307 = vld [vmem:[%s273 + $0x68] sm:$0xff]
      %v308 = vld [vmem:[%s273 + $0x70] sm:$0xff]
      %v309 = vld [vmem:[%s273 + $0x78] sm:$0xff]
      %v310 = vld [vmem:[%s273 + $0x80] sm:$0xff]
      %v311 = vld [vmem:[%s273 + $0x88] sm:$0xff]
      %v312 = vld [vmem:[%s273 + $0x90] sm:$0xff]
      %v313 = vld [vmem:[%s273 + $0x98] sm:$0xff]
      %v314 = vld [vmem:[%s273 + $0xa0] sm:$0xff]
      %v315 = vld [vmem:[%s273 + $0xa8] sm:$0xff]
      %v316 = vld [vmem:[%s273 + $0xb0] sm:$0xff]
      %v317 = vld [vmem:[%s273 + $0xb8] sm:$0xff]
      %v318 = vld [vmem:[%s273 + $0xc0] sm:$0xff]
      %v319 = vld [vmem:[%s273 + $0xc8] sm:$0xff]
      %v320 = vld [vmem:[%s273 + $0xd0] sm:$0xff]
      %v321 = vld [vmem:[%s273 + $0xd8] sm:$0xff]
      %v322 = vld [vmem:[%s273 + $0xe0] sm:$0xff]
      %v323 = vld [vmem:[%s273 + $0xe8] sm:$0xff]
      %v324 = vld [vmem:[%s273 + $0xf0] sm:$0xff]
      %v325 = vld [vmem:[%s273 + $0xf8] sm:$0xff]
      %s326 = scalar_lea.vmem [#allocation2], 24
      %327 = vst.msk [vmem:[%s326] sm:$0xff] %vm279, %v294
      %328 = vst.msk [vmem:[%s326 + $0x8] sm:$0xff] %vm279, %v295
      %329 = vst.msk [vmem:[%s326 + $0x18] sm:$0xff] %vm279, %v296
      %330 = vst.msk [vmem:[%s326 + $0x20] sm:$0xff] %vm279, %v297
      %331 = vst.msk [vmem:[%s326 + $0x30] sm:$0xff] %vm279, %v298
      %332 = vst.msk [vmem:[%s326 + $0x38] sm:$0xff] %vm279, %v299
      %333 = vst.msk [vmem:[%s326 + $0x48] sm:$0xff] %vm279, %v300
      %334 = vst.msk [vmem:[%s326 + $0x50] sm:$0xff] %vm279, %v301
      %335 = vst.msk [vmem:[%s326 + $0x60] sm:$0xff] %vm279, %v302
      %336 = vst.msk [vmem:[%s326 + $0x68] sm:$0xff] %vm279, %v303
      %337 = vst.msk [vmem:[%s326 + $0x78] sm:$0xff] %vm279, %v304
      %338 = vst.msk [vmem:[%s326 + $0x80] sm:$0xff] %vm279, %v305
      %339 = vst.msk [vmem:[%s326 + $0x90] sm:$0xff] %vm279, %v306
      %340 = vst.msk [vmem:[%s326 + $0x98] sm:$0xff] %vm279, %v307
      %341 = vst.msk [vmem:[%s326 + $0xa8] sm:$0xff] %vm279, %v308
      %342 = vst.msk [vmem:[%s326 + $0xb0] sm:$0xff] %vm279, %v309
      %343 = vst.msk [vmem:[%s326 + $0xc0] sm:$0xff] %vm279, %v310
      %344 = vst.msk [vmem:[%s326 + $0xc8] sm:$0xff] %vm279, %v311
      %345 = vst.msk [vmem:[%s326 + $0xd8] sm:$0xff] %vm279, %v312
      %346 = vst.msk [vmem:[%s326 + $0xe0] sm:$0xff] %vm279, %v313
      %347 = vst.msk [vmem:[%s326 + $0xf0] sm:$0xff] %vm279, %v314
      %348 = vst.msk [vmem:[%s326 + $0xf8] sm:$0xff] %vm279, %v315
      %349 = vst.msk [vmem:[%s326 + $0x108] sm:$0xff] %vm279, %v316
      %350 = vst.msk [vmem:[%s326 + $0x110] sm:$0xff] %vm279, %v317
      %351 = vst.msk [vmem:[%s326 + $0x120] sm:$0xff] %vm279, %v318
      %352 = vst.msk [vmem:[%s326 + $0x128] sm:$0xff] %vm279, %v319
      %353 = vst.msk [vmem:[%s326 + $0x138] sm:$0xff] %vm279, %v320
      %354 = vst.msk [vmem:[%s326 + $0x140] sm:$0xff] %vm279, %v321
      %355 = vst.msk [vmem:[%s326 + $0x150] sm:$0xff] %vm279, %v322
      %356 = vst.msk [vmem:[%s326 + $0x158] sm:$0xff] %vm279, %v323
      %357 = vst.msk [vmem:[%s326 + $0x168] sm:$0xff] %vm279, %v324
      %358 = vst.msk [vmem:[%s326 + $0x170] sm:$0xff] %vm279, %v325
      %359 = vst.msk [vmem:[%s326 + $0x10] sm:$0xff] %vm279, 0.0
      %360 = vst.msk [vmem:[%s326 + $0x28] sm:$0xff] %vm279, 0.0
      %361 = vst.msk [vmem:[%s326 + $0x40] sm:$0xff] %vm279, 0.0
      %362 = vst.msk [vmem:[%s326 + $0x58] sm:$0xff] %vm279, 0.0
      %363 = vst.msk [vmem:[%s326 + $0x70] sm:$0xff] %vm279, 0.0
      %364 = vst.msk [vmem:[%s326 + $0x88] sm:$0xff] %vm279, 0.0
      %365 = vst.msk [vmem:[%s326 + $0xa0] sm:$0xff] %vm279, 0.0
      %366 = vst.msk [vmem:[%s326 + $0xb8] sm:$0xff] %vm279, 0.0
      %367 = vst.msk [vmem:[%s326 + $0xd0] sm:$0xff] %vm279, 0.0
      %368 = vst.msk [vmem:[%s326 + $0xe8] sm:$0xff] %vm279, 0.0
      %369 = vst.msk [vmem:[%s326 + $0x100] sm:$0xff] %vm279, 0.0
      %370 = vst.msk [vmem:[%s326 + $0x118] sm:$0xff] %vm279, 0.0
      %371 = vst.msk [vmem:[%s326 + $0x130] sm:$0xff] %vm279, 0.0
      %372 = vst.msk [vmem:[%s326 + $0x148] sm:$0xff] %vm279, 0.0
      %373 = vst.msk [vmem:[%s326 + $0x160] sm:$0xff] %vm279, 0.0
      %374 = vst.msk [vmem:[%s326 + $0x178] sm:$0xff] %vm279, 0.0
      %v375 = vld [vmem:[%s3] sm:$0x1]
      %v376 = vld [vmem:[%s4] sm:$0x1]
      %v377 = vld [vmem:[%s5] sm:$0x1]
      %v378 = vld [vmem:[%s6] sm:$0x1]
      %v379 = vlaneseq
      %v380 = vshrl.u32 %v379, 7
      %v381 = vadd.s32 %v380, 8
      %v382 = vadd.s32 %v380, 16
      %v383 = vadd.s32 %v380, 24
      %v384 = vadd.s32 %v380, 32
      %v385 = vadd.s32 %v380, 40
      %v386 = vadd.s32 %v380, 48
      %v387 = vadd.s32 %v380, 56
      %v388 = vadd.s32 %v380, 64
      %v389 = vadd.s32 %v380, 72
      %v390 = vadd.s32 %v380, 80
      %v391 = vadd.s32 %v380, 88
      %v392 = vadd.s32 %v380, 96
      %v393 = vadd.s32 %v380, 104
      %v394 = vadd.s32 %v380, 112
      %v395 = vadd.s32 %v380, 120
      %v396 = vadd.s32 %v380, 128
      %v397 = vadd.s32 %v380, 136
      %v398 = vadd.s32 %v380, 144
      %v399 = vadd.s32 %v380, 152
      %v400 = vadd.s32 %v380, 160
      %v401 = vadd.s32 %v380, 168
      %v402 = vadd.s32 %v380, 176
      %v403 = vadd.s32 %v380, 184
      %vm404 = vcmp.lt.s32.totalorder %v380, 0
      %v405 = vsub.s32 0, %v380
      %v406 = vsel %vm404, %v405, %v380
      %v407 = vand.u32 %v406, 65535
      %v408 = vshrl.u32 %v406, 16
      %v410 = vmul.u32 %v407, 43691
      %v411 = vmul.u32 %v407, 43690
      %v412 = vmul.u32 %v408, 43691
      %v413 = vmul.u32 %v408, 43690
      %v414 = vshll.u32 %v411, 16
      %v415 = vshrl.u32 %v411, 16
      %v416 = vshll.u32 %v412, 16
      %v417 = vshrl.u32 %v412, 16
      %vm418 = vc.u32 %v410, %v414
      %v419 = vsel %vm418, 1, 0
      %v420 = vadd.s32 %v410, %v414
      %v421 = vadd.s32 %v413, %v419
      %vm422 = vc.u32 %v420, %v416
      %v423 = vsel %vm422, 1, 0
      %v424 = vadd.s32 %v420, %v416
      %v425 = vadd.s32 %v421, %v423
      %v426 = vadd.s32 %v425, %v415
      %v427 = vadd.s32 %v426, %v417
      %v428 = vshrl.u32 %v427, 4
      %v429 = vmul.u32 %v428, 24
      %v430 = vsub.s32 %v406, %v429
      %v431 = vsub.s32 0, %v430
      %v432 = vsel %vm404, %v431, %v430
      %vm433 = vcmp.lt.s32.totalorder %v381, 0
      %v434 = vsub.s32 0, %v381
      %v435 = vsel %vm433, %v434, %v381
      %v436 = vand.u32 %v435, 65535
      %v437 = vshrl.u32 %v435, 16
      %v439 = vmul.u32 %v436, 43691
      %v440 = vmul.u32 %v436, 43690
      %v441 = vmul.u32 %v437, 43691
      %v442 = vmul.u32 %v437, 43690
      %v443 = vshll.u32 %v440, 16
      %v444 = vshrl.u32 %v440, 16
      %v445 = vshll.u32 %v441, 16
      %v446 = vshrl.u32 %v441, 16
      %vm447 = vc.u32 %v439, %v443
      %v448 = vsel %vm447, 1, 0
      %v449 = vadd.s32 %v439, %v443
      %v450 = vadd.s32 %v442, %v448
      %vm451 = vc.u32 %v449, %v445
      %v452 = vsel %vm451, 1, 0
      %v453 = vadd.s32 %v449, %v445
      %v454 = vadd.s32 %v450, %v452
      %v455 = vadd.s32 %v454, %v444
      %v456 = vadd.s32 %v455, %v446
      %v457 = vshrl.u32 %v456, 4
      %v458 = vmul.u32 %v457, 24
      %v459 = vsub.s32 %v435, %v458
      %v460 = vsub.s32 0, %v459
      %v461 = vsel %vm433, %v460, %v459
      %vm462 = vcmp.lt.s32.totalorder %v382, 0
      %v463 = vsub.s32 0, %v382
      %v464 = vsel %vm462, %v463, %v382
      %v465 = vand.u32 %v464, 65535
      %v466 = vshrl.u32 %v464, 16
      %v468 = vmul.u32 %v465, 43691
      %v469 = vmul.u32 %v465, 43690
      %v470 = vmul.u32 %v466, 43691
      %v471 = vmul.u32 %v466, 43690
      %v472 = vshll.u32 %v469, 16
      %v473 = vshrl.u32 %v469, 16
      %v474 = vshll.u32 %v470, 16
      %v475 = vshrl.u32 %v470, 16
      %vm476 = vc.u32 %v468, %v472
      %v477 = vsel %vm476, 1, 0
      %v478 = vadd.s32 %v468, %v472
      %v479 = vadd.s32 %v471, %v477
      %vm480 = vc.u32 %v478, %v474
      %v481 = vsel %vm480, 1, 0
      %v482 = vadd.s32 %v478, %v474
      %v483 = vadd.s32 %v479, %v481
      %v484 = vadd.s32 %v483, %v473
      %v485 = vadd.s32 %v484, %v475
      %v486 = vshrl.u32 %v485, 4
      %v487 = vmul.u32 %v486, 24
      %v488 = vsub.s32 %v464, %v487
      %v489 = vsub.s32 0, %v488
      %v490 = vsel %vm462, %v489, %v488
      %vm491 = vcmp.lt.s32.totalorder %v383, 0
      %v492 = vsub.s32 0, %v383
      %v493 = vsel %vm491, %v492, %v383
      %v494 = vand.u32 %v493, 65535
      %v495 = vshrl.u32 %v493, 16
      %v497 = vmul.u32 %v494, 43691
      %v498 = vmul.u32 %v494, 43690
      %v499 = vmul.u32 %v495, 43691
      %v500 = vmul.u32 %v495, 43690
      %v501 = vshll.u32 %v498, 16
      %v502 = vshrl.u32 %v498, 16
      %v503 = vshll.u32 %v499, 16
      %v504 = vshrl.u32 %v499, 16
      %vm505 = vc.u32 %v497, %v501
      %v506 = vsel %vm505, 1, 0
      %v507 = vadd.s32 %v497, %v501
      %v508 = vadd.s32 %v500, %v506
      %vm509 = vc.u32 %v507, %v503
      %v510 = vsel %vm509, 1, 0
      %v511 = vadd.s32 %v507, %v503
      %v512 = vadd.s32 %v508, %v510
      %v513 = vadd.s32 %v512, %v502
      %v514 = vadd.s32 %v513, %v504
      %v515 = vshrl.u32 %v514, 4
      %v516 = vmul.u32 %v515, 24
      %v517 = vsub.s32 %v493, %v516
      %v518 = vsub.s32 0, %v517
      %v519 = vsel %vm491, %v518, %v517
      %vm520 = vcmp.lt.s32.totalorder %v384, 0
      %v521 = vsub.s32 0, %v384
      %v522 = vsel %vm520, %v521, %v384
      %v523 = vand.u32 %v522, 65535
      %v524 = vshrl.u32 %v522, 16
      %v526 = vmul.u32 %v523, 43691
      %v527 = vmul.u32 %v523, 43690
      %v528 = vmul.u32 %v524, 43691
      %v529 = vmul.u32 %v524, 43690
      %v530 = vshll.u32 %v527, 16
      %v531 = vshrl.u32 %v527, 16
      %v532 = vshll.u32 %v528, 16
      %v533 = vshrl.u32 %v528, 16
      %vm534 = vc.u32 %v526, %v530
      %v535 = vsel %vm534, 1, 0
      %v536 = vadd.s32 %v526, %v530
      %v537 = vadd.s32 %v529, %v535
      %vm538 = vc.u32 %v536, %v532
      %v539 = vsel %vm538, 1, 0
      %v540 = vadd.s32 %v536, %v532
      %v541 = vadd.s32 %v537, %v539
      %v542 = vadd.s32 %v541, %v531
      %v543 = vadd.s32 %v542, %v533
      %v544 = vshrl.u32 %v543, 4
      %v545 = vmul.u32 %v544, 24
      %v546 = vsub.s32 %v522, %v545
      %v547 = vsub.s32 0, %v546
      %v548 = vsel %vm520, %v547, %v546
      %vm549 = vcmp.lt.s32.totalorder %v385, 0
      %v550 = vsub.s32 0, %v385
      %v551 = vsel %vm549, %v550, %v385
      %v552 = vand.u32 %v551, 65535
      %v553 = vshrl.u32 %v551, 16
      %v555 = vmul.u32 %v552, 43691
      %v556 = vmul.u32 %v552, 43690
      %v557 = vmul.u32 %v553, 43691
      %v558 = vmul.u32 %v553, 43690
      %v559 = vshll.u32 %v556, 16
      %v560 = vshrl.u32 %v556, 16
      %v561 = vshll.u32 %v557, 16
      %v562 = vshrl.u32 %v557, 16
      %vm563 = vc.u32 %v555, %v559
      %v564 = vsel %vm563, 1, 0
      %v565 = vadd.s32 %v555, %v559
      %v566 = vadd.s32 %v558, %v564
      %vm567 = vc.u32 %v565, %v561
      %v568 = vsel %vm567, 1, 0
      %v569 = vadd.s32 %v565, %v561
      %v570 = vadd.s32 %v566, %v568
      %v571 = vadd.s32 %v570, %v560
      %v572 = vadd.s32 %v571, %v562
      %v573 = vshrl.u32 %v572, 4
      %v574 = vmul.u32 %v573, 24
      %v575 = vsub.s32 %v551, %v574
      %v576 = vsub.s32 0, %v575
      %v577 = vsel %vm549, %v576, %v575
      %vm578 = vcmp.lt.s32.totalorder %v386, 0
      %v579 = vsub.s32 0, %v386
      %v580 = vsel %vm578, %v579, %v386
      %v581 = vand.u32 %v580, 65535
      %v582 = vshrl.u32 %v580, 16
      %v584 = vmul.u32 %v581, 43691
      %v585 = vmul.u32 %v581, 43690
      %v586 = vmul.u32 %v582, 43691
      %v587 = vmul.u32 %v582, 43690
      %v588 = vshll.u32 %v585, 16
      %v589 = vshrl.u32 %v585, 16
      %v590 = vshll.u32 %v586, 16
      %v591 = vshrl.u32 %v586, 16
      %vm592 = vc.u32 %v584, %v588
      %v593 = vsel %vm592, 1, 0
      %v594 = vadd.s32 %v584, %v588
      %v595 = vadd.s32 %v587, %v593
      %vm596 = vc.u32 %v594, %v590
      %v597 = vsel %vm596, 1, 0
      %v598 = vadd.s32 %v594, %v590
      %v599 = vadd.s32 %v595, %v597
      %v600 = vadd.s32 %v599, %v589
      %v601 = vadd.s32 %v600, %v591
      %v602 = vshrl.u32 %v601, 4
      %v603 = vmul.u32 %v602, 24
      %v604 = vsub.s32 %v580, %v603
      %v605 = vsub.s32 0, %v604
      %v606 = vsel %vm578, %v605, %v604
      %vm607 = vcmp.lt.s32.totalorder %v387, 0
      %v608 = vsub.s32 0, %v387
      %v609 = vsel %vm607, %v608, %v387
      %v610 = vand.u32 %v609, 65535
      %v611 = vshrl.u32 %v609, 16
      %v613 = vmul.u32 %v610, 43691
      %v614 = vmul.u32 %v610, 43690
      %v615 = vmul.u32 %v611, 43691
      %v616 = vmul.u32 %v611, 43690
      %v617 = vshll.u32 %v614, 16
      %v618 = vshrl.u32 %v614, 16
      %v619 = vshll.u32 %v615, 16
      %v620 = vshrl.u32 %v615, 16
      %vm621 = vc.u32 %v613, %v617
      %v622 = vsel %vm621, 1, 0
      %v623 = vadd.s32 %v613, %v617
      %v624 = vadd.s32 %v616, %v622
      %vm625 = vc.u32 %v623, %v619
      %v626 = vsel %vm625, 1, 0
      %v627 = vadd.s32 %v623, %v619
      %v628 = vadd.s32 %v624, %v626
      %v629 = vadd.s32 %v628, %v618
      %v630 = vadd.s32 %v629, %v620
      %v631 = vshrl.u32 %v630, 4
      %v632 = vmul.u32 %v631, 24
      %v633 = vsub.s32 %v609, %v632
      %v634 = vsub.s32 0, %v633
      %v635 = vsel %vm607, %v634, %v633
      %vm636 = vcmp.lt.s32.totalorder %v388, 0
      %v637 = vsub.s32 0, %v388
      %v638 = vsel %vm636, %v637, %v388
      %v639 = vand.u32 %v638, 65535
      %v640 = vshrl.u32 %v638, 16
      %v642 = vmul.u32 %v639, 43691
      %v643 = vmul.u32 %v639, 43690
      %v644 = vmul.u32 %v640, 43691
      %v645 = vmul.u32 %v640, 43690
      %v646 = vshll.u32 %v643, 16
      %v647 = vshrl.u32 %v643, 16
      %v648 = vshll.u32 %v644, 16
      %v649 = vshrl.u32 %v644, 16
      %vm650 = vc.u32 %v642, %v646
      %v651 = vsel %vm650, 1, 0
      %v652 = vadd.s32 %v642, %v646
      %v653 = vadd.s32 %v645, %v651
      %vm654 = vc.u32 %v652, %v648
      %v655 = vsel %vm654, 1, 0
      %v656 = vadd.s32 %v652, %v648
      %v657 = vadd.s32 %v653, %v655
      %v658 = vadd.s32 %v657, %v647
      %v659 = vadd.s32 %v658, %v649
      %v660 = vshrl.u32 %v659, 4
      %v661 = vmul.u32 %v660, 24
      %v662 = vsub.s32 %v638, %v661
      %v663 = vsub.s32 0, %v662
      %v664 = vsel %vm636, %v663, %v662
      %vm665 = vcmp.lt.s32.totalorder %v389, 0
      %v666 = vsub.s32 0, %v389
      %v667 = vsel %vm665, %v666, %v389
      %v668 = vand.u32 %v667, 65535
      %v669 = vshrl.u32 %v667, 16
      %v671 = vmul.u32 %v668, 43691
      %v672 = vmul.u32 %v668, 43690
      %v673 = vmul.u32 %v669, 43691
      %v674 = vmul.u32 %v669, 43690
      %v675 = vshll.u32 %v672, 16
      %v676 = vshrl.u32 %v672, 16
      %v677 = vshll.u32 %v673, 16
      %v678 = vshrl.u32 %v673, 16
      %vm679 = vc.u32 %v671, %v675
      %v680 = vsel %vm679, 1, 0
      %v681 = vadd.s32 %v671, %v675
      %v682 = vadd.s32 %v674, %v680
      %vm683 = vc.u32 %v681, %v677
      %v684 = vsel %vm683, 1, 0
      %v685 = vadd.s32 %v681, %v677
      %v686 = vadd.s32 %v682, %v684
      %v687 = vadd.s32 %v686, %v676
      %v688 = vadd.s32 %v687, %v678
      %v689 = vshrl.u32 %v688, 4
      %v690 = vmul.u32 %v689, 24
      %v691 = vsub.s32 %v667, %v690
      %v692 = vsub.s32 0, %v691
      %v693 = vsel %vm665, %v692, %v691
      %vm694 = vcmp.lt.s32.totalorder %v390, 0
      %v695 = vsub.s32 0, %v390
      %v696 = vsel %vm694, %v695, %v390
      %v697 = vand.u32 %v696, 65535
      %v698 = vshrl.u32 %v696, 16
      %v700 = vmul.u32 %v697, 43691
      %v701 = vmul.u32 %v697, 43690
      %v702 = vmul.u32 %v698, 43691
      %v703 = vmul.u32 %v698, 43690
      %v704 = vshll.u32 %v701, 16
      %v705 = vshrl.u32 %v701, 16
      %v706 = vshll.u32 %v702, 16
      %v707 = vshrl.u32 %v702, 16
      %vm708 = vc.u32 %v700, %v704
      %v709 = vsel %vm708, 1, 0
      %v710 = vadd.s32 %v700, %v704
      %v711 = vadd.s32 %v703, %v709
      %vm712 = vc.u32 %v710, %v706
      %v713 = vsel %vm712, 1, 0
      %v714 = vadd.s32 %v710, %v706
      %v715 = vadd.s32 %v711, %v713
      %v716 = vadd.s32 %v715, %v705
      %v717 = vadd.s32 %v716, %v707
      %v718 = vshrl.u32 %v717, 4
      %v719 = vmul.u32 %v718, 24
      %v720 = vsub.s32 %v696, %v719
      %v721 = vsub.s32 0, %v720
      %v722 = vsel %vm694, %v721, %v720
      %vm723 = vcmp.lt.s32.totalorder %v391, 0
      %v724 = vsub.s32 0, %v391
      %v725 = vsel %vm723, %v724, %v391
      %v726 = vand.u32 %v725, 65535
      %v727 = vshrl.u32 %v725, 16
      %v729 = vmul.u32 %v726, 43691
      %v730 = vmul.u32 %v726, 43690
      %v731 = vmul.u32 %v727, 43691
      %v732 = vmul.u32 %v727, 43690
      %v733 = vshll.u32 %v730, 16
      %v734 = vshrl.u32 %v730, 16
      %v735 = vshll.u32 %v731, 16
      %v736 = vshrl.u32 %v731, 16
      %vm737 = vc.u32 %v729, %v733
      %v738 = vsel %vm737, 1, 0
      %v739 = vadd.s32 %v729, %v733
      %v740 = vadd.s32 %v732, %v738
      %vm741 = vc.u32 %v739, %v735
      %v742 = vsel %vm741, 1, 0
      %v743 = vadd.s32 %v739, %v735
      %v744 = vadd.s32 %v740, %v742
      %v745 = vadd.s32 %v744, %v734
      %v746 = vadd.s32 %v745, %v736
      %v747 = vshrl.u32 %v746, 4
      %v748 = vmul.u32 %v747, 24
      %v749 = vsub.s32 %v725, %v748
      %v750 = vsub.s32 0, %v749
      %v751 = vsel %vm723, %v750, %v749
      %vm752 = vcmp.lt.s32.totalorder %v392, 0
      %v753 = vsub.s32 0, %v392
      %v754 = vsel %vm752, %v753, %v392
      %v755 = vand.u32 %v754, 65535
      %v756 = vshrl.u32 %v754, 16
      %v758 = vmul.u32 %v755, 43691
      %v759 = vmul.u32 %v755, 43690
      %v760 = vmul.u32 %v756, 43691
      %v761 = vmul.u32 %v756, 43690
      %v762 = vshll.u32 %v759, 16
      %v763 = vshrl.u32 %v759, 16
      %v764 = vshll.u32 %v760, 16
      %v765 = vshrl.u32 %v760, 16
      %vm766 = vc.u32 %v758, %v762
      %v767 = vsel %vm766, 1, 0
      %v768 = vadd.s32 %v758, %v762
      %v769 = vadd.s32 %v761, %v767
      %vm770 = vc.u32 %v768, %v764
      %v771 = vsel %vm770, 1, 0
      %v772 = vadd.s32 %v768, %v764
      %v773 = vadd.s32 %v769, %v771
      %v774 = vadd.s32 %v773, %v763
      %v775 = vadd.s32 %v774, %v765
      %v776 = vshrl.u32 %v775, 4
      %v777 = vmul.u32 %v776, 24
      %v778 = vsub.s32 %v754, %v777
      %v779 = vsub.s32 0, %v778
      %v780 = vsel %vm752, %v779, %v778
      %vm781 = vcmp.lt.s32.totalorder %v393, 0
      %v782 = vsub.s32 0, %v393
      %v783 = vsel %vm781, %v782, %v393
      %v784 = vand.u32 %v783, 65535
      %v785 = vshrl.u32 %v783, 16
      %v787 = vmul.u32 %v784, 43691
      %v788 = vmul.u32 %v784, 43690
      %v789 = vmul.u32 %v785, 43691
      %v790 = vmul.u32 %v785, 43690
      %v791 = vshll.u32 %v788, 16
      %v792 = vshrl.u32 %v788, 16
      %v793 = vshll.u32 %v789, 16
      %v794 = vshrl.u32 %v789, 16
      %vm795 = vc.u32 %v787, %v791
      %v796 = vsel %vm795, 1, 0
      %v797 = vadd.s32 %v787, %v791
      %v798 = vadd.s32 %v790, %v796
      %vm799 = vc.u32 %v797, %v793
      %v800 = vsel %vm799, 1, 0
      %v801 = vadd.s32 %v797, %v793
      %v802 = vadd.s32 %v798, %v800
      %v803 = vadd.s32 %v802, %v792
      %v804 = vadd.s32 %v803, %v794
      %v805 = vshrl.u32 %v804, 4
      %v806 = vmul.u32 %v805, 24
      %v807 = vsub.s32 %v783, %v806
      %v808 = vsub.s32 0, %v807
      %v809 = vsel %vm781, %v808, %v807
      %vm810 = vcmp.lt.s32.totalorder %v394, 0
      %v811 = vsub.s32 0, %v394
      %v812 = vsel %vm810, %v811, %v394
      %v813 = vand.u32 %v812, 65535
      %v814 = vshrl.u32 %v812, 16
      %v816 = vmul.u32 %v813, 43691
      %v817 = vmul.u32 %v813, 43690
      %v818 = vmul.u32 %v814, 43691
      %v819 = vmul.u32 %v814, 43690
      %v820 = vshll.u32 %v817, 16
      %v821 = vshrl.u32 %v817, 16
      %v822 = vshll.u32 %v818, 16
      %v823 = vshrl.u32 %v818, 16
      %vm824 = vc.u32 %v816, %v820
      %v825 = vsel %vm824, 1, 0
      %v826 = vadd.s32 %v816, %v820
      %v827 = vadd.s32 %v819, %v825
      %vm828 = vc.u32 %v826, %v822
      %v829 = vsel %vm828, 1, 0
      %v830 = vadd.s32 %v826, %v822
      %v831 = vadd.s32 %v827, %v829
      %v832 = vadd.s32 %v831, %v821
      %v833 = vadd.s32 %v832, %v823
      %v834 = vshrl.u32 %v833, 4
      %v835 = vmul.u32 %v834, 24
      %v836 = vsub.s32 %v812, %v835
      %v837 = vsub.s32 0, %v836
      %v838 = vsel %vm810, %v837, %v836
      %vm839 = vcmp.lt.s32.totalorder %v395, 0
      %v840 = vsub.s32 0, %v395
      %v841 = vsel %vm839, %v840, %v395
      %v842 = vand.u32 %v841, 65535
      %v843 = vshrl.u32 %v841, 16
      %v845 = vmul.u32 %v842, 43691
      %v846 = vmul.u32 %v842, 43690
      %v847 = vmul.u32 %v843, 43691
      %v848 = vmul.u32 %v843, 43690
      %v849 = vshll.u32 %v846, 16
      %v850 = vshrl.u32 %v846, 16
      %v851 = vshll.u32 %v847, 16
      %v852 = vshrl.u32 %v847, 16
      %vm853 = vc.u32 %v845, %v849
      %v854 = vsel %vm853, 1, 0
      %v855 = vadd.s32 %v845, %v849
      %v856 = vadd.s32 %v848, %v854
      %vm857 = vc.u32 %v855, %v851
      %v858 = vsel %vm857, 1, 0
      %v859 = vadd.s32 %v855, %v851
      %v860 = vadd.s32 %v856, %v858
      %v861 = vadd.s32 %v860, %v850
      %v862 = vadd.s32 %v861, %v852
      %v863 = vshrl.u32 %v862, 4
      %v864 = vmul.u32 %v863, 24
      %v865 = vsub.s32 %v841, %v864
      %v866 = vsub.s32 0, %v865
      %v867 = vsel %vm839, %v866, %v865
      %vm868 = vcmp.lt.s32.totalorder %v396, 0
      %v869 = vsub.s32 0, %v396
      %v870 = vsel %vm868, %v869, %v396
      %v871 = vand.u32 %v870, 65535
      %v872 = vshrl.u32 %v870, 16
      %v874 = vmul.u32 %v871, 43691
      %v875 = vmul.u32 %v871, 43690
      %v876 = vmul.u32 %v872, 43691
      %v877 = vmul.u32 %v872, 43690
      %v878 = vshll.u32 %v875, 16
      %v879 = vshrl.u32 %v875, 16
      %v880 = vshll.u32 %v876, 16
      %v881 = vshrl.u32 %v876, 16
      %vm882 = vc.u32 %v874, %v878
      %v883 = vsel %vm882, 1, 0
      %v884 = vadd.s32 %v874, %v878
      %v885 = vadd.s32 %v877, %v883
      %vm886 = vc.u32 %v884, %v880
      %v887 = vsel %vm886, 1, 0
      %v888 = vadd.s32 %v884, %v880
      %v889 = vadd.s32 %v885, %v887
      %v890 = vadd.s32 %v889, %v879
      %v891 = vadd.s32 %v890, %v881
      %v892 = vshrl.u32 %v891, 4
      %v893 = vmul.u32 %v892, 24
      %v894 = vsub.s32 %v870, %v893
      %v895 = vsub.s32 0, %v894
      %v896 = vsel %vm868, %v895, %v894
      %vm897 = vcmp.lt.s32.totalorder %v397, 0
      %v898 = vsub.s32 0, %v397
      %v899 = vsel %vm897, %v898, %v397
      %v900 = vand.u32 %v899, 65535
      %v901 = vshrl.u32 %v899, 16
      %v903 = vmul.u32 %v900, 43691
      %v904 = vmul.u32 %v900, 43690
      %v905 = vmul.u32 %v901, 43691
      %v906 = vmul.u32 %v901, 43690
      %v907 = vshll.u32 %v904, 16
      %v908 = vshrl.u32 %v904, 16
      %v909 = vshll.u32 %v905, 16
      %v910 = vshrl.u32 %v905, 16
      %vm911 = vc.u32 %v903, %v907
      %v912 = vsel %vm911, 1, 0
      %v913 = vadd.s32 %v903, %v907
      %v914 = vadd.s32 %v906, %v912
      %vm915 = vc.u32 %v913, %v909
      %v916 = vsel %vm915, 1, 0
      %v917 = vadd.s32 %v913, %v909
      %v918 = vadd.s32 %v914, %v916
      %v919 = vadd.s32 %v918, %v908
      %v920 = vadd.s32 %v919, %v910
      %v921 = vshrl.u32 %v920, 4
      %v922 = vmul.u32 %v921, 24
      %v923 = vsub.s32 %v899, %v922
      %v924 = vsub.s32 0, %v923
      %v925 = vsel %vm897, %v924, %v923
      %vm926 = vcmp.lt.s32.totalorder %v398, 0
      %v927 = vsub.s32 0, %v398
      %v928 = vsel %vm926, %v927, %v398
      %v929 = vand.u32 %v928, 65535
      %v930 = vshrl.u32 %v928, 16
      %v932 = vmul.u32 %v929, 43691
      %v933 = vmul.u32 %v929, 43690
      %v934 = vmul.u32 %v930, 43691
      %v935 = vmul.u32 %v930, 43690
      %v936 = vshll.u32 %v933, 16
      %v937 = vshrl.u32 %v933, 16
      %v938 = vshll.u32 %v934, 16
      %v939 = vshrl.u32 %v934, 16
      %vm940 = vc.u32 %v932, %v936
      %v941 = vsel %vm940, 1, 0
      %v942 = vadd.s32 %v932, %v936
      %v943 = vadd.s32 %v935, %v941
      %vm944 = vc.u32 %v942, %v938
      %v945 = vsel %vm944, 1, 0
      %v946 = vadd.s32 %v942, %v938
      %v947 = vadd.s32 %v943, %v945
      %v948 = vadd.s32 %v947, %v937
      %v949 = vadd.s32 %v948, %v939
      %v950 = vshrl.u32 %v949, 4
      %v951 = vmul.u32 %v950, 24
      %v952 = vsub.s32 %v928, %v951
      %v953 = vsub.s32 0, %v952
      %v954 = vsel %vm926, %v953, %v952
      %vm955 = vcmp.lt.s32.totalorder %v399, 0
      %v956 = vsub.s32 0, %v399
      %v957 = vsel %vm955, %v956, %v399
      %v958 = vand.u32 %v957, 65535
      %v959 = vshrl.u32 %v957, 16
      %v961 = vmul.u32 %v958, 43691
      %v962 = vmul.u32 %v958, 43690
      %v963 = vmul.u32 %v959, 43691
      %v964 = vmul.u32 %v959, 43690
      %v965 = vshll.u32 %v962, 16
      %v966 = vshrl.u32 %v962, 16
      %v967 = vshll.u32 %v963, 16
      %v968 = vshrl.u32 %v963, 16
      %vm969 = vc.u32 %v961, %v965
      %v970 = vsel %vm969, 1, 0
      %v971 = vadd.s32 %v961, %v965
      %v972 = vadd.s32 %v964, %v970
      %vm973 = vc.u32 %v971, %v967
      %v974 = vsel %vm973, 1, 0
      %v975 = vadd.s32 %v971, %v967
      %v976 = vadd.s32 %v972, %v974
      %v977 = vadd.s32 %v976, %v966
      %v978 = vadd.s32 %v977, %v968
      %v979 = vshrl.u32 %v978, 4
      %v980 = vmul.u32 %v979, 24
      %v981 = vsub.s32 %v957, %v980
      %v982 = vsub.s32 0, %v981
      %v983 = vsel %vm955, %v982, %v981
      %vm984 = vcmp.lt.s32.totalorder %v400, 0
      %v985 = vsub.s32 0, %v400
      %v986 = vsel %vm984, %v985, %v400
      %v987 = vand.u32 %v986, 65535
      %v988 = vshrl.u32 %v986, 16
      %v990 = vmul.u32 %v987, 43691
      %v991 = vmul.u32 %v987, 43690
      %v992 = vmul.u32 %v988, 43691
      %v993 = vmul.u32 %v988, 43690
      %v994 = vshll.u32 %v991, 16
      %v995 = vshrl.u32 %v991, 16
      %v996 = vshll.u32 %v992, 16
      %v997 = vshrl.u32 %v992, 16
      %vm998 = vc.u32 %v990, %v994
      %v999 = vsel %vm998, 1, 0
      %v1000 = vadd.s32 %v990, %v994
      %v1001 = vadd.s32 %v993, %v999
      %vm1002 = vc.u32 %v1000, %v996
      %v1003 = vsel %vm1002, 1, 0
      %v1004 = vadd.s32 %v1000, %v996
      %v1005 = vadd.s32 %v1001, %v1003
      %v1006 = vadd.s32 %v1005, %v995
      %v1007 = vadd.s32 %v1006, %v997
      %v1008 = vshrl.u32 %v1007, 4
      %v1009 = vmul.u32 %v1008, 24
      %v1010 = vsub.s32 %v986, %v1009
      %v1011 = vsub.s32 0, %v1010
      %v1012 = vsel %vm984, %v1011, %v1010
      %vm1013 = vcmp.lt.s32.totalorder %v401, 0
      %v1014 = vsub.s32 0, %v401
      %v1015 = vsel %vm1013, %v1014, %v401
      %v1016 = vand.u32 %v1015, 65535
      %v1017 = vshrl.u32 %v1015, 16
      %v1019 = vmul.u32 %v1016, 43691
      %v1020 = vmul.u32 %v1016, 43690
      %v1021 = vmul.u32 %v1017, 43691
      %v1022 = vmul.u32 %v1017, 43690
      %v1023 = vshll.u32 %v1020, 16
      %v1024 = vshrl.u32 %v1020, 16
      %v1025 = vshll.u32 %v1021, 16
      %v1026 = vshrl.u32 %v1021, 16
      %vm1027 = vc.u32 %v1019, %v1023
      %v1028 = vsel %vm1027, 1, 0
      %v1029 = vadd.s32 %v1019, %v1023
      %v1030 = vadd.s32 %v1022, %v1028
      %vm1031 = vc.u32 %v1029, %v1025
      %v1032 = vsel %vm1031, 1, 0
      %v1033 = vadd.s32 %v1029, %v1025
      %v1034 = vadd.s32 %v1030, %v1032
      %v1035 = vadd.s32 %v1034, %v1024
      %v1036 = vadd.s32 %v1035, %v1026
      %v1037 = vshrl.u32 %v1036, 4
      %v1038 = vmul.u32 %v1037, 24
      %v1039 = vsub.s32 %v1015, %v1038
      %v1040 = vsub.s32 0, %v1039
      %v1041 = vsel %vm1013, %v1040, %v1039
      %vm1042 = vcmp.lt.s32.totalorder %v402, 0
      %v1043 = vsub.s32 0, %v402
      %v1044 = vsel %vm1042, %v1043, %v402
      %v1045 = vand.u32 %v1044, 65535
      %v1046 = vshrl.u32 %v1044, 16
      %v1048 = vmul.u32 %v1045, 43691
      %v1049 = vmul.u32 %v1045, 43690
      %v1050 = vmul.u32 %v1046, 43691
      %v1051 = vmul.u32 %v1046, 43690
      %v1052 = vshll.u32 %v1049, 16
      %v1053 = vshrl.u32 %v1049, 16
      %v1054 = vshll.u32 %v1050, 16
      %v1055 = vshrl.u32 %v1050, 16
      %vm1056 = vc.u32 %v1048, %v1052
      %v1057 = vsel %vm1056, 1, 0
      %v1058 = vadd.s32 %v1048, %v1052
      %v1059 = vadd.s32 %v1051, %v1057
      %vm1060 = vc.u32 %v1058, %v1054
      %v1061 = vsel %vm1060, 1, 0
      %v1062 = vadd.s32 %v1058, %v1054
      %v1063 = vadd.s32 %v1059, %v1061
      %v1064 = vadd.s32 %v1063, %v1053
      %v1065 = vadd.s32 %v1064, %v1055
      %v1066 = vshrl.u32 %v1065, 4
      %v1067 = vmul.u32 %v1066, 24
      %v1068 = vsub.s32 %v1044, %v1067
      %v1069 = vsub.s32 0, %v1068
      %v1070 = vsel %vm1042, %v1069, %v1068
      %vm1071 = vcmp.lt.s32.totalorder %v403, 0
      %v1072 = vsub.s32 0, %v403
      %v1073 = vsel %vm1071, %v1072, %v403
      %v1074 = vand.u32 %v1073, 65535
      %v1075 = vshrl.u32 %v1073, 16
      %v1077 = vmul.u32 %v1074, 43691
      %v1078 = vmul.u32 %v1074, 43690
      %v1079 = vmul.u32 %v1075, 43691
      %v1080 = vmul.u32 %v1075, 43690
      %v1081 = vshll.u32 %v1078, 16
      %v1082 = vshrl.u32 %v1078, 16
      %v1083 = vshll.u32 %v1079, 16
      %v1084 = vshrl.u32 %v1079, 16
      %vm1085 = vc.u32 %v1077, %v1081
      %v1086 = vsel %vm1085, 1, 0
      %v1087 = vadd.s32 %v1077, %v1081
      %v1088 = vadd.s32 %v1080, %v1086
      %vm1089 = vc.u32 %v1087, %v1083
      %v1090 = vsel %vm1089, 1, 0
      %v1091 = vadd.s32 %v1087, %v1083
      %v1092 = vadd.s32 %v1088, %v1090
      %v1093 = vadd.s32 %v1092, %v1082
      %v1094 = vadd.s32 %v1093, %v1084
      %v1095 = vshrl.u32 %v1094, 4
      %v1096 = vmul.u32 %v1095, 24
      %v1097 = vsub.s32 %v1073, %v1096
      %v1098 = vsub.s32 0, %v1097
      %v1099 = vsel %vm1071, %v1098, %v1097
      %vm1100 = vcmp.ne.s32.totalorder %v432, 0
      %vm1101 = vcmp.ne.s32.totalorder %v461, 0
      %vm1102 = vcmp.ne.s32.totalorder %v490, 0
      %vm1103 = vcmp.ne.s32.totalorder %v519, 0
      %vm1104 = vcmp.ne.s32.totalorder %v548, 0
      %vm1105 = vcmp.ne.s32.totalorder %v577, 0
      %vm1106 = vcmp.ne.s32.totalorder %v606, 0
      %vm1107 = vcmp.ne.s32.totalorder %v635, 0
      %vm1108 = vcmp.ne.s32.totalorder %v664, 0
      %vm1109 = vcmp.ne.s32.totalorder %v693, 0
      %vm1110 = vcmp.ne.s32.totalorder %v722, 0
      %vm1111 = vcmp.ne.s32.totalorder %v751, 0
      %vm1112 = vcmp.ne.s32.totalorder %v780, 0
      %vm1113 = vcmp.ne.s32.totalorder %v809, 0
      %vm1114 = vcmp.ne.s32.totalorder %v838, 0
      %vm1115 = vcmp.ne.s32.totalorder %v867, 0
      %vm1116 = vcmp.ne.s32.totalorder %v896, 0
      %vm1117 = vcmp.ne.s32.totalorder %v925, 0
      %vm1118 = vcmp.ne.s32.totalorder %v954, 0
      %vm1119 = vcmp.ne.s32.totalorder %v983, 0
      %vm1120 = vcmp.ne.s32.totalorder %v1012, 0
      %vm1121 = vcmp.ne.s32.totalorder %v1041, 0
      %vm1122 = vcmp.ne.s32.totalorder %v1070, 0
      %vm1123 = vcmp.ne.s32.totalorder %v1099, 0
      %vm1124 = vcmp.lt.s32.totalorder %v432, 0
      %vm1125 = vcmp.lt.s32.totalorder %v461, 0
      %vm1126 = vcmp.lt.s32.totalorder %v490, 0
      %vm1127 = vcmp.lt.s32.totalorder %v519, 0
      %vm1128 = vcmp.lt.s32.totalorder %v548, 0
      %vm1129 = vcmp.lt.s32.totalorder %v577, 0
      %vm1130 = vcmp.lt.s32.totalorder %v606, 0
      %vm1131 = vcmp.lt.s32.totalorder %v635, 0
      %vm1132 = vcmp.lt.s32.totalorder %v664, 0
      %vm1133 = vcmp.lt.s32.totalorder %v693, 0
      %vm1134 = vcmp.lt.s32.totalorder %v722, 0
      %vm1135 = vcmp.lt.s32.totalorder %v751, 0
      %vm1136 = vcmp.lt.s32.totalorder %v780, 0
      %vm1137 = vcmp.lt.s32.totalorder %v809, 0
      %vm1138 = vcmp.lt.s32.totalorder %v838, 0
      %vm1139 = vcmp.lt.s32.totalorder %v867, 0
      %vm1140 = vcmp.lt.s32.totalorder %v896, 0
      %vm1141 = vcmp.lt.s32.totalorder %v925, 0
      %vm1142 = vcmp.lt.s32.totalorder %v954, 0
      %vm1143 = vcmp.lt.s32.totalorder %v983, 0
      %vm1144 = vcmp.lt.s32.totalorder %v1012, 0
      %vm1145 = vcmp.lt.s32.totalorder %v1041, 0
      %vm1146 = vcmp.lt.s32.totalorder %v1070, 0
      %vm1147 = vcmp.lt.s32.totalorder %v1099, 0
      %vm1148 = vmand %vm1124, %vm1100
      %vm1149 = vmand %vm1125, %vm1101
      %vm1150 = vmand %vm1126, %vm1102
      %vm1151 = vmand %vm1127, %vm1103
      %vm1152 = vmand %vm1128, %vm1104
      %vm1153 = vmand %vm1129, %vm1105
      %vm1154 = vmand %vm1130, %vm1106
      %vm1155 = vmand %vm1131, %vm1107
      %vm1156 = vmand %vm1132, %vm1108
      %vm1157 = vmand %vm1133, %vm1109
      %vm1158 = vmand %vm1134, %vm1110
      %vm1159 = vmand %vm1135, %vm1111
      %vm1160 = vmand %vm1136, %vm1112
      %vm1161 = vmand %vm1137, %vm1113
      %vm1162 = vmand %vm1138, %vm1114
      %vm1163 = vmand %vm1139, %vm1115
      %vm1164 = vmand %vm1140, %vm1116
      %vm1165 = vmand %vm1141, %vm1117
      %vm1166 = vmand %vm1142, %vm1118
      %vm1167 = vmand %vm1143, %vm1119
      %vm1168 = vmand %vm1144, %vm1120
      %vm1169 = vmand %vm1145, %vm1121
      %vm1170 = vmand %vm1146, %vm1122
      %vm1171 = vmand %vm1147, %vm1123
      %v1172 = vadd.s32 %v432, 24
      %v1173 = vadd.s32 %v461, 24
      %v1174 = vadd.s32 %v490, 24
      %v1175 = vadd.s32 %v519, 24
      %v1176 = vadd.s32 %v548, 24
      %v1177 = vadd.s32 %v577, 24
      %v1178 = vadd.s32 %v606, 24
      %v1179 = vadd.s32 %v635, 24
      %v1180 = vadd.s32 %v664, 24
      %v1181 = vadd.s32 %v693, 24
      %v1182 = vadd.s32 %v722, 24
      %v1183 = vadd.s32 %v751, 24
      %v1184 = vadd.s32 %v780, 24
      %v1185 = vadd.s32 %v809, 24
      %v1186 = vadd.s32 %v838, 24
      %v1187 = vadd.s32 %v867, 24
      %v1188 = vadd.s32 %v896, 24
      %v1189 = vadd.s32 %v925, 24
      %v1190 = vadd.s32 %v954, 24
      %v1191 = vadd.s32 %v983, 24
      %v1192 = vadd.s32 %v1012, 24
      %v1193 = vadd.s32 %v1041, 24
      %v1194 = vadd.s32 %v1070, 24
      %v1195 = vadd.s32 %v1099, 24
      %v1196 = vsel %vm1148, %v1172, %v432
      %v1197 = vsel %vm1149, %v1173, %v461
      %v1198 = vsel %vm1150, %v1174, %v490
      %v1199 = vsel %vm1151, %v1175, %v519
      %v1200 = vsel %vm1152, %v1176, %v548
      %v1201 = vsel %vm1153, %v1177, %v577
      %v1202 = vsel %vm1154, %v1178, %v606
      %v1203 = vsel %vm1155, %v1179, %v635
      %v1204 = vsel %vm1156, %v1180, %v664
      %v1205 = vsel %vm1157, %v1181, %v693
      %v1206 = vsel %vm1158, %v1182, %v722
      %v1207 = vsel %vm1159, %v1183, %v751
      %v1208 = vsel %vm1160, %v1184, %v780
      %v1209 = vsel %vm1161, %v1185, %v809
      %v1210 = vsel %vm1162, %v1186, %v838
      %v1211 = vsel %vm1163, %v1187, %v867
      %v1212 = vsel %vm1164, %v1188, %v896
      %v1213 = vsel %vm1165, %v1189, %v925
      %v1214 = vsel %vm1166, %v1190, %v954
      %v1215 = vsel %vm1167, %v1191, %v983
      %v1216 = vsel %vm1168, %v1192, %v1012
      %v1217 = vsel %vm1169, %v1193, %v1041
      %v1218 = vsel %vm1170, %v1194, %v1070
      %v1219 = vsel %vm1171, %v1195, %v1099
      %vm1220 = vcmp.lt.s32.totalorder %v1196, 16
      %vm1221 = vcmp.lt.s32.totalorder %v1197, 16
      %vm1222 = vcmp.lt.s32.totalorder %v1198, 16
      %vm1223 = vcmp.lt.s32.totalorder %v1199, 16
      %vm1224 = vcmp.lt.s32.totalorder %v1200, 16
      %vm1225 = vcmp.lt.s32.totalorder %v1201, 16
      %vm1226 = vcmp.lt.s32.totalorder %v1202, 16
      %vm1227 = vcmp.lt.s32.totalorder %v1203, 16
      %vm1228 = vcmp.lt.s32.totalorder %v1204, 16
      %vm1229 = vcmp.lt.s32.totalorder %v1205, 16
      %vm1230 = vcmp.lt.s32.totalorder %v1206, 16
      %vm1231 = vcmp.lt.s32.totalorder %v1207, 16
      %vm1232 = vcmp.lt.s32.totalorder %v1208, 16
      %vm1233 = vcmp.lt.s32.totalorder %v1209, 16
      %vm1234 = vcmp.lt.s32.totalorder %v1210, 16
      %vm1235 = vcmp.lt.s32.totalorder %v1211, 16
      %vm1236 = vcmp.lt.s32.totalorder %v1212, 16
      %vm1237 = vcmp.lt.s32.totalorder %v1213, 16
      %vm1238 = vcmp.lt.s32.totalorder %v1214, 16
      %vm1239 = vcmp.lt.s32.totalorder %v1215, 16
      %vm1240 = vcmp.lt.s32.totalorder %v1216, 16
      %vm1241 = vcmp.lt.s32.totalorder %v1217, 16
      %vm1242 = vcmp.lt.s32.totalorder %v1218, 16
      %vm1243 = vcmp.lt.s32.totalorder %v1219, 16
      %v1244 = vsel %vm1220, 1, 0
      %v1245 = vsel %vm1221, 1, 0
      %v1246 = vsel %vm1222, 1, 0
      %v1247 = vsel %vm1223, 1, 0
      %v1248 = vsel %vm1224, 1, 0
      %v1249 = vsel %vm1225, 1, 0
      %v1250 = vsel %vm1226, 1, 0
      %v1251 = vsel %vm1227, 1, 0
      %v1252 = vsel %vm1228, 1, 0
      %v1253 = vsel %vm1229, 1, 0
      %v1254 = vsel %vm1230, 1, 0
      %v1255 = vsel %vm1231, 1, 0
      %v1256 = vsel %vm1232, 1, 0
      %v1257 = vsel %vm1233, 1, 0
      %v1258 = vsel %vm1234, 1, 0
      %v1259 = vsel %vm1235, 1, 0
      %v1260 = vsel %vm1236, 1, 0
      %v1261 = vsel %vm1237, 1, 0
      %v1262 = vsel %vm1238, 1, 0
      %v1263 = vsel %vm1239, 1, 0
      %v1264 = vsel %vm1240, 1, 0
      %v1265 = vsel %vm1241, 1, 0
      %v1266 = vsel %vm1242, 1, 0
      %v1267 = vsel %vm1243, 1, 0
      %v1268 = vcvt.s32.f32 %v1244
      %v1269 = vcvt.s32.f32 %v1245
      %v1270 = vcvt.s32.f32 %v1246
      %v1271 = vcvt.s32.f32 %v1247
      %v1272 = vcvt.s32.f32 %v1248
      %v1273 = vcvt.s32.f32 %v1249
      %v1274 = vcvt.s32.f32 %v1250
      %v1275 = vcvt.s32.f32 %v1251
      %v1276 = vcvt.s32.f32 %v1252
      %v1277 = vcvt.s32.f32 %v1253
      %v1278 = vcvt.s32.f32 %v1254
      %v1279 = vcvt.s32.f32 %v1255
      %v1280 = vcvt.s32.f32 %v1256
      %v1281 = vcvt.s32.f32 %v1257
      %v1282 = vcvt.s32.f32 %v1258
      %v1283 = vcvt.s32.f32 %v1259
      %v1284 = vcvt.s32.f32 %v1260
      %v1285 = vcvt.s32.f32 %v1261
      %v1286 = vcvt.s32.f32 %v1262
      %v1287 = vcvt.s32.f32 %v1263
      %v1288 = vcvt.s32.f32 %v1264
      %v1289 = vcvt.s32.f32 %v1265
      %v1290 = vcvt.s32.f32 %v1266
      %v1291 = vcvt.s32.f32 %v1267
      loop: start=0, step=1, limit=2
      $region49: #{basic_block_forward_nhwc.1} parent=47 // loop_pre_header
        _
      $region50: #{basic_block_forward_nhwc.1} parent=47 // loop_header
        %s1293 = sphi 0, %s1297
        %p1294 = scmp.ge.s32.totalorder %s1293, 2
      $region51: #{basic_block_forward_nhwc.1} parent=47 // loop_header_branch
        %1296 = sbr.rel (%p1294) target = $region55
      $region52: #{basic_block_forward_nhwc.1} parent=47 // loop_body
        %s1298 = smul.u32 %s1293, 8
        %s1299 = smul.u32 %s1298, 24
        %s1300 = scalar_lea.vmem [#allocation2], %s1299
        %v1301 = vld [vmem:[%s1300] sm:$0xff]
        %v1302 = vld [vmem:[%s1300 + $0x8] sm:$0xff]
        %v1303 = vld [vmem:[%s1300 + $0x10] sm:$0xff]
        %v1304 = vld [vmem:[%s1300 + $0x18] sm:$0xff]
        %v1305 = vld [vmem:[%s1300 + $0x20] sm:$0xff]
        %v1306 = vld [vmem:[%s1300 + $0x28] sm:$0xff]
        %v1307 = vld [vmem:[%s1300 + $0x30] sm:$0xff]
        %v1308 = vld [vmem:[%s1300 + $0x38] sm:$0xff]
        %v1309 = vld [vmem:[%s1300 + $0x40] sm:$0xff]
        %v1310 = vld [vmem:[%s1300 + $0x48] sm:$0xff]
        %v1311 = vld [vmem:[%s1300 + $0x50] sm:$0xff]
        %v1312 = vld [vmem:[%s1300 + $0x58] sm:$0xff]
        %v1313 = vld [vmem:[%s1300 + $0x60] sm:$0xff]
        %v1314 = vld [vmem:[%s1300 + $0x68] sm:$0xff]
        %v1315 = vld [vmem:[%s1300 + $0x70] sm:$0xff]
        %v1316 = vld [vmem:[%s1300 + $0x78] sm:$0xff]
        %v1317 = vld [vmem:[%s1300 + $0x80] sm:$0xff]
        %v1318 = vld [vmem:[%s1300 + $0x88] sm:$0xff]
        %v1319 = vld [vmem:[%s1300 + $0x90] sm:$0xff]
        %v1320 = vld [vmem:[%s1300 + $0x98] sm:$0xff]
        %v1321 = vld [vmem:[%s1300 + $0xa0] sm:$0xff]
        %v1322 = vld [vmem:[%s1300 + $0xa8] sm:$0xff]
        %v1323 = vld [vmem:[%s1300 + $0xb0] sm:$0xff]
        %v1324 = vld [vmem:[%s1300 + $0xb8] sm:$0xff]
        %vm1349 = vcmask 1040384
        %v1350 = vrot.slane %v1301, 7
        %v1351 = vrot.slane %v1302, 7
        %v1352 = vsel %vm1349, %v1350, %v1351
        %v1353 = vrot.slane %v1303, 7
        %v1354 = vsel %vm1349, %v1351, %v1353
        %v1355 = vrot.slane %v1304, 7
        %v1356 = vsel %vm1349, %v1353, %v1355
        %v1357 = vrot.slane %v1305, 7
        %v1358 = vsel %vm1349, %v1355, %v1357
        %v1359 = vrot.slane %v1306, 7
        %v1360 = vsel %vm1349, %v1357, %v1359
        %v1361 = vrot.slane %v1307, 7
        %v1362 = vsel %vm1349, %v1359, %v1361
        %v1363 = vrot.slane %v1308, 7
        %v1364 = vsel %vm1349, %v1361, %v1363
        %v1365 = vrot.slane %v1309, 7
        %v1366 = vsel %vm1349, %v1363, %v1365
        %v1367 = vrot.slane %v1310, 7
        %v1368 = vsel %vm1349, %v1365, %v1367
        %v1369 = vrot.slane %v1311, 7
        %v1370 = vsel %vm1349, %v1367, %v1369
        %v1371 = vrot.slane %v1312, 7
        %v1372 = vsel %vm1349, %v1369, %v1371
        %v1373 = vrot.slane %v1313, 7
        %v1374 = vsel %vm1349, %v1371, %v1373
        %v1375 = vrot.slane %v1314, 7
        %v1376 = vsel %vm1349, %v1373, %v1375
        %v1377 = vrot.slane %v1315, 7
        %v1378 = vsel %vm1349, %v1375, %v1377
        %v1379 = vrot.slane %v1316, 7
        %v1380 = vsel %vm1349, %v1377, %v1379
        %v1381 = vrot.slane %v1317, 7
        %v1382 = vsel %vm1349, %v1379, %v1381
        %v1383 = vrot.slane %v1318, 7
        %v1384 = vsel %vm1349, %v1381, %v1383
        %v1385 = vrot.slane %v1319, 7
        %v1386 = vsel %vm1349, %v1383, %v1385
        %v1387 = vrot.slane %v1320, 7
        %v1388 = vsel %vm1349, %v1385, %v1387
        %v1389 = vrot.slane %v1321, 7
        %v1390 = vsel %vm1349, %v1387, %v1389
        %v1391 = vrot.slane %v1322, 7
        %v1392 = vsel %vm1349, %v1389, %v1391
        %v1393 = vrot.slane %v1323, 7
        %v1394 = vsel %vm1349, %v1391, %v1393
        %v1395 = vrot.slane %v1324, 7
        %v1396 = vsel %vm1349, %v1393, %v1395
        %v1398 = vsel %vm1349, 0.0, %v1350
        %vm1399 = vcmask 1046528
        %v1400 = vrot.slane %v1301, 1
        %v1401 = vrot.slane %v1302, 1
        %v1402 = vsel %vm1399, %v1400, %v1401
        %v1403 = vrot.slane %v1303, 1
        %v1404 = vsel %vm1399, %v1401, %v1403
        %v1405 = vrot.slane %v1304, 1
        %v1406 = vsel %vm1399, %v1403, %v1405
        %v1407 = vrot.slane %v1305, 1
        %v1408 = vsel %vm1399, %v1405, %v1407
        %v1409 = vrot.slane %v1306, 1
        %v1410 = vsel %vm1399, %v1407, %v1409
        %v1411 = vrot.slane %v1307, 1
        %v1412 = vsel %vm1399, %v1409, %v1411
        %v1413 = vrot.slane %v1308, 1
        %v1414 = vsel %vm1399, %v1411, %v1413
        %v1415 = vrot.slane %v1309, 1
        %v1416 = vsel %vm1399, %v1413, %v1415
        %v1417 = vrot.slane %v1310, 1
        %v1418 = vsel %vm1399, %v1415, %v1417
        %v1419 = vrot.slane %v1311, 1
        %v1420 = vsel %vm1399, %v1417, %v1419
        %v1421 = vrot.slane %v1312, 1
        %v1422 = vsel %vm1399, %v1419, %v1421
        %v1423 = vrot.slane %v1313, 1
        %v1424 = vsel %vm1399, %v1421, %v1423
        %v1425 = vrot.slane %v1314, 1
        %v1426 = vsel %vm1399, %v1423, %v1425
        %v1427 = vrot.slane %v1315, 1
        %v1428 = vsel %vm1399, %v1425, %v1427
        %v1429 = vrot.slane %v1316, 1
        %v1430 = vsel %vm1399, %v1427, %v1429
        %v1431 = vrot.slane %v1317, 1
        %v1432 = vsel %vm1399, %v1429, %v1431
        %v1433 = vrot.slane %v1318, 1
        %v1434 = vsel %vm1399, %v1431, %v1433
        %v1435 = vrot.slane %v1319, 1
        %v1436 = vsel %vm1399, %v1433, %v1435
        %v1437 = vrot.slane %v1320, 1
        %v1438 = vsel %vm1399, %v1435, %v1437
        %v1439 = vrot.slane %v1321, 1
        %v1440 = vsel %vm1399, %v1437, %v1439
        %v1441 = vrot.slane %v1322, 1
        %v1442 = vsel %vm1399, %v1439, %v1441
        %v1443 = vrot.slane %v1323, 1
        %v1444 = vsel %vm1399, %v1441, %v1443
        %v1445 = vrot.slane %v1324, 1
        %v1446 = vsel %vm1399, %v1443, %v1445
        %v1448 = vsel %vm1399, %v1445, 0.0
        %v1449 = vld [vmem:[%s1] sm:$0xff]
        %s1450 = scalar_lea.vmem %s1, 8
        %v1451 = vld [vmem:[%s1450] sm:$0xff]
        %v1452 = vsel %vm279, %v1301, 0
        %v1454 = vsel %vm279, %v1302, 0
        %v1456 = vsel %vm279, %v1303, 0
        %v1458 = vsel %vm279, %v1304, 0
        %v1460 = vsel %vm279, %v1305, 0
        %v1462 = vsel %vm279, %v1306, 0
        %v1464 = vsel %vm279, %v1307, 0
        %v1466 = vsel %vm279, %v1308, 0
        %v1468 = vsel %vm279, %v1309, 0
        %v1470 = vsel %vm279, %v1310, 0
        %v1472 = vsel %vm279, %v1311, 0
        %v1474 = vsel %vm279, %v1312, 0
        %v1476 = vsel %vm279, %v1313, 0
        %v1478 = vsel %vm279, %v1314, 0
        %v1480 = vsel %vm279, %v1315, 0
        %v1482 = vsel %vm279, %v1316, 0
        %v1484 = vsel %vm279, %v1317, 0
        %v1486 = vsel %vm279, %v1318, 0
        %v1488 = vsel %vm279, %v1319, 0
        %v1490 = vsel %vm279, %v1320, 0
        %v1492 = vsel %vm279, %v1321, 0
        %v1494 = vsel %vm279, %v1322, 0
        %v1496 = vsel %vm279, %v1323, 0
        %v1498 = vsel %vm279, %v1324, 0
        %1500 = vmatpush.msra.mxu0 0.0
        %1501 = vmatpush.msra.mxu0 0.0
        %1502 = vmatpush.msra.mxu0 0.0
        %1503 = vmatpush.msra.mxu0 0.0
        %1504 = vmatpush.msra.mxu0 0.0
        %1505 = vmatpush.msra.mxu0 0.0
        %1506 = vmatpush.msra.mxu0 0.0
        %1507 = vmatpush.msra.mxu0 0.0
        %1508 = vmatpush.msra.mxu0 0.0
        %1509 = vmatpush.msra.mxu0 0.0
        %1510 = vmatpush.msra.mxu0 0.0
        %1511 = vmatpush.msra.mxu0 0.0
        %1512 = vmatpush.msra.mxu0 0.0
        %1513 = vmatpush.msra.mxu0 0.0
        %1514 = vmatpush.msra.mxu0 0.0
        %1515 = vmatpush.msra.mxu0 %v1451
        %1516 = vmatmul.f32.gmra.mxu0 %v1452
        %v1517 = vpop.f32.mrf.mxu0
        %v1518 = vadd.f32 0.0, %v1517
        %1519 = vmatmul.f32.gmra.mxu0 %v1454
        %v1520 = vpop.f32.mrf.mxu0
        %v1521 = vadd.f32 0.0, %v1520
        %1522 = vmatmul.f32.gmra.mxu0 %v1456
        %v1523 = vpop.f32.mrf.mxu0
        %v1524 = vadd.f32 0.0, %v1523
        %1525 = vmatmul.f32.gmra.mxu0 %v1458
        %v1526 = vpop.f32.mrf.mxu0
        %v1527 = vadd.f32 0.0, %v1526
        %1528 = vmatmul.f32.gmra.mxu0 %v1460
        %v1529 = vpop.f32.mrf.mxu0
        %v1530 = vadd.f32 0.0, %v1529
        %1531 = vmatmul.f32.gmra.mxu0 %v1462
        %v1532 = vpop.f32.mrf.mxu0
        %v1533 = vadd.f32 0.0, %v1532
        %1534 = vmatmul.f32.gmra.mxu0 %v1464
        %v1535 = vpop.f32.mrf.mxu0
        %v1536 = vadd.f32 0.0, %v1535
        %1537 = vmatmul.f32.gmra.mxu0 %v1466
        %v1538 = vpop.f32.mrf.mxu0
        %v1539 = vadd.f32 0.0, %v1538
        %1540 = vmatmul.f32.gmra.mxu0 %v1468
        %v1541 = vpop.f32.mrf.mxu0
        %v1542 = vadd.f32 0.0, %v1541
        %1543 = vmatmul.f32.gmra.mxu0 %v1470
        %v1544 = vpop.f32.mrf.mxu0
        %v1545 = vadd.f32 0.0, %v1544
        %1546 = vmatmul.f32.gmra.mxu0 %v1472
        %v1547 = vpop.f32.mrf.mxu0
        %v1548 = vadd.f32 0.0, %v1547
        %1549 = vmatmul.f32.gmra.mxu0 %v1474
        %v1550 = vpop.f32.mrf.mxu0
        %v1551 = vadd.f32 0.0, %v1550
        %1552 = vmatmul.f32.gmra.mxu0 %v1476
        %v1553 = vpop.f32.mrf.mxu0
        %v1554 = vadd.f32 0.0, %v1553
        %1555 = vmatmul.f32.gmra.mxu0 %v1478
        %v1556 = vpop.f32.mrf.mxu0
        %v1557 = vadd.f32 0.0, %v1556
        %1558 = vmatmul.f32.gmra.mxu0 %v1480
        %v1559 = vpop.f32.mrf.mxu0
        %v1560 = vadd.f32 0.0, %v1559
        %1561 = vmatmul.f32.gmra.mxu0 %v1482
        %v1562 = vpop.f32.mrf.mxu0
        %v1563 = vadd.f32 0.0, %v1562
        %1564 = vmatmul.f32.gmra.mxu0 %v1484
        %v1565 = vpop.f32.mrf.mxu0
        %v1566 = vadd.f32 0.0, %v1565
        %1567 = vmatmul.f32.gmra.mxu0 %v1486
        %v1568 = vpop.f32.mrf.mxu0
        %v1569 = vadd.f32 0.0, %v1568
        %1570 = vmatmul.f32.gmra.mxu0 %v1488
        %v1571 = vpop.f32.mrf.mxu0
        %v1572 = vadd.f32 0.0, %v1571
        %1573 = vmatmul.f32.gmra.mxu0 %v1490
        %v1574 = vpop.f32.mrf.mxu0
        %v1575 = vadd.f32 0.0, %v1574
        %1576 = vmatmul.f32.gmra.mxu0 %v1492
        %v1577 = vpop.f32.mrf.mxu0
        %v1578 = vadd.f32 0.0, %v1577
        %1579 = vmatmul.f32.gmra.mxu0 %v1494
        %v1580 = vpop.f32.mrf.mxu0
        %v1581 = vadd.f32 0.0, %v1580
        %1582 = vmatmul.f32.gmra.mxu0 %v1496
        %v1583 = vpop.f32.mrf.mxu0
        %v1584 = vadd.f32 0.0, %v1583
        %1585 = vmatmul.f32.gmra.mxu0 %v1498
        %v1586 = vpop.f32.mrf.mxu0
        %v1587 = vadd.f32 0.0, %v1586
        %1588 = vdwg.mxu0
        %v1590 = vsel %vm279, %v1398, 0
        %v1592 = vsel %vm279, %v1352, 0
        %v1594 = vsel %vm279, %v1354, 0
        %v1596 = vsel %vm279, %v1356, 0
        %v1598 = vsel %vm279, %v1358, 0
        %v1600 = vsel %vm279, %v1360, 0
        %v1602 = vsel %vm279, %v1362, 0
        %v1604 = vsel %vm279, %v1364, 0
        %v1606 = vsel %vm279, %v1366, 0
        %v1608 = vsel %vm279, %v1368, 0
        %v1610 = vsel %vm279, %v1370, 0
        %v1612 = vsel %vm279, %v1372, 0
        %v1614 = vsel %vm279, %v1374, 0
        %v1616 = vsel %vm279, %v1376, 0
        %v1618 = vsel %vm279, %v1378, 0
        %v1620 = vsel %vm279, %v1380, 0
        %v1622 = vsel %vm279, %v1382, 0
        %v1624 = vsel %vm279, %v1384, 0
        %v1626 = vsel %vm279, %v1386, 0
        %v1628 = vsel %vm279, %v1388, 0
        %v1630 = vsel %vm279, %v1390, 0
        %v1632 = vsel %vm279, %v1392, 0
        %v1634 = vsel %vm279, %v1394, 0
        %v1636 = vsel %vm279, %v1396, 0
        %1638 = vmatpush.msra.mxu0 0.0
        %1639 = vmatpush.msra.mxu0 0.0
        %1640 = vmatpush.msra.mxu0 0.0
        %1641 = vmatpush.msra.mxu0 0.0
        %1642 = vmatpush.msra.mxu0 0.0
        %1643 = vmatpush.msra.mxu0 0.0
        %1644 = vmatpush.msra.mxu0 0.0
        %1645 = vmatpush.msra.mxu0 0.0
        %1646 = vmatpush.msra.mxu0 0.0
        %1647 = vmatpush.msra.mxu0 0.0
        %1648 = vmatpush.msra.mxu0 0.0
        %1649 = vmatpush.msra.mxu0 0.0
        %1650 = vmatpush.msra.mxu0 0.0
        %1651 = vmatpush.msra.mxu0 0.0
        %1652 = vmatpush.msra.mxu0 0.0
        %1653 = vmatpush.msra.mxu0 %v1449
        %1654 = vmatmul.f32.gmra.mxu0 %v1590
        %v1655 = vpop.f32.mrf.mxu0
        %v1656 = vadd.f32 %v1518, %v1655
        %1657 = vmatmul.f32.gmra.mxu0 %v1592
        %v1658 = vpop.f32.mrf.mxu0
        %v1659 = vadd.f32 %v1521, %v1658
        %1660 = vmatmul.f32.gmra.mxu0 %v1594
        %v1661 = vpop.f32.mrf.mxu0
        %v1662 = vadd.f32 %v1524, %v1661
        %1663 = vmatmul.f32.gmra.mxu0 %v1596
        %v1664 = vpop.f32.mrf.mxu0
        %v1665 = vadd.f32 %v1527, %v1664
        %1666 = vmatmul.f32.gmra.mxu0 %v1598
        %v1667 = vpop.f32.mrf.mxu0
        %v1668 = vadd.f32 %v1530, %v1667
        %1669 = vmatmul.f32.gmra.mxu0 %v1600
        %v1670 = vpop.f32.mrf.mxu0
        %v1671 = vadd.f32 %v1533, %v1670
        %1672 = vmatmul.f32.gmra.mxu0 %v1602
        %v1673 = vpop.f32.mrf.mxu0
        %v1674 = vadd.f32 %v1536, %v1673
        %1675 = vmatmul.f32.gmra.mxu0 %v1604
        %v1676 = vpop.f32.mrf.mxu0
        %v1677 = vadd.f32 %v1539, %v1676
        %1678 = vmatmul.f32.gmra.mxu0 %v1606
        %v1679 = vpop.f32.mrf.mxu0
        %v1680 = vadd.f32 %v1542, %v1679
        %1681 = vmatmul.f32.gmra.mxu0 %v1608
        %v1682 = vpop.f32.mrf.mxu0
        %v1683 = vadd.f32 %v1545, %v1682
        %1684 = vmatmul.f32.gmra.mxu0 %v1610
        %v1685 = vpop.f32.mrf.mxu0
        %v1686 = vadd.f32 %v1548, %v1685
        %1687 = vmatmul.f32.gmra.mxu0 %v1612
        %v1688 = vpop.f32.mrf.mxu0
        %v1689 = vadd.f32 %v1551, %v1688
        %1690 = vmatmul.f32.gmra.mxu0 %v1614
        %v1691 = vpop.f32.mrf.mxu0
        %v1692 = vadd.f32 %v1554, %v1691
        %1693 = vmatmul.f32.gmra.mxu0 %v1616
        %v1694 = vpop.f32.mrf.mxu0
        %v1695 = vadd.f32 %v1557, %v1694
        %1696 = vmatmul.f32.gmra.mxu0 %v1618
        %v1697 = vpop.f32.mrf.mxu0
        %v1698 = vadd.f32 %v1560, %v1697
        %1699 = vmatmul.f32.gmra.mxu0 %v1620
        %v1700 = vpop.f32.mrf.mxu0
        %v1701 = vadd.f32 %v1563, %v1700
        %1702 = vmatmul.f32.gmra.mxu0 %v1622
        %v1703 = vpop.f32.mrf.mxu0
        %v1704 = vadd.f32 %v1566, %v1703
        %1705 = vmatmul.f32.gmra.mxu0 %v1624
        %v1706 = vpop.f32.mrf.mxu0
        %v1707 = vadd.f32 %v1569, %v1706
        %1708 = vmatmul.f32.gmra.mxu0 %v1626
        %v1709 = vpop.f32.mrf.mxu0
        %v1710 = vadd.f32 %v1572, %v1709
        %1711 = vmatmul.f32.gmra.mxu0 %v1628
        %v1712 = vpop.f32.mrf.mxu0
        %v1713 = vadd.f32 %v1575, %v1712
        %1714 = vmatmul.f32.gmra.mxu0 %v1630
        %v1715 = vpop.f32.mrf.mxu0
        %v1716 = vadd.f32 %v1578, %v1715
        %1717 = vmatmul.f32.gmra.mxu0 %v1632
        %v1718 = vpop.f32.mrf.mxu0
        %v1719 = vadd.f32 %v1581, %v1718
        %1720 = vmatmul.f32.gmra.mxu0 %v1634
        %v1721 = vpop.f32.mrf.mxu0
        %v1722 = vadd.f32 %v1584, %v1721
        %1723 = vmatmul.f32.gmra.mxu0 %v1636
        %v1724 = vpop.f32.mrf.mxu0
        %v1725 = vadd.f32 %v1587, %v1724
        %1726 = vdwg.mxu0
        %s1727 = scalar_lea.vmem %s1, 16
        %v1728 = vld [vmem:[%s1727] sm:$0xff]
        %v1729 = vsel %vm279, %v1402, 0
        %v1731 = vsel %vm279, %v1404, 0
        %v1733 = vsel %vm279, %v1406, 0
        %v1735 = vsel %vm279, %v1408, 0
        %v1737 = vsel %vm279, %v1410, 0
        %v1739 = vsel %vm279, %v1412, 0
        %v1741 = vsel %vm279, %v1414, 0
        %v1743 = vsel %vm279, %v1416, 0
        %v1745 = vsel %vm279, %v1418, 0
        %v1747 = vsel %vm279, %v1420, 0
        %v1749 = vsel %vm279, %v1422, 0
        %v1751 = vsel %vm279, %v1424, 0
        %v1753 = vsel %vm279, %v1426, 0
        %v1755 = vsel %vm279, %v1428, 0
        %v1757 = vsel %vm279, %v1430, 0
        %v1759 = vsel %vm279, %v1432, 0
        %v1761 = vsel %vm279, %v1434, 0
        %v1763 = vsel %vm279, %v1436, 0
        %v1765 = vsel %vm279, %v1438, 0
        %v1767 = vsel %vm279, %v1440, 0
        %v1769 = vsel %vm279, %v1442, 0
        %v1771 = vsel %vm279, %v1444, 0
        %v1773 = vsel %vm279, %v1446, 0
        %v1776 = vsel %vm279, %v1448, 0
        %1778 = vmatpush.msra.mxu0 0.0
        %1779 = vmatpush.msra.mxu0 0.0
        %1780 = vmatpush.msra.mxu0 0.0
        %1781 = vmatpush.msra.mxu0 0.0
        %1782 = vmatpush.msra.mxu0 0.0
        %1783 = vmatpush.msra.mxu0 0.0
        %1784 = vmatpush.msra.mxu0 0.0
        %1785 = vmatpush.msra.mxu0 0.0
        %1786 = vmatpush.msra.mxu0 0.0
        %1787 = vmatpush.msra.mxu0 0.0
        %1788 = vmatpush.msra.mxu0 0.0
        %1789 = vmatpush.msra.mxu0 0.0
        %1790 = vmatpush.msra.mxu0 0.0
        %1791 = vmatpush.msra.mxu0 0.0
        %1792 = vmatpush.msra.mxu0 0.0
        %1793 = vmatpush.msra.mxu0 %v1728
        %1794 = vmatmul.f32.gmra.mxu0 %v1729
        %v1795 = vpop.f32.mrf.mxu0
        %v1796 = vadd.f32 0.0, %v1795
        %1797 = vmatmul.f32.gmra.mxu0 %v1731
        %v1798 = vpop.f32.mrf.mxu0
        %v1799 = vadd.f32 0.0, %v1798
        %1800 = vmatmul.f32.gmra.mxu0 %v1733
        %v1801 = vpop.f32.mrf.mxu0
        %v1802 = vadd.f32 0.0, %v1801
        %1803 = vmatmul.f32.gmra.mxu0 %v1735
        %v1804 = vpop.f32.mrf.mxu0
        %v1805 = vadd.f32 0.0, %v1804
        %1806 = vmatmul.f32.gmra.mxu0 %v1737
        %v1807 = vpop.f32.mrf.mxu0
        %v1808 = vadd.f32 0.0, %v1807
        %1809 = vmatmul.f32.gmra.mxu0 %v1739
        %v1810 = vpop.f32.mrf.mxu0
        %v1811 = vadd.f32 0.0, %v1810
        %1812 = vmatmul.f32.gmra.mxu0 %v1741
        %v1813 = vpop.f32.mrf.mxu0
        %v1814 = vadd.f32 0.0, %v1813
        %1815 = vmatmul.f32.gmra.mxu0 %v1743
        %v1816 = vpop.f32.mrf.mxu0
        %v1817 = vadd.f32 0.0, %v1816
        %1818 = vmatmul.f32.gmra.mxu0 %v1745
        %v1819 = vpop.f32.mrf.mxu0
        %v1820 = vadd.f32 0.0, %v1819
        %1821 = vmatmul.f32.gmra.mxu0 %v1747
        %v1822 = vpop.f32.mrf.mxu0
        %v1823 = vadd.f32 0.0, %v1822
        %1824 = vmatmul.f32.gmra.mxu0 %v1749
        %v1825 = vpop.f32.mrf.mxu0
        %v1826 = vadd.f32 0.0, %v1825
        %1827 = vmatmul.f32.gmra.mxu0 %v1751
        %v1828 = vpop.f32.mrf.mxu0
        %v1829 = vadd.f32 0.0, %v1828
        %1830 = vmatmul.f32.gmra.mxu0 %v1753
        %v1831 = vpop.f32.mrf.mxu0
        %v1832 = vadd.f32 0.0, %v1831
        %1833 = vmatmul.f32.gmra.mxu0 %v1755
        %v1834 = vpop.f32.mrf.mxu0
        %v1835 = vadd.f32 0.0, %v1834
        %1836 = vmatmul.f32.gmra.mxu0 %v1757
        %v1837 = vpop.f32.mrf.mxu0
        %v1838 = vadd.f32 0.0, %v1837
        %1839 = vmatmul.f32.gmra.mxu0 %v1759
        %v1840 = vpop.f32.mrf.mxu0
        %v1841 = vadd.f32 0.0, %v1840
        %1842 = vmatmul.f32.gmra.mxu0 %v1761
        %v1843 = vpop.f32.mrf.mxu0
        %v1844 = vadd.f32 0.0, %v1843
        %1845 = vmatmul.f32.gmra.mxu0 %v1763
        %v1846 = vpop.f32.mrf.mxu0
        %v1847 = vadd.f32 0.0, %v1846
        %1848 = vmatmul.f32.gmra.mxu0 %v1765
        %v1849 = vpop.f32.mrf.mxu0
        %v1850 = vadd.f32 0.0, %v1849
        %1851 = vmatmul.f32.gmra.mxu0 %v1767
        %v1852 = vpop.f32.mrf.mxu0
        %v1853 = vadd.f32 0.0, %v1852
        %1854 = vmatmul.f32.gmra.mxu0 %v1769
        %v1855 = vpop.f32.mrf.mxu0
        %v1856 = vadd.f32 0.0, %v1855
        %1857 = vmatmul.f32.gmra.mxu0 %v1771
        %v1858 = vpop.f32.mrf.mxu0
        %v1859 = vadd.f32 0.0, %v1858
        %1860 = vmatmul.f32.gmra.mxu0 %v1773
        %v1861 = vpop.f32.mrf.mxu0
        %v1862 = vadd.f32 0.0, %v1861
        %1863 = vmatmul.f32.gmra.mxu0 %v1776
        %v1864 = vpop.f32.mrf.mxu0
        %v1865 = vadd.f32 0.0, %v1864
        %1866 = vdwg.mxu0
        %v1867 = vadd.f32 %v1656, %v1796
        %v1868 = vadd.f32 %v1659, %v1799
        %v1869 = vadd.f32 %v1662, %v1802
        %v1870 = vadd.f32 %v1665, %v1805
        %v1871 = vadd.f32 %v1668, %v1808
        %v1872 = vadd.f32 %v1671, %v1811
        %v1873 = vadd.f32 %v1674, %v1814
        %v1874 = vadd.f32 %v1677, %v1817
        %v1875 = vadd.f32 %v1680, %v1820
        %v1876 = vadd.f32 %v1683, %v1823
        %v1877 = vadd.f32 %v1686, %v1826
        %v1878 = vadd.f32 %v1689, %v1829
        %v1879 = vadd.f32 %v1692, %v1832
        %v1880 = vadd.f32 %v1695, %v1835
        %v1881 = vadd.f32 %v1698, %v1838
        %v1882 = vadd.f32 %v1701, %v1841
        %v1883 = vadd.f32 %v1704, %v1844
        %v1884 = vadd.f32 %v1707, %v1847
        %v1885 = vadd.f32 %v1710, %v1850
        %v1886 = vadd.f32 %v1713, %v1853
        %v1887 = vadd.f32 %v1716, %v1856
        %v1888 = vadd.f32 %v1719, %v1859
        %v1889 = vadd.f32 %v1722, %v1862
        %v1890 = vadd.f32 %v1725, %v1865
        %s1891 = sadd.s32 %s1298, 1
        %s1892 = smul.u32 %s1891, 24
        %s1893 = scalar_lea.vmem [#allocation2], %s1892
        %v1894 = vld [vmem:[%s1893] sm:$0xff]
        %v1895 = vld [vmem:[%s1893 + $0x8] sm:$0xff]
        %v1896 = vld [vmem:[%s1893 + $0x10] sm:$0xff]
        %v1897 = vld [vmem:[%s1893 + $0x18] sm:$0xff]
        %v1898 = vld [vmem:[%s1893 + $0x20] sm:$0xff]
        %v1899 = vld [vmem:[%s1893 + $0x28] sm:$0xff]
        %v1900 = vld [vmem:[%s1893 + $0x30] sm:$0xff]
        %v1901 = vld [vmem:[%s1893 + $0x38] sm:$0xff]
        %v1902 = vld [vmem:[%s1893 + $0x40] sm:$0xff]
        %v1903 = vld [vmem:[%s1893 + $0x48] sm:$0xff]
        %v1904 = vld [vmem:[%s1893 + $0x50] sm:$0xff]
        %v1905 = vld [vmem:[%s1893 + $0x58] sm:$0xff]
        %v1906 = vld [vmem:[%s1893 + $0x60] sm:$0xff]
        %v1907 = vld [vmem:[%s1893 + $0x68] sm:$0xff]
        %v1908 = vld [vmem:[%s1893 + $0x70] sm:$0xff]
        %v1909 = vld [vmem:[%s1893 + $0x78] sm:$0xff]
        %v1910 = vld [vmem:[%s1893 + $0x80] sm:$0xff]
        %v1911 = vld [vmem:[%s1893 + $0x88] sm:$0xff]
        %v1912 = vld [vmem:[%s1893 + $0x90] sm:$0xff]
        %v1913 = vld [vmem:[%s1893 + $0x98] sm:$0xff]
        %v1914 = vld [vmem:[%s1893 + $0xa0] sm:$0xff]
        %v1915 = vld [vmem:[%s1893 + $0xa8] sm:$0xff]
        %v1916 = vld [vmem:[%s1893 + $0xb0] sm:$0xff]
        %v1917 = vld [vmem:[%s1893 + $0xb8] sm:$0xff]
        %v1942 = vrot.slane %v1894, 7
        %v1943 = vrot.slane %v1895, 7
        %v1944 = vsel %vm1349, %v1942, %v1943
        %v1945 = vrot.slane %v1896, 7
        %v1946 = vsel %vm1349, %v1943, %v1945
        %v1947 = vrot.slane %v1897, 7
        %v1948 = vsel %vm1349, %v1945, %v1947
        %v1949 = vrot.slane %v1898, 7
        %v1950 = vsel %vm1349, %v1947, %v1949
        %v1951 = vrot.slane %v1899, 7
        %v1952 = vsel %vm1349, %v1949, %v1951
        %v1953 = vrot.slane %v1900, 7
        %v1954 = vsel %vm1349, %v1951, %v1953
        %v1955 = vrot.slane %v1901, 7
        %v1956 = vsel %vm1349, %v1953, %v1955
        %v1957 = vrot.slane %v1902, 7
        %v1958 = vsel %vm1349, %v1955, %v1957
        %v1959 = vrot.slane %v1903, 7
        %v1960 = vsel %vm1349, %v1957, %v1959
        %v1961 = vrot.slane %v1904, 7
        %v1962 = vsel %vm1349, %v1959, %v1961
        %v1963 = vrot.slane %v1905, 7
        %v1964 = vsel %vm1349, %v1961, %v1963
        %v1965 = vrot.slane %v1906, 7
        %v1966 = vsel %vm1349, %v1963, %v1965
        %v1967 = vrot.slane %v1907, 7
        %v1968 = vsel %vm1349, %v1965, %v1967
        %v1969 = vrot.slane %v1908, 7
        %v1970 = vsel %vm1349, %v1967, %v1969
        %v1971 = vrot.slane %v1909, 7
        %v1972 = vsel %vm1349, %v1969, %v1971
        %v1973 = vrot.slane %v1910, 7
        %v1974 = vsel %vm1349, %v1971, %v1973
        %v1975 = vrot.slane %v1911, 7
        %v1976 = vsel %vm1349, %v1973, %v1975
        %v1977 = vrot.slane %v1912, 7
        %v1978 = vsel %vm1349, %v1975, %v1977
        %v1979 = vrot.slane %v1913, 7
        %v1980 = vsel %vm1349, %v1977, %v1979
        %v1981 = vrot.slane %v1914, 7
        %v1982 = vsel %vm1349, %v1979, %v1981
        %v1983 = vrot.slane %v1915, 7
        %v1984 = vsel %vm1349, %v1981, %v1983
        %v1985 = vrot.slane %v1916, 7
        %v1986 = vsel %vm1349, %v1983, %v1985
        %v1987 = vrot.slane %v1917, 7
        %v1988 = vsel %vm1349, %v1985, %v1987
        %v1990 = vsel %vm1349, 0.0, %v1942
        %v1991 = vrot.slane %v1894, 1
        %v1992 = vrot.slane %v1895, 1
        %v1993 = vsel %vm1399, %v1991, %v1992
        %v1994 = vrot.slane %v1896, 1
        %v1995 = vsel %vm1399, %v1992, %v1994
        %v1996 = vrot.slane %v1897, 1
        %v1997 = vsel %vm1399, %v1994, %v1996
        %v1998 = vrot.slane %v1898, 1
        %v1999 = vsel %vm1399, %v1996, %v1998
        %v2000 = vrot.slane %v1899, 1
        %v2001 = vsel %vm1399, %v1998, %v2000
        %v2002 = vrot.slane %v1900, 1
        %v2003 = vsel %vm1399, %v2000, %v2002
        %v2004 = vrot.slane %v1901, 1
        %v2005 = vsel %vm1399, %v2002, %v2004
        %v2006 = vrot.slane %v1902, 1
        %v2007 = vsel %vm1399, %v2004, %v2006
        %v2008 = vrot.slane %v1903, 1
        %v2009 = vsel %vm1399, %v2006, %v2008
        %v2010 = vrot.slane %v1904, 1
        %v2011 = vsel %vm1399, %v2008, %v2010
        %v2012 = vrot.slane %v1905, 1
        %v2013 = vsel %vm1399, %v2010, %v2012
        %v2014 = vrot.slane %v1906, 1
        %v2015 = vsel %vm1399, %v2012, %v2014
        %v2016 = vrot.slane %v1907, 1
        %v2017 = vsel %vm1399, %v2014, %v2016
        %v2018 = vrot.slane %v1908, 1
        %v2019 = vsel %vm1399, %v2016, %v2018
        %v2020 = vrot.slane %v1909, 1
        %v2021 = vsel %vm1399, %v2018, %v2020
        %v2022 = vrot.slane %v1910, 1
        %v2023 = vsel %vm1399, %v2020, %v2022
        %v2024 = vrot.slane %v1911, 1
        %v2025 = vsel %vm1399, %v2022, %v2024
        %v2026 = vrot.slane %v1912, 1
        %v2027 = vsel %vm1399, %v2024, %v2026
        %v2028 = vrot.slane %v1913, 1
        %v2029 = vsel %vm1399, %v2026, %v2028
        %v2030 = vrot.slane %v1914, 1
        %v2031 = vsel %vm1399, %v2028, %v2030
        %v2032 = vrot.slane %v1915, 1
        %v2033 = vsel %vm1399, %v2030, %v2032
        %v2034 = vrot.slane %v1916, 1
        %v2035 = vsel %vm1399, %v2032, %v2034
        %v2036 = vrot.slane %v1917, 1
        %v2037 = vsel %vm1399, %v2034, %v2036
        %v2039 = vsel %vm1399, %v2036, 0.0
        %s2040 = scalar_lea.vmem %s1, 24
        %v2041 = vld [vmem:[%s2040] sm:$0xff]
        %v2043 = vsel %vm279, %v1990, 0
        %v2045 = vsel %vm279, %v1944, 0
        %v2047 = vsel %vm279, %v1946, 0
        %v2049 = vsel %vm279, %v1948, 0
        %v2051 = vsel %vm279, %v1950, 0
        %v2053 = vsel %vm279, %v1952, 0
        %v2055 = vsel %vm279, %v1954, 0
        %v2057 = vsel %vm279, %v1956, 0
        %v2059 = vsel %vm279, %v1958, 0
        %v2061 = vsel %vm279, %v1960, 0
        %v2063 = vsel %vm279, %v1962, 0
        %v2065 = vsel %vm279, %v1964, 0
        %v2067 = vsel %vm279, %v1966, 0
        %v2069 = vsel %vm279, %v1968, 0
        %v2071 = vsel %vm279, %v1970, 0
        %v2073 = vsel %vm279, %v1972, 0
        %v2075 = vsel %vm279, %v1974, 0
        %v2077 = vsel %vm279, %v1976, 0
        %v2079 = vsel %vm279, %v1978, 0
        %v2081 = vsel %vm279, %v1980, 0
        %v2083 = vsel %vm279, %v1982, 0
        %v2085 = vsel %vm279, %v1984, 0
        %v2087 = vsel %vm279, %v1986, 0
        %v2089 = vsel %vm279, %v1988, 0
        %2091 = vmatpush.msra.mxu0 0.0
        %2092 = vmatpush.msra.mxu0 0.0
        %2093 = vmatpush.msra.mxu0 0.0
        %2094 = vmatpush.msra.mxu0 0.0
        %2095 = vmatpush.msra.mxu0 0.0
        %2096 = vmatpush.msra.mxu0 0.0
        %2097 = vmatpush.msra.mxu0 0.0
        %2098 = vmatpush.msra.mxu0 0.0
        %2099 = vmatpush.msra.mxu0 0.0
        %2100 = vmatpush.msra.mxu0 0.0
        %2101 = vmatpush.msra.mxu0 0.0
        %2102 = vmatpush.msra.mxu0 0.0
        %2103 = vmatpush.msra.mxu0 0.0
        %2104 = vmatpush.msra.mxu0 0.0
        %2105 = vmatpush.msra.mxu0 0.0
        %2106 = vmatpush.msra.mxu0 %v2041
        %2107 = vmatmul.f32.gmra.mxu0 %v2043
        %v2108 = vpop.f32.mrf.mxu0
        %v2109 = vadd.f32 0.0, %v2108
        %2110 = vmatmul.f32.gmra.mxu0 %v2045
        %v2111 = vpop.f32.mrf.mxu0
        %v2112 = vadd.f32 0.0, %v2111
        %2113 = vmatmul.f32.gmra.mxu0 %v2047
        %v2114 = vpop.f32.mrf.mxu0
        %v2115 = vadd.f32 0.0, %v2114
        %2116 = vmatmul.f32.gmra.mxu0 %v2049
        %v2117 = vpop.f32.mrf.mxu0
        %v2118 = vadd.f32 0.0, %v2117
        %2119 = vmatmul.f32.gmra.mxu0 %v2051
        %v2120 = vpop.f32.mrf.mxu0
        %v2121 = vadd.f32 0.0, %v2120
        %2122 = vmatmul.f32.gmra.mxu0 %v2053
        %v2123 = vpop.f32.mrf.mxu0
        %v2124 = vadd.f32 0.0, %v2123
        %2125 = vmatmul.f32.gmra.mxu0 %v2055
        %v2126 = vpop.f32.mrf.mxu0
        %v2127 = vadd.f32 0.0, %v2126
        %2128 = vmatmul.f32.gmra.mxu0 %v2057
        %v2129 = vpop.f32.mrf.mxu0
        %v2130 = vadd.f32 0.0, %v2129
        %2131 = vmatmul.f32.gmra.mxu0 %v2059
        %v2132 = vpop.f32.mrf.mxu0
        %v2133 = vadd.f32 0.0, %v2132
        %2134 = vmatmul.f32.gmra.mxu0 %v2061
        %v2135 = vpop.f32.mrf.mxu0
        %v2136 = vadd.f32 0.0, %v2135
        %2137 = vmatmul.f32.gmra.mxu0 %v2063
        %v2138 = vpop.f32.mrf.mxu0
        %v2139 = vadd.f32 0.0, %v2138
        %2140 = vmatmul.f32.gmra.mxu0 %v2065
        %v2141 = vpop.f32.mrf.mxu0
        %v2142 = vadd.f32 0.0, %v2141
        %2143 = vmatmul.f32.gmra.mxu0 %v2067
        %v2144 = vpop.f32.mrf.mxu0
        %v2145 = vadd.f32 0.0, %v2144
        %2146 = vmatmul.f32.gmra.mxu0 %v2069
        %v2147 = vpop.f32.mrf.mxu0
        %v2148 = vadd.f32 0.0, %v2147
        %2149 = vmatmul.f32.gmra.mxu0 %v2071
        %v2150 = vpop.f32.mrf.mxu0
        %v2151 = vadd.f32 0.0, %v2150
        %2152 = vmatmul.f32.gmra.mxu0 %v2073
        %v2153 = vpop.f32.mrf.mxu0
        %v2154 = vadd.f32 0.0, %v2153
        %2155 = vmatmul.f32.gmra.mxu0 %v2075
        %v2156 = vpop.f32.mrf.mxu0
        %v2157 = vadd.f32 0.0, %v2156
        %2158 = vmatmul.f32.gmra.mxu0 %v2077
        %v2159 = vpop.f32.mrf.mxu0
        %v2160 = vadd.f32 0.0, %v2159
        %2161 = vmatmul.f32.gmra.mxu0 %v2079
        %v2162 = vpop.f32.mrf.mxu0
        %v2163 = vadd.f32 0.0, %v2162
        %2164 = vmatmul.f32.gmra.mxu0 %v2081
        %v2165 = vpop.f32.mrf.mxu0
        %v2166 = vadd.f32 0.0, %v2165
        %2167 = vmatmul.f32.gmra.mxu0 %v2083
        %v2168 = vpop.f32.mrf.mxu0
        %v2169 = vadd.f32 0.0, %v2168
        %2170 = vmatmul.f32.gmra.mxu0 %v2085
        %v2171 = vpop.f32.mrf.mxu0
        %v2172 = vadd.f32 0.0, %v2171
        %2173 = vmatmul.f32.gmra.mxu0 %v2087
        %v2174 = vpop.f32.mrf.mxu0
        %v2175 = vadd.f32 0.0, %v2174
        %2176 = vmatmul.f32.gmra.mxu0 %v2089
        %v2177 = vpop.f32.mrf.mxu0
        %v2178 = vadd.f32 0.0, %v2177
        %2179 = vdwg.mxu0
        %v2180 = vadd.f32 %v1867, %v2109
        %v2181 = vadd.f32 %v1868, %v2112
        %v2182 = vadd.f32 %v1869, %v2115
        %v2183 = vadd.f32 %v1870, %v2118
        %v2184 = vadd.f32 %v1871, %v2121
        %v2185 = vadd.f32 %v1872, %v2124
        %v2186 = vadd.f32 %v1873, %v2127
        %v2187 = vadd.f32 %v1874, %v2130
        %v2188 = vadd.f32 %v1875, %v2133
        %v2189 = vadd.f32 %v1876, %v2136
        %v2190 = vadd.f32 %v1877, %v2139
        %v2191 = vadd.f32 %v1878, %v2142
        %v2192 = vadd.f32 %v1879, %v2145
        %v2193 = vadd.f32 %v1880, %v2148
        %v2194 = vadd.f32 %v1881, %v2151
        %v2195 = vadd.f32 %v1882, %v2154
        %v2196 = vadd.f32 %v1883, %v2157
        %v2197 = vadd.f32 %v1884, %v2160
        %v2198 = vadd.f32 %v1885, %v2163
        %v2199 = vadd.f32 %v1886, %v2166
        %v2200 = vadd.f32 %v1887, %v2169
        %v2201 = vadd.f32 %v1888, %v2172
        %v2202 = vadd.f32 %v1889, %v2175
        %v2203 = vadd.f32 %v1890, %v2178
        %s2204 = scalar_lea.vmem %s1, 32
        %v2205 = vld [vmem:[%s2204] sm:$0xff]
        %v2206 = vsel %vm279, %v1894, 0
        %v2208 = vsel %vm279, %v1895, 0
        %v2210 = vsel %vm279, %v1896, 0
        %v2212 = vsel %vm279, %v1897, 0
        %v2214 = vsel %vm279, %v1898, 0
        %v2216 = vsel %vm279, %v1899, 0
        %v2218 = vsel %vm279, %v1900, 0
        %v2220 = vsel %vm279, %v1901, 0
        %v2222 = vsel %vm279, %v1902, 0
        %v2224 = vsel %vm279, %v1903, 0
        %v2226 = vsel %vm279, %v1904, 0
        %v2228 = vsel %vm279, %v1905, 0
        %v2230 = vsel %vm279, %v1906, 0
        %v2232 = vsel %vm279, %v1907, 0
        %v2234 = vsel %vm279, %v1908, 0
        %v2236 = vsel %vm279, %v1909, 0
        %v2238 = vsel %vm279, %v1910, 0
        %v2240 = vsel %vm279, %v1911, 0
        %v2242 = vsel %vm279, %v1912, 0
        %v2244 = vsel %vm279, %v1913, 0
        %v2246 = vsel %vm279, %v1914, 0
        %v2248 = vsel %vm279, %v1915, 0
        %v2250 = vsel %vm279, %v1916, 0
        %v2252 = vsel %vm279, %v1917, 0
        %2254 = vmatpush.msra.mxu0 0.0
        %2255 = vmatpush.msra.mxu0 0.0
        %2256 = vmatpush.msra.mxu0 0.0
        %2257 = vmatpush.msra.mxu0 0.0
        %2258 = vmatpush.msra.mxu0 0.0
        %2259 = vmatpush.msra.mxu0 0.0
        %2260 = vmatpush.msra.mxu0 0.0
        %2261 = vmatpush.msra.mxu0 0.0
        %2262 = vmatpush.msra.mxu0 0.0
        %2263 = vmatpush.msra.mxu0 0.0
        %2264 = vmatpush.msra.mxu0 0.0
        %2265 = vmatpush.msra.mxu0 0.0
        %2266 = vmatpush.msra.mxu0 0.0
        %2267 = vmatpush.msra.mxu0 0.0
        %2268 = vmatpush.msra.mxu0 0.0
        %2269 = vmatpush.msra.mxu0 %v2205
        %2270 = vmatmul.f32.gmra.mxu0 %v2206
        %v2271 = vpop.f32.mrf.mxu0
        %v2272 = vadd.f32 0.0, %v2271
        %2273 = vmatmul.f32.gmra.mxu0 %v2208
        %v2274 = vpop.f32.mrf.mxu0
        %v2275 = vadd.f32 0.0, %v2274
        %2276 = vmatmul.f32.gmra.mxu0 %v2210
        %v2277 = vpop.f32.mrf.mxu0
        %v2278 = vadd.f32 0.0, %v2277
        %2279 = vmatmul.f32.gmra.mxu0 %v2212
        %v2280 = vpop.f32.mrf.mxu0
        %v2281 = vadd.f32 0.0, %v2280
        %2282 = vmatmul.f32.gmra.mxu0 %v2214
        %v2283 = vpop.f32.mrf.mxu0
        %v2284 = vadd.f32 0.0, %v2283
        %2285 = vmatmul.f32.gmra.mxu0 %v2216
        %v2286 = vpop.f32.mrf.mxu0
        %v2287 = vadd.f32 0.0, %v2286
        %2288 = vmatmul.f32.gmra.mxu0 %v2218
        %v2289 = vpop.f32.mrf.mxu0
        %v2290 = vadd.f32 0.0, %v2289
        %2291 = vmatmul.f32.gmra.mxu0 %v2220
        %v2292 = vpop.f32.mrf.mxu0
        %v2293 = vadd.f32 0.0, %v2292
        %2294 = vmatmul.f32.gmra.mxu0 %v2222
        %v2295 = vpop.f32.mrf.mxu0
        %v2296 = vadd.f32 0.0, %v2295
        %2297 = vmatmul.f32.gmra.mxu0 %v2224
        %v2298 = vpop.f32.mrf.mxu0
        %v2299 = vadd.f32 0.0, %v2298
        %2300 = vmatmul.f32.gmra.mxu0 %v2226
        %v2301 = vpop.f32.mrf.mxu0
        %v2302 = vadd.f32 0.0, %v2301
        %2303 = vmatmul.f32.gmra.mxu0 %v2228
        %v2304 = vpop.f32.mrf.mxu0
        %v2305 = vadd.f32 0.0, %v2304
        %2306 = vmatmul.f32.gmra.mxu0 %v2230
        %v2307 = vpop.f32.mrf.mxu0
        %v2308 = vadd.f32 0.0, %v2307
        %2309 = vmatmul.f32.gmra.mxu0 %v2232
        %v2310 = vpop.f32.mrf.mxu0
        %v2311 = vadd.f32 0.0, %v2310
        %2312 = vmatmul.f32.gmra.mxu0 %v2234
        %v2313 = vpop.f32.mrf.mxu0
        %v2314 = vadd.f32 0.0, %v2313
        %2315 = vmatmul.f32.gmra.mxu0 %v2236
        %v2316 = vpop.f32.mrf.mxu0
        %v2317 = vadd.f32 0.0, %v2316
        %2318 = vmatmul.f32.gmra.mxu0 %v2238
        %v2319 = vpop.f32.mrf.mxu0
        %v2320 = vadd.f32 0.0, %v2319
        %2321 = vmatmul.f32.gmra.mxu0 %v2240
        %v2322 = vpop.f32.mrf.mxu0
        %v2323 = vadd.f32 0.0, %v2322
        %2324 = vmatmul.f32.gmra.mxu0 %v2242
        %v2325 = vpop.f32.mrf.mxu0
        %v2326 = vadd.f32 0.0, %v2325
        %2327 = vmatmul.f32.gmra.mxu0 %v2244
        %v2328 = vpop.f32.mrf.mxu0
        %v2329 = vadd.f32 0.0, %v2328
        %2330 = vmatmul.f32.gmra.mxu0 %v2246
        %v2331 = vpop.f32.mrf.mxu0
        %v2332 = vadd.f32 0.0, %v2331
        %2333 = vmatmul.f32.gmra.mxu0 %v2248
        %v2334 = vpop.f32.mrf.mxu0
        %v2335 = vadd.f32 0.0, %v2334
        %2336 = vmatmul.f32.gmra.mxu0 %v2250
        %v2337 = vpop.f32.mrf.mxu0
        %v2338 = vadd.f32 0.0, %v2337
        %2339 = vmatmul.f32.gmra.mxu0 %v2252
        %v2340 = vpop.f32.mrf.mxu0
        %v2341 = vadd.f32 0.0, %v2340
        %2342 = vdwg.mxu0
        %v2343 = vadd.f32 %v2180, %v2272
        %v2344 = vadd.f32 %v2181, %v2275
        %v2345 = vadd.f32 %v2182, %v2278
        %v2346 = vadd.f32 %v2183, %v2281
        %v2347 = vadd.f32 %v2184, %v2284
        %v2348 = vadd.f32 %v2185, %v2287
        %v2349 = vadd.f32 %v2186, %v2290
        %v2350 = vadd.f32 %v2187, %v2293
        %v2351 = vadd.f32 %v2188, %v2296
        %v2352 = vadd.f32 %v2189, %v2299
        %v2353 = vadd.f32 %v2190, %v2302
        %v2354 = vadd.f32 %v2191, %v2305
        %v2355 = vadd.f32 %v2192, %v2308
        %v2356 = vadd.f32 %v2193, %v2311
        %v2357 = vadd.f32 %v2194, %v2314
        %v2358 = vadd.f32 %v2195, %v2317
        %v2359 = vadd.f32 %v2196, %v2320
        %v2360 = vadd.f32 %v2197, %v2323
        %v2361 = vadd.f32 %v2198, %v2326
        %v2362 = vadd.f32 %v2199, %v2329
        %v2363 = vadd.f32 %v2200, %v2332
        %v2364 = vadd.f32 %v2201, %v2335
        %v2365 = vadd.f32 %v2202, %v2338
        %v2366 = vadd.f32 %v2203, %v2341
        %s2367 = scalar_lea.vmem %s1, 40
        %v2368 = vld [vmem:[%s2367] sm:$0xff]
        %v2369 = vsel %vm279, %v1993, 0
        %v2371 = vsel %vm279, %v1995, 0
        %v2373 = vsel %vm279, %v1997, 0
        %v2375 = vsel %vm279, %v1999, 0
        %v2377 = vsel %vm279, %v2001, 0
        %v2379 = vsel %vm279, %v2003, 0
        %v2381 = vsel %vm279, %v2005, 0
        %v2383 = vsel %vm279, %v2007, 0
        %v2385 = vsel %vm279, %v2009, 0
        %v2387 = vsel %vm279, %v2011, 0
        %v2389 = vsel %vm279, %v2013, 0
        %v2391 = vsel %vm279, %v2015, 0
        %v2393 = vsel %vm279, %v2017, 0
        %v2395 = vsel %vm279, %v2019, 0
        %v2397 = vsel %vm279, %v2021, 0
        %v2399 = vsel %vm279, %v2023, 0
        %v2401 = vsel %vm279, %v2025, 0
        %v2403 = vsel %vm279, %v2027, 0
        %v2405 = vsel %vm279, %v2029, 0
        %v2407 = vsel %vm279, %v2031, 0
        %v2409 = vsel %vm279, %v2033, 0
        %v2411 = vsel %vm279, %v2035, 0
        %v2413 = vsel %vm279, %v2037, 0
        %v2416 = vsel %vm279, %v2039, 0
        %2418 = vmatpush.msra.mxu0 0.0
        %2419 = vmatpush.msra.mxu0 0.0
        %2420 = vmatpush.msra.mxu0 0.0
        %2421 = vmatpush.msra.mxu0 0.0
        %2422 = vmatpush.msra.mxu0 0.0
        %2423 = vmatpush.msra.mxu0 0.0
        %2424 = vmatpush.msra.mxu0 0.0
        %2425 = vmatpush.msra.mxu0 0.0
        %2426 = vmatpush.msra.mxu0 0.0
        %2427 = vmatpush.msra.mxu0 0.0
        %2428 = vmatpush.msra.mxu0 0.0
        %2429 = vmatpush.msra.mxu0 0.0
        %2430 = vmatpush.msra.mxu0 0.0
        %2431 = vmatpush.msra.mxu0 0.0
        %2432 = vmatpush.msra.mxu0 0.0
        %2433 = vmatpush.msra.mxu0 %v2368
        %2434 = vmatmul.f32.gmra.mxu0 %v2369
        %v2435 = vpop.f32.mrf.mxu0
        %v2436 = vadd.f32 0.0, %v2435
        %2437 = vmatmul.f32.gmra.mxu0 %v2371
        %v2438 = vpop.f32.mrf.mxu0
        %v2439 = vadd.f32 0.0, %v2438
        %2440 = vmatmul.f32.gmra.mxu0 %v2373
        %v2441 = vpop.f32.mrf.mxu0
        %v2442 = vadd.f32 0.0, %v2441
        %2443 = vmatmul.f32.gmra.mxu0 %v2375
        %v2444 = vpop.f32.mrf.mxu0
        %v2445 = vadd.f32 0.0, %v2444
        %2446 = vmatmul.f32.gmra.mxu0 %v2377
        %v2447 = vpop.f32.mrf.mxu0
        %v2448 = vadd.f32 0.0, %v2447
        %2449 = vmatmul.f32.gmra.mxu0 %v2379
        %v2450 = vpop.f32.mrf.mxu0
        %v2451 = vadd.f32 0.0, %v2450
        %2452 = vmatmul.f32.gmra.mxu0 %v2381
        %v2453 = vpop.f32.mrf.mxu0
        %v2454 = vadd.f32 0.0, %v2453
        %2455 = vmatmul.f32.gmra.mxu0 %v2383
        %v2456 = vpop.f32.mrf.mxu0
        %v2457 = vadd.f32 0.0, %v2456
        %2458 = vmatmul.f32.gmra.mxu0 %v2385
        %v2459 = vpop.f32.mrf.mxu0
        %v2460 = vadd.f32 0.0, %v2459
        %2461 = vmatmul.f32.gmra.mxu0 %v2387
        %v2462 = vpop.f32.mrf.mxu0
        %v2463 = vadd.f32 0.0, %v2462
        %2464 = vmatmul.f32.gmra.mxu0 %v2389
        %v2465 = vpop.f32.mrf.mxu0
        %v2466 = vadd.f32 0.0, %v2465
        %2467 = vmatmul.f32.gmra.mxu0 %v2391
        %v2468 = vpop.f32.mrf.mxu0
        %v2469 = vadd.f32 0.0, %v2468
        %2470 = vmatmul.f32.gmra.mxu0 %v2393
        %v2471 = vpop.f32.mrf.mxu0
        %v2472 = vadd.f32 0.0, %v2471
        %2473 = vmatmul.f32.gmra.mxu0 %v2395
        %v2474 = vpop.f32.mrf.mxu0
        %v2475 = vadd.f32 0.0, %v2474
        %2476 = vmatmul.f32.gmra.mxu0 %v2397
        %v2477 = vpop.f32.mrf.mxu0
        %v2478 = vadd.f32 0.0, %v2477
        %2479 = vmatmul.f32.gmra.mxu0 %v2399
        %v2480 = vpop.f32.mrf.mxu0
        %v2481 = vadd.f32 0.0, %v2480
        %2482 = vmatmul.f32.gmra.mxu0 %v2401
        %v2483 = vpop.f32.mrf.mxu0
        %v2484 = vadd.f32 0.0, %v2483
        %2485 = vmatmul.f32.gmra.mxu0 %v2403
        %v2486 = vpop.f32.mrf.mxu0
        %v2487 = vadd.f32 0.0, %v2486
        %2488 = vmatmul.f32.gmra.mxu0 %v2405
        %v2489 = vpop.f32.mrf.mxu0
        %v2490 = vadd.f32 0.0, %v2489
        %2491 = vmatmul.f32.gmra.mxu0 %v2407
        %v2492 = vpop.f32.mrf.mxu0
        %v2493 = vadd.f32 0.0, %v2492
        %2494 = vmatmul.f32.gmra.mxu0 %v2409
        %v2495 = vpop.f32.mrf.mxu0
        %v2496 = vadd.f32 0.0, %v2495
        %2497 = vmatmul.f32.gmra.mxu0 %v2411
        %v2498 = vpop.f32.mrf.mxu0
        %v2499 = vadd.f32 0.0, %v2498
        %2500 = vmatmul.f32.gmra.mxu0 %v2413
        %v2501 = vpop.f32.mrf.mxu0
        %v2502 = vadd.f32 0.0, %v2501
        %2503 = vmatmul.f32.gmra.mxu0 %v2416
        %v2504 = vpop.f32.mrf.mxu0
        %v2505 = vadd.f32 0.0, %v2504
        %2506 = vdwg.mxu0
        %v2507 = vadd.f32 %v2343, %v2436
        %v2508 = vadd.f32 %v2344, %v2439
        %v2509 = vadd.f32 %v2345, %v2442
        %v2510 = vadd.f32 %v2346, %v2445
        %v2511 = vadd.f32 %v2347, %v2448
        %v2512 = vadd.f32 %v2348, %v2451
        %v2513 = vadd.f32 %v2349, %v2454
        %v2514 = vadd.f32 %v2350, %v2457
        %v2515 = vadd.f32 %v2351, %v2460
        %v2516 = vadd.f32 %v2352, %v2463
        %v2517 = vadd.f32 %v2353, %v2466
        %v2518 = vadd.f32 %v2354, %v2469
        %v2519 = vadd.f32 %v2355, %v2472
        %v2520 = vadd.f32 %v2356, %v2475
        %v2521 = vadd.f32 %v2357, %v2478
        %v2522 = vadd.f32 %v2358, %v2481
        %v2523 = vadd.f32 %v2359, %v2484
        %v2524 = vadd.f32 %v2360, %v2487
        %v2525 = vadd.f32 %v2361, %v2490
        %v2526 = vadd.f32 %v2362, %v2493
        %v2527 = vadd.f32 %v2363, %v2496
        %v2528 = vadd.f32 %v2364, %v2499
        %v2529 = vadd.f32 %v2365, %v2502
        %v2530 = vadd.f32 %v2366, %v2505
        %s2531 = sadd.s32 %s1298, 2
        %s2532 = smul.u32 %s2531, 24
        %s2533 = scalar_lea.vmem [#allocation2], %s2532
        %v2534 = vld [vmem:[%s2533] sm:$0xff]
        %v2535 = vld [vmem:[%s2533 + $0x8] sm:$0xff]
        %v2536 = vld [vmem:[%s2533 + $0x10] sm:$0xff]
        %v2537 = vld [vmem:[%s2533 + $0x18] sm:$0xff]
        %v2538 = vld [vmem:[%s2533 + $0x20] sm:$0xff]
        %v2539 = vld [vmem:[%s2533 + $0x28] sm:$0xff]
        %v2540 = vld [vmem:[%s2533 + $0x30] sm:$0xff]
        %v2541 = vld [vmem:[%s2533 + $0x38] sm:$0xff]
        %v2542 = vld [vmem:[%s2533 + $0x40] sm:$0xff]
        %v2543 = vld [vmem:[%s2533 + $0x48] sm:$0xff]
        %v2544 = vld [vmem:[%s2533 + $0x50] sm:$0xff]
        %v2545 = vld [vmem:[%s2533 + $0x58] sm:$0xff]
        %v2546 = vld [vmem:[%s2533 + $0x60] sm:$0xff]
        %v2547 = vld [vmem:[%s2533 + $0x68] sm:$0xff]
        %v2548 = vld [vmem:[%s2533 + $0x70] sm:$0xff]
        %v2549 = vld [vmem:[%s2533 + $0x78] sm:$0xff]
        %v2550 = vld [vmem:[%s2533 + $0x80] sm:$0xff]
        %v2551 = vld [vmem:[%s2533 + $0x88] sm:$0xff]
        %v2552 = vld [vmem:[%s2533 + $0x90] sm:$0xff]
        %v2553 = vld [vmem:[%s2533 + $0x98] sm:$0xff]
        %v2554 = vld [vmem:[%s2533 + $0xa0] sm:$0xff]
        %v2555 = vld [vmem:[%s2533 + $0xa8] sm:$0xff]
        %v2556 = vld [vmem:[%s2533 + $0xb0] sm:$0xff]
        %v2557 = vld [vmem:[%s2533 + $0xb8] sm:$0xff]
        %v2582 = vrot.slane %v2534, 7
        %v2583 = vrot.slane %v2535, 7
        %v2584 = vsel %vm1349, %v2582, %v2583
        %v2585 = vrot.slane %v2536, 7
        %v2586 = vsel %vm1349, %v2583, %v2585
        %v2587 = vrot.slane %v2537, 7
        %v2588 = vsel %vm1349, %v2585, %v2587
        %v2589 = vrot.slane %v2538, 7
        %v2590 = vsel %vm1349, %v2587, %v2589
        %v2591 = vrot.slane %v2539, 7
        %v2592 = vsel %vm1349, %v2589, %v2591
        %v2593 = vrot.slane %v2540, 7
        %v2594 = vsel %vm1349, %v2591, %v2593
        %v2595 = vrot.slane %v2541, 7
        %v2596 = vsel %vm1349, %v2593, %v2595
        %v2597 = vrot.slane %v2542, 7
        %v2598 = vsel %vm1349, %v2595, %v2597
        %v2599 = vrot.slane %v2543, 7
        %v2600 = vsel %vm1349, %v2597, %v2599
        %v2601 = vrot.slane %v2544, 7
        %v2602 = vsel %vm1349, %v2599, %v2601
        %v2603 = vrot.slane %v2545, 7
        %v2604 = vsel %vm1349, %v2601, %v2603
        %v2605 = vrot.slane %v2546, 7
        %v2606 = vsel %vm1349, %v2603, %v2605
        %v2607 = vrot.slane %v2547, 7
        %v2608 = vsel %vm1349, %v2605, %v2607
        %v2609 = vrot.slane %v2548, 7
        %v2610 = vsel %vm1349, %v2607, %v2609
        %v2611 = vrot.slane %v2549, 7
        %v2612 = vsel %vm1349, %v2609, %v2611
        %v2613 = vrot.slane %v2550, 7
        %v2614 = vsel %vm1349, %v2611, %v2613
        %v2615 = vrot.slane %v2551, 7
        %v2616 = vsel %vm1349, %v2613, %v2615
        %v2617 = vrot.slane %v2552, 7
        %v2618 = vsel %vm1349, %v2615, %v2617
        %v2619 = vrot.slane %v2553, 7
        %v2620 = vsel %vm1349, %v2617, %v2619
        %v2621 = vrot.slane %v2554, 7
        %v2622 = vsel %vm1349, %v2619, %v2621
        %v2623 = vrot.slane %v2555, 7
        %v2624 = vsel %vm1349, %v2621, %v2623
        %v2625 = vrot.slane %v2556, 7
        %v2626 = vsel %vm1349, %v2623, %v2625
        %v2627 = vrot.slane %v2557, 7
        %v2628 = vsel %vm1349, %v2625, %v2627
        %v2630 = vsel %vm1349, 0.0, %v2582
        %v2631 = vrot.slane %v2534, 1
        %v2632 = vrot.slane %v2535, 1
        %v2633 = vsel %vm1399, %v2631, %v2632
        %v2634 = vrot.slane %v2536, 1
        %v2635 = vsel %vm1399, %v2632, %v2634
        %v2636 = vrot.slane %v2537, 1
        %v2637 = vsel %vm1399, %v2634, %v2636
        %v2638 = vrot.slane %v2538, 1
        %v2639 = vsel %vm1399, %v2636, %v2638
        %v2640 = vrot.slane %v2539, 1
        %v2641 = vsel %vm1399, %v2638, %v2640
        %v2642 = vrot.slane %v2540, 1
        %v2643 = vsel %vm1399, %v2640, %v2642
        %v2644 = vrot.slane %v2541, 1
        %v2645 = vsel %vm1399, %v2642, %v2644
        %v2646 = vrot.slane %v2542, 1
        %v2647 = vsel %vm1399, %v2644, %v2646
        %v2648 = vrot.slane %v2543, 1
        %v2649 = vsel %vm1399, %v2646, %v2648
        %v2650 = vrot.slane %v2544, 1
        %v2651 = vsel %vm1399, %v2648, %v2650
        %v2652 = vrot.slane %v2545, 1
        %v2653 = vsel %vm1399, %v2650, %v2652
        %v2654 = vrot.slane %v2546, 1
        %v2655 = vsel %vm1399, %v2652, %v2654
        %v2656 = vrot.slane %v2547, 1
        %v2657 = vsel %vm1399, %v2654, %v2656
        %v2658 = vrot.slane %v2548, 1
        %v2659 = vsel %vm1399, %v2656, %v2658
        %v2660 = vrot.slane %v2549, 1
        %v2661 = vsel %vm1399, %v2658, %v2660
        %v2662 = vrot.slane %v2550, 1
        %v2663 = vsel %vm1399, %v2660, %v2662
        %v2664 = vrot.slane %v2551, 1
        %v2665 = vsel %vm1399, %v2662, %v2664
        %v2666 = vrot.slane %v2552, 1
        %v2667 = vsel %vm1399, %v2664, %v2666
        %v2668 = vrot.slane %v2553, 1
        %v2669 = vsel %vm1399, %v2666, %v2668
        %v2670 = vrot.slane %v2554, 1
        %v2671 = vsel %vm1399, %v2668, %v2670
        %v2672 = vrot.slane %v2555, 1
        %v2673 = vsel %vm1399, %v2670, %v2672
        %v2674 = vrot.slane %v2556, 1
        %v2675 = vsel %vm1399, %v2672, %v2674
        %v2676 = vrot.slane %v2557, 1
        %v2677 = vsel %vm1399, %v2674, %v2676
        %v2679 = vsel %vm1399, %v2676, 0.0
        %s2680 = scalar_lea.vmem %s1, 48
        %v2681 = vld [vmem:[%s2680] sm:$0xff]
        %v2683 = vsel %vm279, %v2630, 0
        %v2685 = vsel %vm279, %v2584, 0
        %v2687 = vsel %vm279, %v2586, 0
        %v2689 = vsel %vm279, %v2588, 0
        %v2691 = vsel %vm279, %v2590, 0
        %v2693 = vsel %vm279, %v2592, 0
        %v2695 = vsel %vm279, %v2594, 0
        %v2697 = vsel %vm279, %v2596, 0
        %v2699 = vsel %vm279, %v2598, 0
        %v2701 = vsel %vm279, %v2600, 0
        %v2703 = vsel %vm279, %v2602, 0
        %v2705 = vsel %vm279, %v2604, 0
        %v2707 = vsel %vm279, %v2606, 0
        %v2709 = vsel %vm279, %v2608, 0
        %v2711 = vsel %vm279, %v2610, 0
        %v2713 = vsel %vm279, %v2612, 0
        %v2715 = vsel %vm279, %v2614, 0
        %v2717 = vsel %vm279, %v2616, 0
        %v2719 = vsel %vm279, %v2618, 0
        %v2721 = vsel %vm279, %v2620, 0
        %v2723 = vsel %vm279, %v2622, 0
        %v2725 = vsel %vm279, %v2624, 0
        %v2727 = vsel %vm279, %v2626, 0
        %v2729 = vsel %vm279, %v2628, 0
        %2731 = vmatpush.msra.mxu0 0.0
        %2732 = vmatpush.msra.mxu0 0.0
        %2733 = vmatpush.msra.mxu0 0.0
        %2734 = vmatpush.msra.mxu0 0.0
        %2735 = vmatpush.msra.mxu0 0.0
        %2736 = vmatpush.msra.mxu0 0.0
        %2737 = vmatpush.msra.mxu0 0.0
        %2738 = vmatpush.msra.mxu0 0.0
        %2739 = vmatpush.msra.mxu0 0.0
        %2740 = vmatpush.msra.mxu0 0.0
        %2741 = vmatpush.msra.mxu0 0.0
        %2742 = vmatpush.msra.mxu0 0.0
        %2743 = vmatpush.msra.mxu0 0.0
        %2744 = vmatpush.msra.mxu0 0.0
        %2745 = vmatpush.msra.mxu0 0.0
        %2746 = vmatpush.msra.mxu0 %v2681
        %2747 = vmatmul.f32.gmra.mxu0 %v2683
        %v2748 = vpop.f32.mrf.mxu0
        %v2749 = vadd.f32 0.0, %v2748
        %2750 = vmatmul.f32.gmra.mxu0 %v2685
        %v2751 = vpop.f32.mrf.mxu0
        %v2752 = vadd.f32 0.0, %v2751
        %2753 = vmatmul.f32.gmra.mxu0 %v2687
        %v2754 = vpop.f32.mrf.mxu0
        %v2755 = vadd.f32 0.0, %v2754
        %2756 = vmatmul.f32.gmra.mxu0 %v2689
        %v2757 = vpop.f32.mrf.mxu0
        %v2758 = vadd.f32 0.0, %v2757
        %2759 = vmatmul.f32.gmra.mxu0 %v2691
        %v2760 = vpop.f32.mrf.mxu0
        %v2761 = vadd.f32 0.0, %v2760
        %2762 = vmatmul.f32.gmra.mxu0 %v2693
        %v2763 = vpop.f32.mrf.mxu0
        %v2764 = vadd.f32 0.0, %v2763
        %2765 = vmatmul.f32.gmra.mxu0 %v2695
        %v2766 = vpop.f32.mrf.mxu0
        %v2767 = vadd.f32 0.0, %v2766
        %2768 = vmatmul.f32.gmra.mxu0 %v2697
        %v2769 = vpop.f32.mrf.mxu0
        %v2770 = vadd.f32 0.0, %v2769
        %2771 = vmatmul.f32.gmra.mxu0 %v2699
        %v2772 = vpop.f32.mrf.mxu0
        %v2773 = vadd.f32 0.0, %v2772
        %2774 = vmatmul.f32.gmra.mxu0 %v2701
        %v2775 = vpop.f32.mrf.mxu0
        %v2776 = vadd.f32 0.0, %v2775
        %2777 = vmatmul.f32.gmra.mxu0 %v2703
        %v2778 = vpop.f32.mrf.mxu0
        %v2779 = vadd.f32 0.0, %v2778
        %2780 = vmatmul.f32.gmra.mxu0 %v2705
        %v2781 = vpop.f32.mrf.mxu0
        %v2782 = vadd.f32 0.0, %v2781
        %2783 = vmatmul.f32.gmra.mxu0 %v2707
        %v2784 = vpop.f32.mrf.mxu0
        %v2785 = vadd.f32 0.0, %v2784
        %2786 = vmatmul.f32.gmra.mxu0 %v2709
        %v2787 = vpop.f32.mrf.mxu0
        %v2788 = vadd.f32 0.0, %v2787
        %2789 = vmatmul.f32.gmra.mxu0 %v2711
        %v2790 = vpop.f32.mrf.mxu0
        %v2791 = vadd.f32 0.0, %v2790
        %2792 = vmatmul.f32.gmra.mxu0 %v2713
        %v2793 = vpop.f32.mrf.mxu0
        %v2794 = vadd.f32 0.0, %v2793
        %2795 = vmatmul.f32.gmra.mxu0 %v2715
        %v2796 = vpop.f32.mrf.mxu0
        %v2797 = vadd.f32 0.0, %v2796
        %2798 = vmatmul.f32.gmra.mxu0 %v2717
        %v2799 = vpop.f32.mrf.mxu0
        %v2800 = vadd.f32 0.0, %v2799
        %2801 = vmatmul.f32.gmra.mxu0 %v2719
        %v2802 = vpop.f32.mrf.mxu0
        %v2803 = vadd.f32 0.0, %v2802
        %2804 = vmatmul.f32.gmra.mxu0 %v2721
        %v2805 = vpop.f32.mrf.mxu0
        %v2806 = vadd.f32 0.0, %v2805
        %2807 = vmatmul.f32.gmra.mxu0 %v2723
        %v2808 = vpop.f32.mrf.mxu0
        %v2809 = vadd.f32 0.0, %v2808
        %2810 = vmatmul.f32.gmra.mxu0 %v2725
        %v2811 = vpop.f32.mrf.mxu0
        %v2812 = vadd.f32 0.0, %v2811
        %2813 = vmatmul.f32.gmra.mxu0 %v2727
        %v2814 = vpop.f32.mrf.mxu0
        %v2815 = vadd.f32 0.0, %v2814
        %2816 = vmatmul.f32.gmra.mxu0 %v2729
        %v2817 = vpop.f32.mrf.mxu0
        %v2818 = vadd.f32 0.0, %v2817
        %2819 = vdwg.mxu0
        %v2820 = vadd.f32 %v2507, %v2749
        %v2821 = vadd.f32 %v2508, %v2752
        %v2822 = vadd.f32 %v2509, %v2755
        %v2823 = vadd.f32 %v2510, %v2758
        %v2824 = vadd.f32 %v2511, %v2761
        %v2825 = vadd.f32 %v2512, %v2764
        %v2826 = vadd.f32 %v2513, %v2767
        %v2827 = vadd.f32 %v2514, %v2770
        %v2828 = vadd.f32 %v2515, %v2773
        %v2829 = vadd.f32 %v2516, %v2776
        %v2830 = vadd.f32 %v2517, %v2779
        %v2831 = vadd.f32 %v2518, %v2782
        %v2832 = vadd.f32 %v2519, %v2785
        %v2833 = vadd.f32 %v2520, %v2788
        %v2834 = vadd.f32 %v2521, %v2791
        %v2835 = vadd.f32 %v2522, %v2794
        %v2836 = vadd.f32 %v2523, %v2797
        %v2837 = vadd.f32 %v2524, %v2800
        %v2838 = vadd.f32 %v2525, %v2803
        %v2839 = vadd.f32 %v2526, %v2806
        %v2840 = vadd.f32 %v2527, %v2809
        %v2841 = vadd.f32 %v2528, %v2812
        %v2842 = vadd.f32 %v2529, %v2815
        %v2843 = vadd.f32 %v2530, %v2818
        %s2844 = scalar_lea.vmem %s1, 56
        %v2845 = vld [vmem:[%s2844] sm:$0xff]
        %v2846 = vsel %vm279, %v2534, 0
        %v2848 = vsel %vm279, %v2535, 0
        %v2850 = vsel %vm279, %v2536, 0
        %v2852 = vsel %vm279, %v2537, 0
        %v2854 = vsel %vm279, %v2538, 0
        %v2856 = vsel %vm279, %v2539, 0
        %v2858 = vsel %vm279, %v2540, 0
        %v2860 = vsel %vm279, %v2541, 0
        %v2862 = vsel %vm279, %v2542, 0
        %v2864 = vsel %vm279, %v2543, 0
        %v2866 = vsel %vm279, %v2544, 0
        %v2868 = vsel %vm279, %v2545, 0
        %v2870 = vsel %vm279, %v2546, 0
        %v2872 = vsel %vm279, %v2547, 0
        %v2874 = vsel %vm279, %v2548, 0
        %v2876 = vsel %vm279, %v2549, 0
        %v2878 = vsel %vm279, %v2550, 0
        %v2880 = vsel %vm279, %v2551, 0
        %v2882 = vsel %vm279, %v2552, 0
        %v2884 = vsel %vm279, %v2553, 0
        %v2886 = vsel %vm279, %v2554, 0
        %v2888 = vsel %vm279, %v2555, 0
        %v2890 = vsel %vm279, %v2556, 0
        %v2892 = vsel %vm279, %v2557, 0
        %2894 = vmatpush.msra.mxu0 0.0
        %2895 = vmatpush.msra.mxu0 0.0
        %2896 = vmatpush.msra.mxu0 0.0
        %2897 = vmatpush.msra.mxu0 0.0
        %2898 = vmatpush.msra.mxu0 0.0
        %2899 = vmatpush.msra.mxu0 0.0
        %2900 = vmatpush.msra.mxu0 0.0
        %2901 = vmatpush.msra.mxu0 0.0
        %2902 = vmatpush.msra.mxu0 0.0
        %2903 = vmatpush.msra.mxu0 0.0
        %2904 = vmatpush.msra.mxu0 0.0
        %2905 = vmatpush.msra.mxu0 0.0
        %2906 = vmatpush.msra.mxu0 0.0
        %2907 = vmatpush.msra.mxu0 0.0
        %2908 = vmatpush.msra.mxu0 0.0
        %2909 = vmatpush.msra.mxu0 %v2845
        %2910 = vmatmul.f32.gmra.mxu0 %v2846
        %v2911 = vpop.f32.mrf.mxu0
        %v2912 = vadd.f32 0.0, %v2911
        %2913 = vmatmul.f32.gmra.mxu0 %v2848
        %v2914 = vpop.f32.mrf.mxu0
        %v2915 = vadd.f32 0.0, %v2914
        %2916 = vmatmul.f32.gmra.mxu0 %v2850
        %v2917 = vpop.f32.mrf.mxu0
        %v2918 = vadd.f32 0.0, %v2917
        %2919 = vmatmul.f32.gmra.mxu0 %v2852
        %v2920 = vpop.f32.mrf.mxu0
        %v2921 = vadd.f32 0.0, %v2920
        %2922 = vmatmul.f32.gmra.mxu0 %v2854
        %v2923 = vpop.f32.mrf.mxu0
        %v2924 = vadd.f32 0.0, %v2923
        %2925 = vmatmul.f32.gmra.mxu0 %v2856
        %v2926 = vpop.f32.mrf.mxu0
        %v2927 = vadd.f32 0.0, %v2926
        %2928 = vmatmul.f32.gmra.mxu0 %v2858
        %v2929 = vpop.f32.mrf.mxu0
        %v2930 = vadd.f32 0.0, %v2929
        %2931 = vmatmul.f32.gmra.mxu0 %v2860
        %v2932 = vpop.f32.mrf.mxu0
        %v2933 = vadd.f32 0.0, %v2932
        %2934 = vmatmul.f32.gmra.mxu0 %v2862
        %v2935 = vpop.f32.mrf.mxu0
        %v2936 = vadd.f32 0.0, %v2935
        %2937 = vmatmul.f32.gmra.mxu0 %v2864
        %v2938 = vpop.f32.mrf.mxu0
        %v2939 = vadd.f32 0.0, %v2938
        %2940 = vmatmul.f32.gmra.mxu0 %v2866
        %v2941 = vpop.f32.mrf.mxu0
        %v2942 = vadd.f32 0.0, %v2941
        %2943 = vmatmul.f32.gmra.mxu0 %v2868
        %v2944 = vpop.f32.mrf.mxu0
        %v2945 = vadd.f32 0.0, %v2944
        %2946 = vmatmul.f32.gmra.mxu0 %v2870
        %v2947 = vpop.f32.mrf.mxu0
        %v2948 = vadd.f32 0.0, %v2947
        %2949 = vmatmul.f32.gmra.mxu0 %v2872
        %v2950 = vpop.f32.mrf.mxu0
        %v2951 = vadd.f32 0.0, %v2950
        %2952 = vmatmul.f32.gmra.mxu0 %v2874
        %v2953 = vpop.f32.mrf.mxu0
        %v2954 = vadd.f32 0.0, %v2953
        %2955 = vmatmul.f32.gmra.mxu0 %v2876
        %v2956 = vpop.f32.mrf.mxu0
        %v2957 = vadd.f32 0.0, %v2956
        %2958 = vmatmul.f32.gmra.mxu0 %v2878
        %v2959 = vpop.f32.mrf.mxu0
        %v2960 = vadd.f32 0.0, %v2959
        %2961 = vmatmul.f32.gmra.mxu0 %v2880
        %v2962 = vpop.f32.mrf.mxu0
        %v2963 = vadd.f32 0.0, %v2962
        %2964 = vmatmul.f32.gmra.mxu0 %v2882
        %v2965 = vpop.f32.mrf.mxu0
        %v2966 = vadd.f32 0.0, %v2965
        %2967 = vmatmul.f32.gmra.mxu0 %v2884
        %v2968 = vpop.f32.mrf.mxu0
        %v2969 = vadd.f32 0.0, %v2968
        %2970 = vmatmul.f32.gmra.mxu0 %v2886
        %v2971 = vpop.f32.mrf.mxu0
        %v2972 = vadd.f32 0.0, %v2971
        %2973 = vmatmul.f32.gmra.mxu0 %v2888
        %v2974 = vpop.f32.mrf.mxu0
        %v2975 = vadd.f32 0.0, %v2974
        %2976 = vmatmul.f32.gmra.mxu0 %v2890
        %v2977 = vpop.f32.mrf.mxu0
        %v2978 = vadd.f32 0.0, %v2977
        %2979 = vmatmul.f32.gmra.mxu0 %v2892
        %v2980 = vpop.f32.mrf.mxu0
        %v2981 = vadd.f32 0.0, %v2980
        %2982 = vdwg.mxu0
        %v2983 = vadd.f32 %v2820, %v2912
        %v2984 = vadd.f32 %v2821, %v2915
        %v2985 = vadd.f32 %v2822, %v2918
        %v2986 = vadd.f32 %v2823, %v2921
        %v2987 = vadd.f32 %v2824, %v2924
        %v2988 = vadd.f32 %v2825, %v2927
        %v2989 = vadd.f32 %v2826, %v2930
        %v2990 = vadd.f32 %v2827, %v2933
        %v2991 = vadd.f32 %v2828, %v2936
        %v2992 = vadd.f32 %v2829, %v2939
        %v2993 = vadd.f32 %v2830, %v2942
        %v2994 = vadd.f32 %v2831, %v2945
        %v2995 = vadd.f32 %v2832, %v2948
        %v2996 = vadd.f32 %v2833, %v2951
        %v2997 = vadd.f32 %v2834, %v2954
        %v2998 = vadd.f32 %v2835, %v2957
        %v2999 = vadd.f32 %v2836, %v2960
        %v3000 = vadd.f32 %v2837, %v2963
        %v3001 = vadd.f32 %v2838, %v2966
        %v3002 = vadd.f32 %v2839, %v2969
        %v3003 = vadd.f32 %v2840, %v2972
        %v3004 = vadd.f32 %v2841, %v2975
        %v3005 = vadd.f32 %v2842, %v2978
        %v3006 = vadd.f32 %v2843, %v2981
        %s3007 = scalar_lea.vmem %s1, 64
        %v3008 = vld [vmem:[%s3007] sm:$0xff]
        %v3009 = vsel %vm279, %v2633, 0
        %v3011 = vsel %vm279, %v2635, 0
        %v3013 = vsel %vm279, %v2637, 0
        %v3015 = vsel %vm279, %v2639, 0
        %v3017 = vsel %vm279, %v2641, 0
        %v3019 = vsel %vm279, %v2643, 0
        %v3021 = vsel %vm279, %v2645, 0
        %v3023 = vsel %vm279, %v2647, 0
        %v3025 = vsel %vm279, %v2649, 0
        %v3027 = vsel %vm279, %v2651, 0
        %v3029 = vsel %vm279, %v2653, 0
        %v3031 = vsel %vm279, %v2655, 0
        %v3033 = vsel %vm279, %v2657, 0
        %v3035 = vsel %vm279, %v2659, 0
        %v3037 = vsel %vm279, %v2661, 0
        %v3039 = vsel %vm279, %v2663, 0
        %v3041 = vsel %vm279, %v2665, 0
        %v3043 = vsel %vm279, %v2667, 0
        %v3045 = vsel %vm279, %v2669, 0
        %v3047 = vsel %vm279, %v2671, 0
        %v3049 = vsel %vm279, %v2673, 0
        %v3051 = vsel %vm279, %v2675, 0
        %v3053 = vsel %vm279, %v2677, 0
        %v3056 = vsel %vm279, %v2679, 0
        %3058 = vmatpush.msra.mxu0 0.0
        %3059 = vmatpush.msra.mxu0 0.0
        %3060 = vmatpush.msra.mxu0 0.0
        %3061 = vmatpush.msra.mxu0 0.0
        %3062 = vmatpush.msra.mxu0 0.0
        %3063 = vmatpush.msra.mxu0 0.0
        %3064 = vmatpush.msra.mxu0 0.0
        %3065 = vmatpush.msra.mxu0 0.0
        %3066 = vmatpush.msra.mxu0 0.0
        %3067 = vmatpush.msra.mxu0 0.0
        %3068 = vmatpush.msra.mxu0 0.0
        %3069 = vmatpush.msra.mxu0 0.0
        %3070 = vmatpush.msra.mxu0 0.0
        %3071 = vmatpush.msra.mxu0 0.0
        %3072 = vmatpush.msra.mxu0 0.0
        %3073 = vmatpush.msra.mxu0 %v3008
        %3074 = vmatmul.f32.gmra.mxu0 %v3009
        %v3075 = vpop.f32.mrf.mxu0
        %v3076 = vadd.f32 0.0, %v3075
        %3077 = vmatmul.f32.gmra.mxu0 %v3011
        %v3078 = vpop.f32.mrf.mxu0
        %v3079 = vadd.f32 0.0, %v3078
        %3080 = vmatmul.f32.gmra.mxu0 %v3013
        %v3081 = vpop.f32.mrf.mxu0
        %v3082 = vadd.f32 0.0, %v3081
        %3083 = vmatmul.f32.gmra.mxu0 %v3015
        %v3084 = vpop.f32.mrf.mxu0
        %v3085 = vadd.f32 0.0, %v3084
        %3086 = vmatmul.f32.gmra.mxu0 %v3017
        %v3087 = vpop.f32.mrf.mxu0
        %v3088 = vadd.f32 0.0, %v3087
        %3089 = vmatmul.f32.gmra.mxu0 %v3019
        %v3090 = vpop.f32.mrf.mxu0
        %v3091 = vadd.f32 0.0, %v3090
        %3092 = vmatmul.f32.gmra.mxu0 %v3021
        %v3093 = vpop.f32.mrf.mxu0
        %v3094 = vadd.f32 0.0, %v3093
        %3095 = vmatmul.f32.gmra.mxu0 %v3023
        %v3096 = vpop.f32.mrf.mxu0
        %v3097 = vadd.f32 0.0, %v3096
        %3098 = vmatmul.f32.gmra.mxu0 %v3025
        %v3099 = vpop.f32.mrf.mxu0
        %v3100 = vadd.f32 0.0, %v3099
        %3101 = vmatmul.f32.gmra.mxu0 %v3027
        %v3102 = vpop.f32.mrf.mxu0
        %v3103 = vadd.f32 0.0, %v3102
        %3104 = vmatmul.f32.gmra.mxu0 %v3029
        %v3105 = vpop.f32.mrf.mxu0
        %v3106 = vadd.f32 0.0, %v3105
        %3107 = vmatmul.f32.gmra.mxu0 %v3031
        %v3108 = vpop.f32.mrf.mxu0
        %v3109 = vadd.f32 0.0, %v3108
        %3110 = vmatmul.f32.gmra.mxu0 %v3033
        %v3111 = vpop.f32.mrf.mxu0
        %v3112 = vadd.f32 0.0, %v3111
        %3113 = vmatmul.f32.gmra.mxu0 %v3035
        %v3114 = vpop.f32.mrf.mxu0
        %v3115 = vadd.f32 0.0, %v3114
        %3116 = vmatmul.f32.gmra.mxu0 %v3037
        %v3117 = vpop.f32.mrf.mxu0
        %v3118 = vadd.f32 0.0, %v3117
        %3119 = vmatmul.f32.gmra.mxu0 %v3039
        %v3120 = vpop.f32.mrf.mxu0
        %v3121 = vadd.f32 0.0, %v3120
        %3122 = vmatmul.f32.gmra.mxu0 %v3041
        %v3123 = vpop.f32.mrf.mxu0
        %v3124 = vadd.f32 0.0, %v3123
        %3125 = vmatmul.f32.gmra.mxu0 %v3043
        %v3126 = vpop.f32.mrf.mxu0
        %v3127 = vadd.f32 0.0, %v3126
        %3128 = vmatmul.f32.gmra.mxu0 %v3045
        %v3129 = vpop.f32.mrf.mxu0
        %v3130 = vadd.f32 0.0, %v3129
        %3131 = vmatmul.f32.gmra.mxu0 %v3047
        %v3132 = vpop.f32.mrf.mxu0
        %v3133 = vadd.f32 0.0, %v3132
        %3134 = vmatmul.f32.gmra.mxu0 %v3049
        %v3135 = vpop.f32.mrf.mxu0
        %v3136 = vadd.f32 0.0, %v3135
        %3137 = vmatmul.f32.gmra.mxu0 %v3051
        %v3138 = vpop.f32.mrf.mxu0
        %v3139 = vadd.f32 0.0, %v3138
        %3140 = vmatmul.f32.gmra.mxu0 %v3053
        %v3141 = vpop.f32.mrf.mxu0
        %v3142 = vadd.f32 0.0, %v3141
        %3143 = vmatmul.f32.gmra.mxu0 %v3056
        %v3144 = vpop.f32.mrf.mxu0
        %v3145 = vadd.f32 0.0, %v3144
        %3146 = vdwg.mxu0
        %v3147 = vadd.f32 %v2983, %v3076
        %v3148 = vadd.f32 %v2984, %v3079
        %v3149 = vadd.f32 %v2985, %v3082
        %v3150 = vadd.f32 %v2986, %v3085
        %v3151 = vadd.f32 %v2987, %v3088
        %v3152 = vadd.f32 %v2988, %v3091
        %v3153 = vadd.f32 %v2989, %v3094
        %v3154 = vadd.f32 %v2990, %v3097
        %v3155 = vadd.f32 %v2991, %v3100
        %v3156 = vadd.f32 %v2992, %v3103
        %v3157 = vadd.f32 %v2993, %v3106
        %v3158 = vadd.f32 %v2994, %v3109
        %v3159 = vadd.f32 %v2995, %v3112
        %v3160 = vadd.f32 %v2996, %v3115
        %v3161 = vadd.f32 %v2997, %v3118
        %v3162 = vadd.f32 %v2998, %v3121
        %v3163 = vadd.f32 %v2999, %v3124
        %v3164 = vadd.f32 %v3000, %v3127
        %v3165 = vadd.f32 %v3001, %v3130
        %v3166 = vadd.f32 %v3002, %v3133
        %v3167 = vadd.f32 %v3003, %v3136
        %v3168 = vadd.f32 %v3004, %v3139
        %v3169 = vadd.f32 %v3005, %v3142
        %v3170 = vadd.f32 %v3006, %v3145
        %v3172 = vperm.slane %v375, 0
        %v3174 = vmul.f32 %v3147, %v3172
        %v3175 = vmul.f32 %v3148, %v3172
        %v3176 = vmul.f32 %v3149, %v3172
        %v3177 = vmul.f32 %v3150, %v3172
        %v3178 = vmul.f32 %v3151, %v3172
        %v3179 = vmul.f32 %v3152, %v3172
        %v3180 = vmul.f32 %v3153, %v3172
        %v3181 = vmul.f32 %v3154, %v3172
        %v3182 = vmul.f32 %v3155, %v3172
        %v3183 = vmul.f32 %v3156, %v3172
        %v3184 = vmul.f32 %v3157, %v3172
        %v3185 = vmul.f32 %v3158, %v3172
        %v3186 = vmul.f32 %v3159, %v3172
        %v3187 = vmul.f32 %v3160, %v3172
        %v3188 = vmul.f32 %v3161, %v3172
        %v3189 = vmul.f32 %v3162, %v3172
        %v3190 = vmul.f32 %v3163, %v3172
        %v3191 = vmul.f32 %v3164, %v3172
        %v3192 = vmul.f32 %v3165, %v3172
        %v3193 = vmul.f32 %v3166, %v3172
        %v3194 = vmul.f32 %v3167, %v3172
        %v3195 = vmul.f32 %v3168, %v3172
        %v3196 = vmul.f32 %v3169, %v3172
        %v3197 = vmul.f32 %v3170, %v3172
        %v3199 = vperm.slane %v376, 0
        %v3201 = vadd.f32 %v3174, %v3199
        %v3202 = vadd.f32 %v3175, %v3199
        %v3203 = vadd.f32 %v3176, %v3199
        %v3204 = vadd.f32 %v3177, %v3199
        %v3205 = vadd.f32 %v3178, %v3199
        %v3206 = vadd.f32 %v3179, %v3199
        %v3207 = vadd.f32 %v3180, %v3199
        %v3208 = vadd.f32 %v3181, %v3199
        %v3209 = vadd.f32 %v3182, %v3199
        %v3210 = vadd.f32 %v3183, %v3199
        %v3211 = vadd.f32 %v3184, %v3199
        %v3212 = vadd.f32 %v3185, %v3199
        %v3213 = vadd.f32 %v3186, %v3199
        %v3214 = vadd.f32 %v3187, %v3199
        %v3215 = vadd.f32 %v3188, %v3199
        %v3216 = vadd.f32 %v3189, %v3199
        %v3217 = vadd.f32 %v3190, %v3199
        %v3218 = vadd.f32 %v3191, %v3199
        %v3219 = vadd.f32 %v3192, %v3199
        %v3220 = vadd.f32 %v3193, %v3199
        %v3221 = vadd.f32 %v3194, %v3199
        %v3222 = vadd.f32 %v3195, %v3199
        %v3223 = vadd.f32 %v3196, %v3199
        %v3224 = vadd.f32 %v3197, %v3199
        %v3225 = vmax.f32 %v3201, 0.0
        %v3226 = vmax.f32 %v3202, 0.0
        %v3227 = vmax.f32 %v3203, 0.0
        %v3228 = vmax.f32 %v3204, 0.0
        %v3229 = vmax.f32 %v3205, 0.0
        %v3230 = vmax.f32 %v3206, 0.0
        %v3231 = vmax.f32 %v3207, 0.0
        %v3232 = vmax.f32 %v3208, 0.0
        %v3233 = vmax.f32 %v3209, 0.0
        %v3234 = vmax.f32 %v3210, 0.0
        %v3235 = vmax.f32 %v3211, 0.0
        %v3236 = vmax.f32 %v3212, 0.0
        %v3237 = vmax.f32 %v3213, 0.0
        %v3238 = vmax.f32 %v3214, 0.0
        %v3239 = vmax.f32 %v3215, 0.0
        %v3240 = vmax.f32 %v3216, 0.0
        %v3241 = vmax.f32 %v3217, 0.0
        %v3242 = vmax.f32 %v3218, 0.0
        %v3243 = vmax.f32 %v3219, 0.0
        %v3244 = vmax.f32 %v3220, 0.0
        %v3245 = vmax.f32 %v3221, 0.0
        %v3246 = vmax.f32 %v3222, 0.0
        %v3247 = vmax.f32 %v3223, 0.0
        %v3248 = vmax.f32 %v3224, 0.0
        %v3249 = vmul.f32 %v3225, %v1268
        %v3250 = vmul.f32 %v3226, %v1269
        %v3251 = vmul.f32 %v3227, %v1270
        %v3252 = vmul.f32 %v3228, %v1271
        %v3253 = vmul.f32 %v3229, %v1272
        %v3254 = vmul.f32 %v3230, %v1273
        %v3255 = vmul.f32 %v3231, %v1274
        %v3256 = vmul.f32 %v3232, %v1275
        %v3257 = vmul.f32 %v3233, %v1276
        %v3258 = vmul.f32 %v3234, %v1277
        %v3259 = vmul.f32 %v3235, %v1278
        %v3260 = vmul.f32 %v3236, %v1279
        %v3261 = vmul.f32 %v3237, %v1280
        %v3262 = vmul.f32 %v3238, %v1281
        %v3263 = vmul.f32 %v3239, %v1282
        %v3264 = vmul.f32 %v3240, %v1283
        %v3265 = vmul.f32 %v3241, %v1284
        %v3266 = vmul.f32 %v3242, %v1285
        %v3267 = vmul.f32 %v3243, %v1286
        %v3268 = vmul.f32 %v3244, %v1287
        %v3269 = vmul.f32 %v3245, %v1288
        %v3270 = vmul.f32 %v3246, %v1289
        %v3271 = vmul.f32 %v3247, %v1290
        %v3272 = vmul.f32 %v3248, %v1291
        %s3273 = scalar_lea.vmem [#allocation3], %s1892
        %3274 = vst.msk [vmem:[%s3273] sm:$0xff] %vm279, %v3249
        %3275 = vst.msk [vmem:[%s3273 + $0x8] sm:$0xff] %vm279, %v3250
        %3276 = vst.msk [vmem:[%s3273 + $0x10] sm:$0xff] %vm279, %v3251
        %3277 = vst.msk [vmem:[%s3273 + $0x18] sm:$0xff] %vm279, %v3252
        %3278 = vst.msk [vmem:[%s3273 + $0x20] sm:$0xff] %vm279, %v3253
        %3279 = vst.msk [vmem:[%s3273 + $0x28] sm:$0xff] %vm279, %v3254
        %3280 = vst.msk [vmem:[%s3273 + $0x30] sm:$0xff] %vm279, %v3255
        %3281 = vst.msk [vmem:[%s3273 + $0x38] sm:$0xff] %vm279, %v3256
        %3282 = vst.msk [vmem:[%s3273 + $0x40] sm:$0xff] %vm279, %v3257
        %3283 = vst.msk [vmem:[%s3273 + $0x48] sm:$0xff] %vm279, %v3258
        %3284 = vst.msk [vmem:[%s3273 + $0x50] sm:$0xff] %vm279, %v3259
        %3285 = vst.msk [vmem:[%s3273 + $0x58] sm:$0xff] %vm279, %v3260
        %3286 = vst.msk [vmem:[%s3273 + $0x60] sm:$0xff] %vm279, %v3261
        %3287 = vst.msk [vmem:[%s3273 + $0x68] sm:$0xff] %vm279, %v3262
        %3288 = vst.msk [vmem:[%s3273 + $0x70] sm:$0xff] %vm279, %v3263
        %3289 = vst.msk [vmem:[%s3273 + $0x78] sm:$0xff] %vm279, %v3264
        %3290 = vst.msk [vmem:[%s3273 + $0x80] sm:$0xff] %vm279, %v3265
        %3291 = vst.msk [vmem:[%s3273 + $0x88] sm:$0xff] %vm279, %v3266
        %3292 = vst.msk [vmem:[%s3273 + $0x90] sm:$0xff] %vm279, %v3267
        %3293 = vst.msk [vmem:[%s3273 + $0x98] sm:$0xff] %vm279, %v3268
        %3294 = vst.msk [vmem:[%s3273 + $0xa0] sm:$0xff] %vm279, %v3269
        %3295 = vst.msk [vmem:[%s3273 + $0xa8] sm:$0xff] %vm279, %v3270
        %3296 = vst.msk [vmem:[%s3273 + $0xb0] sm:$0xff] %vm279, %v3271
        %3297 = vst.msk [vmem:[%s3273 + $0xb8] sm:$0xff] %vm279, %v3272
      $region53: #{basic_block_forward_nhwc.1} parent=47 // loop_footer
        %s1297 = sadd.s32 1, %s1293
      $region54: #{basic_block_forward_nhwc.1} parent=47 // loop_footer_branch
        %1292 = sbr.rel target = $region50
      $region55: #{basic_block_forward_nhwc.1} parent=47 // loop_exit
        _
      loop: start=0, step=1, limit=2
      $region56: #{basic_block_forward_nhwc.1} parent=47 // loop_pre_header
        _
      $region57: #{basic_block_forward_nhwc.1} parent=47 // loop_header
        %s3299 = sphi 0, %s3303
        %p3300 = scmp.ge.s32.totalorder %s3299, 2
      $region58: #{basic_block_forward_nhwc.1} parent=47 // loop_header_branch
        %3302 = sbr.rel (%p3300) target = $region62
      $region59: #{basic_block_forward_nhwc.1} parent=47 // loop_body
        %s3304 = smul.u32 %s3299, 8
        %s3305 = smul.u32 %s3304, 24
        %s3306 = scalar_lea.vmem [#allocation3], %s3305
        %v3307 = vld [vmem:[%s3306] sm:$0xff]
        %v3308 = vld [vmem:[%s3306 + $0x8] sm:$0xff]
        %v3309 = vld [vmem:[%s3306 + $0x10] sm:$0xff]
        %v3310 = vld [vmem:[%s3306 + $0x18] sm:$0xff]
        %v3311 = vld [vmem:[%s3306 + $0x20] sm:$0xff]
        %v3312 = vld [vmem:[%s3306 + $0x28] sm:$0xff]
        %v3313 = vld [vmem:[%s3306 + $0x30] sm:$0xff]
        %v3314 = vld [vmem:[%s3306 + $0x38] sm:$0xff]
        %v3315 = vld [vmem:[%s3306 + $0x40] sm:$0xff]
        %v3316 = vld [vmem:[%s3306 + $0x48] sm:$0xff]
        %v3317 = vld [vmem:[%s3306 + $0x50] sm:$0xff]
        %v3318 = vld [vmem:[%s3306 + $0x58] sm:$0xff]
        %v3319 = vld [vmem:[%s3306 + $0x60] sm:$0xff]
        %v3320 = vld [vmem:[%s3306 + $0x68] sm:$0xff]
        %v3321 = vld [vmem:[%s3306 + $0x70] sm:$0xff]
        %v3322 = vld [vmem:[%s3306 + $0x78] sm:$0xff]
        %v3323 = vld [vmem:[%s3306 + $0x80] sm:$0xff]
        %v3324 = vld [vmem:[%s3306 + $0x88] sm:$0xff]
        %v3325 = vld [vmem:[%s3306 + $0x90] sm:$0xff]
        %v3326 = vld [vmem:[%s3306 + $0x98] sm:$0xff]
        %v3327 = vld [vmem:[%s3306 + $0xa0] sm:$0xff]
        %v3328 = vld [vmem:[%s3306 + $0xa8] sm:$0xff]
        %v3329 = vld [vmem:[%s3306 + $0xb0] sm:$0xff]
        %v3330 = vld [vmem:[%s3306 + $0xb8] sm:$0xff]
        %vm3355 = vcmask 1040384
        %v3356 = vrot.slane %v3307, 7
        %v3357 = vrot.slane %v3308, 7
        %v3358 = vsel %vm3355, %v3356, %v3357
        %v3359 = vrot.slane %v3309, 7
        %v3360 = vsel %vm3355, %v3357, %v3359
        %v3361 = vrot.slane %v3310, 7
        %v3362 = vsel %vm3355, %v3359, %v3361
        %v3363 = vrot.slane %v3311, 7
        %v3364 = vsel %vm3355, %v3361, %v3363
        %v3365 = vrot.slane %v3312, 7
        %v3366 = vsel %vm3355, %v3363, %v3365
        %v3367 = vrot.slane %v3313, 7
        %v3368 = vsel %vm3355, %v3365, %v3367
        %v3369 = vrot.slane %v3314, 7
        %v3370 = vsel %vm3355, %v3367, %v3369
        %v3371 = vrot.slane %v3315, 7
        %v3372 = vsel %vm3355, %v3369, %v3371
        %v3373 = vrot.slane %v3316, 7
        %v3374 = vsel %vm3355, %v3371, %v3373
        %v3375 = vrot.slane %v3317, 7
        %v3376 = vsel %vm3355, %v3373, %v3375
        %v3377 = vrot.slane %v3318, 7
        %v3378 = vsel %vm3355, %v3375, %v3377
        %v3379 = vrot.slane %v3319, 7
        %v3380 = vsel %vm3355, %v3377, %v3379
        %v3381 = vrot.slane %v3320, 7
        %v3382 = vsel %vm3355, %v3379, %v3381
        %v3383 = vrot.slane %v3321, 7
        %v3384 = vsel %vm3355, %v3381, %v3383
        %v3385 = vrot.slane %v3322, 7
        %v3386 = vsel %vm3355, %v3383, %v3385
        %v3387 = vrot.slane %v3323, 7
        %v3388 = vsel %vm3355, %v3385, %v3387
        %v3389 = vrot.slane %v3324, 7
        %v3390 = vsel %vm3355, %v3387, %v3389
        %v3391 = vrot.slane %v3325, 7
        %v3392 = vsel %vm3355, %v3389, %v3391
        %v3393 = vrot.slane %v3326, 7
        %v3394 = vsel %vm3355, %v3391, %v3393
        %v3395 = vrot.slane %v3327, 7
        %v3396 = vsel %vm3355, %v3393, %v3395
        %v3397 = vrot.slane %v3328, 7
        %v3398 = vsel %vm3355, %v3395, %v3397
        %v3399 = vrot.slane %v3329, 7
        %v3400 = vsel %vm3355, %v3397, %v3399
        %v3401 = vrot.slane %v3330, 7
        %v3402 = vsel %vm3355, %v3399, %v3401
        %v3404 = vsel %vm3355, 0.0, %v3356
        %vm3405 = vcmask 1046528
        %v3406 = vrot.slane %v3307, 1
        %v3407 = vrot.slane %v3308, 1
        %v3408 = vsel %vm3405, %v3406, %v3407
        %v3409 = vrot.slane %v3309, 1
        %v3410 = vsel %vm3405, %v3407, %v3409
        %v3411 = vrot.slane %v3310, 1
        %v3412 = vsel %vm3405, %v3409, %v3411
        %v3413 = vrot.slane %v3311, 1
        %v3414 = vsel %vm3405, %v3411, %v3413
        %v3415 = vrot.slane %v3312, 1
        %v3416 = vsel %vm3405, %v3413, %v3415
        %v3417 = vrot.slane %v3313, 1
        %v3418 = vsel %vm3405, %v3415, %v3417
        %v3419 = vrot.slane %v3314, 1
        %v3420 = vsel %vm3405, %v3417, %v3419
        %v3421 = vrot.slane %v3315, 1
        %v3422 = vsel %vm3405, %v3419, %v3421
        %v3423 = vrot.slane %v3316, 1
        %v3424 = vsel %vm3405, %v3421, %v3423
        %v3425 = vrot.slane %v3317, 1
        %v3426 = vsel %vm3405, %v3423, %v3425
        %v3427 = vrot.slane %v3318, 1
        %v3428 = vsel %vm3405, %v3425, %v3427
        %v3429 = vrot.slane %v3319, 1
        %v3430 = vsel %vm3405, %v3427, %v3429
        %v3431 = vrot.slane %v3320, 1
        %v3432 = vsel %vm3405, %v3429, %v3431
        %v3433 = vrot.slane %v3321, 1
        %v3434 = vsel %vm3405, %v3431, %v3433
        %v3435 = vrot.slane %v3322, 1
        %v3436 = vsel %vm3405, %v3433, %v3435
        %v3437 = vrot.slane %v3323, 1
        %v3438 = vsel %vm3405, %v3435, %v3437
        %v3439 = vrot.slane %v3324, 1
        %v3440 = vsel %vm3405, %v3437, %v3439
        %v3441 = vrot.slane %v3325, 1
        %v3442 = vsel %vm3405, %v3439, %v3441
        %v3443 = vrot.slane %v3326, 1
        %v3444 = vsel %vm3405, %v3441, %v3443
        %v3445 = vrot.slane %v3327, 1
        %v3446 = vsel %vm3405, %v3443, %v3445
        %v3447 = vrot.slane %v3328, 1
        %v3448 = vsel %vm3405, %v3445, %v3447
        %v3449 = vrot.slane %v3329, 1
        %v3450 = vsel %vm3405, %v3447, %v3449
        %v3451 = vrot.slane %v3330, 1
        %v3452 = vsel %vm3405, %v3449, %v3451
        %v3454 = vsel %vm3405, %v3451, 0.0
        %v3455 = vld [vmem:[%s2] sm:$0xff]
        %s3456 = scalar_lea.vmem %s2, 8
        %v3457 = vld [vmem:[%s3456] sm:$0xff]
        %v3458 = vsel %vm279, %v3307, 0
        %v3460 = vsel %vm279, %v3308, 0
        %v3462 = vsel %vm279, %v3309, 0
        %v3464 = vsel %vm279, %v3310, 0
        %v3466 = vsel %vm279, %v3311, 0
        %v3468 = vsel %vm279, %v3312, 0
        %v3470 = vsel %vm279, %v3313, 0
        %v3472 = vsel %vm279, %v3314, 0
        %v3474 = vsel %vm279, %v3315, 0
        %v3476 = vsel %vm279, %v3316, 0
        %v3478 = vsel %vm279, %v3317, 0
        %v3480 = vsel %vm279, %v3318, 0
        %v3482 = vsel %vm279, %v3319, 0
        %v3484 = vsel %vm279, %v3320, 0
        %v3486 = vsel %vm279, %v3321, 0
        %v3488 = vsel %vm279, %v3322, 0
        %v3490 = vsel %vm279, %v3323, 0
        %v3492 = vsel %vm279, %v3324, 0
        %v3494 = vsel %vm279, %v3325, 0
        %v3496 = vsel %vm279, %v3326, 0
        %v3498 = vsel %vm279, %v3327, 0
        %v3500 = vsel %vm279, %v3328, 0
        %v3502 = vsel %vm279, %v3329, 0
        %v3504 = vsel %vm279, %v3330, 0
        %3506 = vmatpush.msra.mxu0 0.0
        %3507 = vmatpush.msra.mxu0 0.0
        %3508 = vmatpush.msra.mxu0 0.0
        %3509 = vmatpush.msra.mxu0 0.0
        %3510 = vmatpush.msra.mxu0 0.0
        %3511 = vmatpush.msra.mxu0 0.0
        %3512 = vmatpush.msra.mxu0 0.0
        %3513 = vmatpush.msra.mxu0 0.0
        %3514 = vmatpush.msra.mxu0 0.0
        %3515 = vmatpush.msra.mxu0 0.0
        %3516 = vmatpush.msra.mxu0 0.0
        %3517 = vmatpush.msra.mxu0 0.0
        %3518 = vmatpush.msra.mxu0 0.0
        %3519 = vmatpush.msra.mxu0 0.0
        %3520 = vmatpush.msra.mxu0 0.0
        %3521 = vmatpush.msra.mxu0 %v3457
        %3522 = vmatmul.f32.gmra.mxu0 %v3458
        %v3523 = vpop.f32.mrf.mxu0
        %v3524 = vadd.f32 0.0, %v3523
        %3525 = vmatmul.f32.gmra.mxu0 %v3460
        %v3526 = vpop.f32.mrf.mxu0
        %v3527 = vadd.f32 0.0, %v3526
        %3528 = vmatmul.f32.gmra.mxu0 %v3462
        %v3529 = vpop.f32.mrf.mxu0
        %3530 = vmatmul.f32.gmra.mxu0 %v3464
        %v3531 = vpop.f32.mrf.mxu0
        %v3532 = vadd.f32 0.0, %v3531
        %3533 = vmatmul.f32.gmra.mxu0 %v3466
        %v3534 = vpop.f32.mrf.mxu0
        %v3535 = vadd.f32 0.0, %v3534
        %3536 = vmatmul.f32.gmra.mxu0 %v3468
        %v3537 = vpop.f32.mrf.mxu0
        %3538 = vmatmul.f32.gmra.mxu0 %v3470
        %v3539 = vpop.f32.mrf.mxu0
        %v3540 = vadd.f32 0.0, %v3539
        %3541 = vmatmul.f32.gmra.mxu0 %v3472
        %v3542 = vpop.f32.mrf.mxu0
        %v3543 = vadd.f32 0.0, %v3542
        %3544 = vmatmul.f32.gmra.mxu0 %v3474
        %v3545 = vpop.f32.mrf.mxu0
        %3546 = vmatmul.f32.gmra.mxu0 %v3476
        %v3547 = vpop.f32.mrf.mxu0
        %v3548 = vadd.f32 0.0, %v3547
        %3549 = vmatmul.f32.gmra.mxu0 %v3478
        %v3550 = vpop.f32.mrf.mxu0
        %v3551 = vadd.f32 0.0, %v3550
        %3552 = vmatmul.f32.gmra.mxu0 %v3480
        %v3553 = vpop.f32.mrf.mxu0
        %3554 = vmatmul.f32.gmra.mxu0 %v3482
        %v3555 = vpop.f32.mrf.mxu0
        %v3556 = vadd.f32 0.0, %v3555
        %3557 = vmatmul.f32.gmra.mxu0 %v3484
        %v3558 = vpop.f32.mrf.mxu0
        %v3559 = vadd.f32 0.0, %v3558
        %3560 = vmatmul.f32.gmra.mxu0 %v3486
        %v3561 = vpop.f32.mrf.mxu0
        %3562 = vmatmul.f32.gmra.mxu0 %v3488
        %v3563 = vpop.f32.mrf.mxu0
        %v3564 = vadd.f32 0.0, %v3563
        %3565 = vmatmul.f32.gmra.mxu0 %v3490
        %v3566 = vpop.f32.mrf.mxu0
        %v3567 = vadd.f32 0.0, %v3566
        %3568 = vmatmul.f32.gmra.mxu0 %v3492
        %v3569 = vpop.f32.mrf.mxu0
        %3570 = vmatmul.f32.gmra.mxu0 %v3494
        %v3571 = vpop.f32.mrf.mxu0
        %v3572 = vadd.f32 0.0, %v3571
        %3573 = vmatmul.f32.gmra.mxu0 %v3496
        %v3574 = vpop.f32.mrf.mxu0
        %v3575 = vadd.f32 0.0, %v3574
        %3576 = vmatmul.f32.gmra.mxu0 %v3498
        %v3577 = vpop.f32.mrf.mxu0
        %3578 = vmatmul.f32.gmra.mxu0 %v3500
        %v3579 = vpop.f32.mrf.mxu0
        %v3580 = vadd.f32 0.0, %v3579
        %3581 = vmatmul.f32.gmra.mxu0 %v3502
        %v3582 = vpop.f32.mrf.mxu0
        %v3583 = vadd.f32 0.0, %v3582
        %3584 = vmatmul.f32.gmra.mxu0 %v3504
        %v3585 = vpop.f32.mrf.mxu0
        %3586 = vdwg.mxu0
        %v3588 = vsel %vm279, %v3404, 0
        %v3590 = vsel %vm279, %v3358, 0
        %v3592 = vsel %vm279, %v3360, 0
        %v3594 = vsel %vm279, %v3362, 0
        %v3596 = vsel %vm279, %v3364, 0
        %v3598 = vsel %vm279, %v3366, 0
        %v3600 = vsel %vm279, %v3368, 0
        %v3602 = vsel %vm279, %v3370, 0
        %v3604 = vsel %vm279, %v3372, 0
        %v3606 = vsel %vm279, %v3374, 0
        %v3608 = vsel %vm279, %v3376, 0
        %v3610 = vsel %vm279, %v3378, 0
        %v3612 = vsel %vm279, %v3380, 0
        %v3614 = vsel %vm279, %v3382, 0
        %v3616 = vsel %vm279, %v3384, 0
        %v3618 = vsel %vm279, %v3386, 0
        %v3620 = vsel %vm279, %v3388, 0
        %v3622 = vsel %vm279, %v3390, 0
        %v3624 = vsel %vm279, %v3392, 0
        %v3626 = vsel %vm279, %v3394, 0
        %v3628 = vsel %vm279, %v3396, 0
        %v3630 = vsel %vm279, %v3398, 0
        %v3632 = vsel %vm279, %v3400, 0
        %v3634 = vsel %vm279, %v3402, 0
        %3636 = vmatpush.msra.mxu0 0.0
        %3637 = vmatpush.msra.mxu0 0.0
        %3638 = vmatpush.msra.mxu0 0.0
        %3639 = vmatpush.msra.mxu0 0.0
        %3640 = vmatpush.msra.mxu0 0.0
        %3641 = vmatpush.msra.mxu0 0.0
        %3642 = vmatpush.msra.mxu0 0.0
        %3643 = vmatpush.msra.mxu0 0.0
        %3644 = vmatpush.msra.mxu0 0.0
        %3645 = vmatpush.msra.mxu0 0.0
        %3646 = vmatpush.msra.mxu0 0.0
        %3647 = vmatpush.msra.mxu0 0.0
        %3648 = vmatpush.msra.mxu0 0.0
        %3649 = vmatpush.msra.mxu0 0.0
        %3650 = vmatpush.msra.mxu0 0.0
        %3651 = vmatpush.msra.mxu0 %v3455
        %3652 = vmatmul.f32.gmra.mxu0 %v3588
        %v3653 = vpop.f32.mrf.mxu0
        %v3654 = vadd.f32 %v3524, %v3653
        %3655 = vmatmul.f32.gmra.mxu0 %v3590
        %v3656 = vpop.f32.mrf.mxu0
        %v3657 = vadd.f32 %v3527, %v3656
        %3658 = vmatmul.f32.gmra.mxu0 %v3592
        %v3659 = vpop.f32.mrf.mxu0
        %3660 = vmatmul.f32.gmra.mxu0 %v3594
        %v3661 = vpop.f32.mrf.mxu0
        %v3662 = vadd.f32 %v3532, %v3661
        %3663 = vmatmul.f32.gmra.mxu0 %v3596
        %v3664 = vpop.f32.mrf.mxu0
        %v3665 = vadd.f32 %v3535, %v3664
        %3666 = vmatmul.f32.gmra.mxu0 %v3598
        %v3667 = vpop.f32.mrf.mxu0
        %3668 = vmatmul.f32.gmra.mxu0 %v3600
        %v3669 = vpop.f32.mrf.mxu0
        %v3670 = vadd.f32 %v3540, %v3669
        %3671 = vmatmul.f32.gmra.mxu0 %v3602
        %v3672 = vpop.f32.mrf.mxu0
        %v3673 = vadd.f32 %v3543, %v3672
        %3674 = vmatmul.f32.gmra.mxu0 %v3604
        %v3675 = vpop.f32.mrf.mxu0
        %3676 = vmatmul.f32.gmra.mxu0 %v3606
        %v3677 = vpop.f32.mrf.mxu0
        %v3678 = vadd.f32 %v3548, %v3677
        %3679 = vmatmul.f32.gmra.mxu0 %v3608
        %v3680 = vpop.f32.mrf.mxu0
        %v3681 = vadd.f32 %v3551, %v3680
        %3682 = vmatmul.f32.gmra.mxu0 %v3610
        %v3683 = vpop.f32.mrf.mxu0
        %3684 = vmatmul.f32.gmra.mxu0 %v3612
        %v3685 = vpop.f32.mrf.mxu0
        %v3686 = vadd.f32 %v3556, %v3685
        %3687 = vmatmul.f32.gmra.mxu0 %v3614
        %v3688 = vpop.f32.mrf.mxu0
        %v3689 = vadd.f32 %v3559, %v3688
        %3690 = vmatmul.f32.gmra.mxu0 %v3616
        %v3691 = vpop.f32.mrf.mxu0
        %3692 = vmatmul.f32.gmra.mxu0 %v3618
        %v3693 = vpop.f32.mrf.mxu0
        %v3694 = vadd.f32 %v3564, %v3693
        %3695 = vmatmul.f32.gmra.mxu0 %v3620
        %v3696 = vpop.f32.mrf.mxu0
        %v3697 = vadd.f32 %v3567, %v3696
        %3698 = vmatmul.f32.gmra.mxu0 %v3622
        %v3699 = vpop.f32.mrf.mxu0
        %3700 = vmatmul.f32.gmra.mxu0 %v3624
        %v3701 = vpop.f32.mrf.mxu0
        %v3702 = vadd.f32 %v3572, %v3701
        %3703 = vmatmul.f32.gmra.mxu0 %v3626
        %v3704 = vpop.f32.mrf.mxu0
        %v3705 = vadd.f32 %v3575, %v3704
        %3706 = vmatmul.f32.gmra.mxu0 %v3628
        %v3707 = vpop.f32.mrf.mxu0
        %3708 = vmatmul.f32.gmra.mxu0 %v3630
        %v3709 = vpop.f32.mrf.mxu0
        %v3710 = vadd.f32 %v3580, %v3709
        %3711 = vmatmul.f32.gmra.mxu0 %v3632
        %v3712 = vpop.f32.mrf.mxu0
        %v3713 = vadd.f32 %v3583, %v3712
        %3714 = vmatmul.f32.gmra.mxu0 %v3634
        %v3715 = vpop.f32.mrf.mxu0
        %3716 = vdwg.mxu0
        %s3717 = scalar_lea.vmem %s2, 16
        %v3718 = vld [vmem:[%s3717] sm:$0xff]
        %v3719 = vsel %vm279, %v3408, 0
        %v3721 = vsel %vm279, %v3410, 0
        %v3723 = vsel %vm279, %v3412, 0
        %v3725 = vsel %vm279, %v3414, 0
        %v3727 = vsel %vm279, %v3416, 0
        %v3729 = vsel %vm279, %v3418, 0
        %v3731 = vsel %vm279, %v3420, 0
        %v3733 = vsel %vm279, %v3422, 0
        %v3735 = vsel %vm279, %v3424, 0
        %v3737 = vsel %vm279, %v3426, 0
        %v3739 = vsel %vm279, %v3428, 0
        %v3741 = vsel %vm279, %v3430, 0
        %v3743 = vsel %vm279, %v3432, 0
        %v3745 = vsel %vm279, %v3434, 0
        %v3747 = vsel %vm279, %v3436, 0
        %v3749 = vsel %vm279, %v3438, 0
        %v3751 = vsel %vm279, %v3440, 0
        %v3753 = vsel %vm279, %v3442, 0
        %v3755 = vsel %vm279, %v3444, 0
        %v3757 = vsel %vm279, %v3446, 0
        %v3759 = vsel %vm279, %v3448, 0
        %v3761 = vsel %vm279, %v3450, 0
        %v3763 = vsel %vm279, %v3452, 0
        %v3766 = vsel %vm279, %v3454, 0
        %3768 = vmatpush.msra.mxu0 0.0
        %3769 = vmatpush.msra.mxu0 0.0
        %3770 = vmatpush.msra.mxu0 0.0
        %3771 = vmatpush.msra.mxu0 0.0
        %3772 = vmatpush.msra.mxu0 0.0
        %3773 = vmatpush.msra.mxu0 0.0
        %3774 = vmatpush.msra.mxu0 0.0
        %3775 = vmatpush.msra.mxu0 0.0
        %3776 = vmatpush.msra.mxu0 0.0
        %3777 = vmatpush.msra.mxu0 0.0
        %3778 = vmatpush.msra.mxu0 0.0
        %3779 = vmatpush.msra.mxu0 0.0
        %3780 = vmatpush.msra.mxu0 0.0
        %3781 = vmatpush.msra.mxu0 0.0
        %3782 = vmatpush.msra.mxu0 0.0
        %3783 = vmatpush.msra.mxu0 %v3718
        %3784 = vmatmul.f32.gmra.mxu0 %v3719
        %v3785 = vpop.f32.mrf.mxu0
        %v3786 = vadd.f32 0.0, %v3785
        %3787 = vmatmul.f32.gmra.mxu0 %v3721
        %v3788 = vpop.f32.mrf.mxu0
        %v3789 = vadd.f32 0.0, %v3788
        %3790 = vmatmul.f32.gmra.mxu0 %v3723
        %v3791 = vpop.f32.mrf.mxu0
        %3792 = vmatmul.f32.gmra.mxu0 %v3725
        %v3793 = vpop.f32.mrf.mxu0
        %v3794 = vadd.f32 0.0, %v3793
        %3795 = vmatmul.f32.gmra.mxu0 %v3727
        %v3796 = vpop.f32.mrf.mxu0
        %v3797 = vadd.f32 0.0, %v3796
        %3798 = vmatmul.f32.gmra.mxu0 %v3729
        %v3799 = vpop.f32.mrf.mxu0
        %3800 = vmatmul.f32.gmra.mxu0 %v3731
        %v3801 = vpop.f32.mrf.mxu0
        %v3802 = vadd.f32 0.0, %v3801
        %3803 = vmatmul.f32.gmra.mxu0 %v3733
        %v3804 = vpop.f32.mrf.mxu0
        %v3805 = vadd.f32 0.0, %v3804
        %3806 = vmatmul.f32.gmra.mxu0 %v3735
        %v3807 = vpop.f32.mrf.mxu0
        %3808 = vmatmul.f32.gmra.mxu0 %v3737
        %v3809 = vpop.f32.mrf.mxu0
        %v3810 = vadd.f32 0.0, %v3809
        %3811 = vmatmul.f32.gmra.mxu0 %v3739
        %v3812 = vpop.f32.mrf.mxu0
        %v3813 = vadd.f32 0.0, %v3812
        %3814 = vmatmul.f32.gmra.mxu0 %v3741
        %v3815 = vpop.f32.mrf.mxu0
        %3816 = vmatmul.f32.gmra.mxu0 %v3743
        %v3817 = vpop.f32.mrf.mxu0
        %v3818 = vadd.f32 0.0, %v3817
        %3819 = vmatmul.f32.gmra.mxu0 %v3745
        %v3820 = vpop.f32.mrf.mxu0
        %v3821 = vadd.f32 0.0, %v3820
        %3822 = vmatmul.f32.gmra.mxu0 %v3747
        %v3823 = vpop.f32.mrf.mxu0
        %3824 = vmatmul.f32.gmra.mxu0 %v3749
        %v3825 = vpop.f32.mrf.mxu0
        %v3826 = vadd.f32 0.0, %v3825
        %3827 = vmatmul.f32.gmra.mxu0 %v3751
        %v3828 = vpop.f32.mrf.mxu0
        %v3829 = vadd.f32 0.0, %v3828
        %3830 = vmatmul.f32.gmra.mxu0 %v3753
        %v3831 = vpop.f32.mrf.mxu0
        %3832 = vmatmul.f32.gmra.mxu0 %v3755
        %v3833 = vpop.f32.mrf.mxu0
        %v3834 = vadd.f32 0.0, %v3833
        %3835 = vmatmul.f32.gmra.mxu0 %v3757
        %v3836 = vpop.f32.mrf.mxu0
        %v3837 = vadd.f32 0.0, %v3836
        %3838 = vmatmul.f32.gmra.mxu0 %v3759
        %v3839 = vpop.f32.mrf.mxu0
        %3840 = vmatmul.f32.gmra.mxu0 %v3761
        %v3841 = vpop.f32.mrf.mxu0
        %v3842 = vadd.f32 0.0, %v3841
        %3843 = vmatmul.f32.gmra.mxu0 %v3763
        %v3844 = vpop.f32.mrf.mxu0
        %v3845 = vadd.f32 0.0, %v3844
        %3846 = vmatmul.f32.gmra.mxu0 %v3766
        %v3847 = vpop.f32.mrf.mxu0
        %3848 = vdwg.mxu0
        %v3849 = vadd.f32 %v3654, %v3786
        %v3850 = vadd.f32 %v3657, %v3789
        %v3851 = vadd.f32 %v3662, %v3794
        %v3852 = vadd.f32 %v3665, %v3797
        %v3853 = vadd.f32 %v3670, %v3802
        %v3854 = vadd.f32 %v3673, %v3805
        %v3855 = vadd.f32 %v3678, %v3810
        %v3856 = vadd.f32 %v3681, %v3813
        %v3857 = vadd.f32 %v3686, %v3818
        %v3858 = vadd.f32 %v3689, %v3821
        %v3859 = vadd.f32 %v3694, %v3826
        %v3860 = vadd.f32 %v3697, %v3829
        %v3861 = vadd.f32 %v3702, %v3834
        %v3862 = vadd.f32 %v3705, %v3837
        %v3863 = vadd.f32 %v3710, %v3842
        %v3864 = vadd.f32 %v3713, %v3845
        %s3865 = sadd.s32 %s3304, 1
        %s3866 = smul.u32 %s3865, 24
        %s3867 = scalar_lea.vmem [#allocation3], %s3866
        %v3868 = vld [vmem:[%s3867] sm:$0xff]
        %v3869 = vld [vmem:[%s3867 + $0x8] sm:$0xff]
        %v3870 = vld [vmem:[%s3867 + $0x10] sm:$0xff]
        %v3871 = vld [vmem:[%s3867 + $0x18] sm:$0xff]
        %v3872 = vld [vmem:[%s3867 + $0x20] sm:$0xff]
        %v3873 = vld [vmem:[%s3867 + $0x28] sm:$0xff]
        %v3874 = vld [vmem:[%s3867 + $0x30] sm:$0xff]
        %v3875 = vld [vmem:[%s3867 + $0x38] sm:$0xff]
        %v3876 = vld [vmem:[%s3867 + $0x40] sm:$0xff]
        %v3877 = vld [vmem:[%s3867 + $0x48] sm:$0xff]
        %v3878 = vld [vmem:[%s3867 + $0x50] sm:$0xff]
        %v3879 = vld [vmem:[%s3867 + $0x58] sm:$0xff]
        %v3880 = vld [vmem:[%s3867 + $0x60] sm:$0xff]
        %v3881 = vld [vmem:[%s3867 + $0x68] sm:$0xff]
        %v3882 = vld [vmem:[%s3867 + $0x70] sm:$0xff]
        %v3883 = vld [vmem:[%s3867 + $0x78] sm:$0xff]
        %v3884 = vld [vmem:[%s3867 + $0x80] sm:$0xff]
        %v3885 = vld [vmem:[%s3867 + $0x88] sm:$0xff]
        %v3886 = vld [vmem:[%s3867 + $0x90] sm:$0xff]
        %v3887 = vld [vmem:[%s3867 + $0x98] sm:$0xff]
        %v3888 = vld [vmem:[%s3867 + $0xa0] sm:$0xff]
        %v3889 = vld [vmem:[%s3867 + $0xa8] sm:$0xff]
        %v3890 = vld [vmem:[%s3867 + $0xb0] sm:$0xff]
        %v3891 = vld [vmem:[%s3867 + $0xb8] sm:$0xff]
        %v3916 = vrot.slane %v3868, 7
        %v3917 = vrot.slane %v3869, 7
        %v3918 = vsel %vm3355, %v3916, %v3917
        %v3919 = vrot.slane %v3870, 7
        %v3920 = vsel %vm3355, %v3917, %v3919
        %v3921 = vrot.slane %v3871, 7
        %v3922 = vsel %vm3355, %v3919, %v3921
        %v3923 = vrot.slane %v3872, 7
        %v3924 = vsel %vm3355, %v3921, %v3923
        %v3925 = vrot.slane %v3873, 7
        %v3926 = vsel %vm3355, %v3923, %v3925
        %v3927 = vrot.slane %v3874, 7
        %v3928 = vsel %vm3355, %v3925, %v3927
        %v3929 = vrot.slane %v3875, 7
        %v3930 = vsel %vm3355, %v3927, %v3929
        %v3931 = vrot.slane %v3876, 7
        %v3932 = vsel %vm3355, %v3929, %v3931
        %v3933 = vrot.slane %v3877, 7
        %v3934 = vsel %vm3355, %v3931, %v3933
        %v3935 = vrot.slane %v3878, 7
        %v3936 = vsel %vm3355, %v3933, %v3935
        %v3937 = vrot.slane %v3879, 7
        %v3938 = vsel %vm3355, %v3935, %v3937
        %v3939 = vrot.slane %v3880, 7
        %v3940 = vsel %vm3355, %v3937, %v3939
        %v3941 = vrot.slane %v3881, 7
        %v3942 = vsel %vm3355, %v3939, %v3941
        %v3943 = vrot.slane %v3882, 7
        %v3944 = vsel %vm3355, %v3941, %v3943
        %v3945 = vrot.slane %v3883, 7
        %v3946 = vsel %vm3355, %v3943, %v3945
        %v3947 = vrot.slane %v3884, 7
        %v3948 = vsel %vm3355, %v3945, %v3947
        %v3949 = vrot.slane %v3885, 7
        %v3950 = vsel %vm3355, %v3947, %v3949
        %v3951 = vrot.slane %v3886, 7
        %v3952 = vsel %vm3355, %v3949, %v3951
        %v3953 = vrot.slane %v3887, 7
        %v3954 = vsel %vm3355, %v3951, %v3953
        %v3955 = vrot.slane %v3888, 7
        %v3956 = vsel %vm3355, %v3953, %v3955
        %v3957 = vrot.slane %v3889, 7
        %v3958 = vsel %vm3355, %v3955, %v3957
        %v3959 = vrot.slane %v3890, 7
        %v3960 = vsel %vm3355, %v3957, %v3959
        %v3961 = vrot.slane %v3891, 7
        %v3962 = vsel %vm3355, %v3959, %v3961
        %v3964 = vsel %vm3355, 0.0, %v3916
        %v3965 = vrot.slane %v3868, 1
        %v3966 = vrot.slane %v3869, 1
        %v3967 = vsel %vm3405, %v3965, %v3966
        %v3968 = vrot.slane %v3870, 1
        %v3969 = vsel %vm3405, %v3966, %v3968
        %v3970 = vrot.slane %v3871, 1
        %v3971 = vsel %vm3405, %v3968, %v3970
        %v3972 = vrot.slane %v3872, 1
        %v3973 = vsel %vm3405, %v3970, %v3972
        %v3974 = vrot.slane %v3873, 1
        %v3975 = vsel %vm3405, %v3972, %v3974
        %v3976 = vrot.slane %v3874, 1
        %v3977 = vsel %vm3405, %v3974, %v3976
        %v3978 = vrot.slane %v3875, 1
        %v3979 = vsel %vm3405, %v3976, %v3978
        %v3980 = vrot.slane %v3876, 1
        %v3981 = vsel %vm3405, %v3978, %v3980
        %v3982 = vrot.slane %v3877, 1
        %v3983 = vsel %vm3405, %v3980, %v3982
        %v3984 = vrot.slane %v3878, 1
        %v3985 = vsel %vm3405, %v3982, %v3984
        %v3986 = vrot.slane %v3879, 1
        %v3987 = vsel %vm3405, %v3984, %v3986
        %v3988 = vrot.slane %v3880, 1
        %v3989 = vsel %vm3405, %v3986, %v3988
        %v3990 = vrot.slane %v3881, 1
        %v3991 = vsel %vm3405, %v3988, %v3990
        %v3992 = vrot.slane %v3882, 1
        %v3993 = vsel %vm3405, %v3990, %v3992
        %v3994 = vrot.slane %v3883, 1
        %v3995 = vsel %vm3405, %v3992, %v3994
        %v3996 = vrot.slane %v3884, 1
        %v3997 = vsel %vm3405, %v3994, %v3996
        %v3998 = vrot.slane %v3885, 1
        %v3999 = vsel %vm3405, %v3996, %v3998
        %v4000 = vrot.slane %v3886, 1
        %v4001 = vsel %vm3405, %v3998, %v4000
        %v4002 = vrot.slane %v3887, 1
        %v4003 = vsel %vm3405, %v4000, %v4002
        %v4004 = vrot.slane %v3888, 1
        %v4005 = vsel %vm3405, %v4002, %v4004
        %v4006 = vrot.slane %v3889, 1
        %v4007 = vsel %vm3405, %v4004, %v4006
        %v4008 = vrot.slane %v3890, 1
        %v4009 = vsel %vm3405, %v4006, %v4008
        %v4010 = vrot.slane %v3891, 1
        %v4011 = vsel %vm3405, %v4008, %v4010
        %v4013 = vsel %vm3405, %v4010, 0.0
        %s4014 = scalar_lea.vmem %s2, 24
        %v4015 = vld [vmem:[%s4014] sm:$0xff]
        %v4017 = vsel %vm279, %v3964, 0
        %v4019 = vsel %vm279, %v3918, 0
        %v4021 = vsel %vm279, %v3920, 0
        %v4023 = vsel %vm279, %v3922, 0
        %v4025 = vsel %vm279, %v3924, 0
        %v4027 = vsel %vm279, %v3926, 0
        %v4029 = vsel %vm279, %v3928, 0
        %v4031 = vsel %vm279, %v3930, 0
        %v4033 = vsel %vm279, %v3932, 0
        %v4035 = vsel %vm279, %v3934, 0
        %v4037 = vsel %vm279, %v3936, 0
        %v4039 = vsel %vm279, %v3938, 0
        %v4041 = vsel %vm279, %v3940, 0
        %v4043 = vsel %vm279, %v3942, 0
        %v4045 = vsel %vm279, %v3944, 0
        %v4047 = vsel %vm279, %v3946, 0
        %v4049 = vsel %vm279, %v3948, 0
        %v4051 = vsel %vm279, %v3950, 0
        %v4053 = vsel %vm279, %v3952, 0
        %v4055 = vsel %vm279, %v3954, 0
        %v4057 = vsel %vm279, %v3956, 0
        %v4059 = vsel %vm279, %v3958, 0
        %v4061 = vsel %vm279, %v3960, 0
        %v4063 = vsel %vm279, %v3962, 0
        %4065 = vmatpush.msra.mxu0 0.0
        %4066 = vmatpush.msra.mxu0 0.0
        %4067 = vmatpush.msra.mxu0 0.0
        %4068 = vmatpush.msra.mxu0 0.0
        %4069 = vmatpush.msra.mxu0 0.0
        %4070 = vmatpush.msra.mxu0 0.0
        %4071 = vmatpush.msra.mxu0 0.0
        %4072 = vmatpush.msra.mxu0 0.0
        %4073 = vmatpush.msra.mxu0 0.0
        %4074 = vmatpush.msra.mxu0 0.0
        %4075 = vmatpush.msra.mxu0 0.0
        %4076 = vmatpush.msra.mxu0 0.0
        %4077 = vmatpush.msra.mxu0 0.0
        %4078 = vmatpush.msra.mxu0 0.0
        %4079 = vmatpush.msra.mxu0 0.0
        %4080 = vmatpush.msra.mxu0 %v4015
        %4081 = vmatmul.f32.gmra.mxu0 %v4017
        %v4082 = vpop.f32.mrf.mxu0
        %v4083 = vadd.f32 0.0, %v4082
        %4084 = vmatmul.f32.gmra.mxu0 %v4019
        %v4085 = vpop.f32.mrf.mxu0
        %v4086 = vadd.f32 0.0, %v4085
        %4087 = vmatmul.f32.gmra.mxu0 %v4021
        %v4088 = vpop.f32.mrf.mxu0
        %4089 = vmatmul.f32.gmra.mxu0 %v4023
        %v4090 = vpop.f32.mrf.mxu0
        %v4091 = vadd.f32 0.0, %v4090
        %4092 = vmatmul.f32.gmra.mxu0 %v4025
        %v4093 = vpop.f32.mrf.mxu0
        %v4094 = vadd.f32 0.0, %v4093
        %4095 = vmatmul.f32.gmra.mxu0 %v4027
        %v4096 = vpop.f32.mrf.mxu0
        %4097 = vmatmul.f32.gmra.mxu0 %v4029
        %v4098 = vpop.f32.mrf.mxu0
        %v4099 = vadd.f32 0.0, %v4098
        %4100 = vmatmul.f32.gmra.mxu0 %v4031
        %v4101 = vpop.f32.mrf.mxu0
        %v4102 = vadd.f32 0.0, %v4101
        %4103 = vmatmul.f32.gmra.mxu0 %v4033
        %v4104 = vpop.f32.mrf.mxu0
        %4105 = vmatmul.f32.gmra.mxu0 %v4035
        %v4106 = vpop.f32.mrf.mxu0
        %v4107 = vadd.f32 0.0, %v4106
        %4108 = vmatmul.f32.gmra.mxu0 %v4037
        %v4109 = vpop.f32.mrf.mxu0
        %v4110 = vadd.f32 0.0, %v4109
        %4111 = vmatmul.f32.gmra.mxu0 %v4039
        %v4112 = vpop.f32.mrf.mxu0
        %4113 = vmatmul.f32.gmra.mxu0 %v4041
        %v4114 = vpop.f32.mrf.mxu0
        %v4115 = vadd.f32 0.0, %v4114
        %4116 = vmatmul.f32.gmra.mxu0 %v4043
        %v4117 = vpop.f32.mrf.mxu0
        %v4118 = vadd.f32 0.0, %v4117
        %4119 = vmatmul.f32.gmra.mxu0 %v4045
        %v4120 = vpop.f32.mrf.mxu0
        %4121 = vmatmul.f32.gmra.mxu0 %v4047
        %v4122 = vpop.f32.mrf.mxu0
        %v4123 = vadd.f32 0.0, %v4122
        %4124 = vmatmul.f32.gmra.mxu0 %v4049
        %v4125 = vpop.f32.mrf.mxu0
        %v4126 = vadd.f32 0.0, %v4125
        %4127 = vmatmul.f32.gmra.mxu0 %v4051
        %v4128 = vpop.f32.mrf.mxu0
        %4129 = vmatmul.f32.gmra.mxu0 %v4053
        %v4130 = vpop.f32.mrf.mxu0
        %v4131 = vadd.f32 0.0, %v4130
        %4132 = vmatmul.f32.gmra.mxu0 %v4055
        %v4133 = vpop.f32.mrf.mxu0
        %v4134 = vadd.f32 0.0, %v4133
        %4135 = vmatmul.f32.gmra.mxu0 %v4057
        %v4136 = vpop.f32.mrf.mxu0
        %4137 = vmatmul.f32.gmra.mxu0 %v4059
        %v4138 = vpop.f32.mrf.mxu0
        %v4139 = vadd.f32 0.0, %v4138
        %4140 = vmatmul.f32.gmra.mxu0 %v4061
        %v4141 = vpop.f32.mrf.mxu0
        %v4142 = vadd.f32 0.0, %v4141
        %4143 = vmatmul.f32.gmra.mxu0 %v4063
        %v4144 = vpop.f32.mrf.mxu0
        %4145 = vdwg.mxu0
        %v4146 = vadd.f32 %v3849, %v4083
        %v4147 = vadd.f32 %v3850, %v4086
        %v4148 = vadd.f32 %v3851, %v4091
        %v4149 = vadd.f32 %v3852, %v4094
        %v4150 = vadd.f32 %v3853, %v4099
        %v4151 = vadd.f32 %v3854, %v4102
        %v4152 = vadd.f32 %v3855, %v4107
        %v4153 = vadd.f32 %v3856, %v4110
        %v4154 = vadd.f32 %v3857, %v4115
        %v4155 = vadd.f32 %v3858, %v4118
        %v4156 = vadd.f32 %v3859, %v4123
        %v4157 = vadd.f32 %v3860, %v4126
        %v4158 = vadd.f32 %v3861, %v4131
        %v4159 = vadd.f32 %v3862, %v4134
        %v4160 = vadd.f32 %v3863, %v4139
        %v4161 = vadd.f32 %v3864, %v4142
        %s4162 = scalar_lea.vmem %s2, 32
        %v4163 = vld [vmem:[%s4162] sm:$0xff]
        %v4164 = vsel %vm279, %v3868, 0
        %v4166 = vsel %vm279, %v3869, 0
        %v4168 = vsel %vm279, %v3870, 0
        %v4170 = vsel %vm279, %v3871, 0
        %v4172 = vsel %vm279, %v3872, 0
        %v4174 = vsel %vm279, %v3873, 0
        %v4176 = vsel %vm279, %v3874, 0
        %v4178 = vsel %vm279, %v3875, 0
        %v4180 = vsel %vm279, %v3876, 0
        %v4182 = vsel %vm279, %v3877, 0
        %v4184 = vsel %vm279, %v3878, 0
        %v4186 = vsel %vm279, %v3879, 0
        %v4188 = vsel %vm279, %v3880, 0
        %v4190 = vsel %vm279, %v3881, 0
        %v4192 = vsel %vm279, %v3882, 0
        %v4194 = vsel %vm279, %v3883, 0
        %v4196 = vsel %vm279, %v3884, 0
        %v4198 = vsel %vm279, %v3885, 0
        %v4200 = vsel %vm279, %v3886, 0
        %v4202 = vsel %vm279, %v3887, 0
        %v4204 = vsel %vm279, %v3888, 0
        %v4206 = vsel %vm279, %v3889, 0
        %v4208 = vsel %vm279, %v3890, 0
        %v4210 = vsel %vm279, %v3891, 0
        %4212 = vmatpush.msra.mxu0 0.0
        %4213 = vmatpush.msra.mxu0 0.0
        %4214 = vmatpush.msra.mxu0 0.0
        %4215 = vmatpush.msra.mxu0 0.0
        %4216 = vmatpush.msra.mxu0 0.0
        %4217 = vmatpush.msra.mxu0 0.0
        %4218 = vmatpush.msra.mxu0 0.0
        %4219 = vmatpush.msra.mxu0 0.0
        %4220 = vmatpush.msra.mxu0 0.0
        %4221 = vmatpush.msra.mxu0 0.0
        %4222 = vmatpush.msra.mxu0 0.0
        %4223 = vmatpush.msra.mxu0 0.0
        %4224 = vmatpush.msra.mxu0 0.0
        %4225 = vmatpush.msra.mxu0 0.0
        %4226 = vmatpush.msra.mxu0 0.0
        %4227 = vmatpush.msra.mxu0 %v4163
        %4228 = vmatmul.f32.gmra.mxu0 %v4164
        %v4229 = vpop.f32.mrf.mxu0
        %v4230 = vadd.f32 0.0, %v4229
        %4231 = vmatmul.f32.gmra.mxu0 %v4166
        %v4232 = vpop.f32.mrf.mxu0
        %v4233 = vadd.f32 0.0, %v4232
        %4234 = vmatmul.f32.gmra.mxu0 %v4168
        %v4235 = vpop.f32.mrf.mxu0
        %4236 = vmatmul.f32.gmra.mxu0 %v4170
        %v4237 = vpop.f32.mrf.mxu0
        %v4238 = vadd.f32 0.0, %v4237
        %4239 = vmatmul.f32.gmra.mxu0 %v4172
        %v4240 = vpop.f32.mrf.mxu0
        %v4241 = vadd.f32 0.0, %v4240
        %4242 = vmatmul.f32.gmra.mxu0 %v4174
        %v4243 = vpop.f32.mrf.mxu0
        %4244 = vmatmul.f32.gmra.mxu0 %v4176
        %v4245 = vpop.f32.mrf.mxu0
        %v4246 = vadd.f32 0.0, %v4245
        %4247 = vmatmul.f32.gmra.mxu0 %v4178
        %v4248 = vpop.f32.mrf.mxu0
        %v4249 = vadd.f32 0.0, %v4248
        %4250 = vmatmul.f32.gmra.mxu0 %v4180
        %v4251 = vpop.f32.mrf.mxu0
        %4252 = vmatmul.f32.gmra.mxu0 %v4182
        %v4253 = vpop.f32.mrf.mxu0
        %v4254 = vadd.f32 0.0, %v4253
        %4255 = vmatmul.f32.gmra.mxu0 %v4184
        %v4256 = vpop.f32.mrf.mxu0
        %v4257 = vadd.f32 0.0, %v4256
        %4258 = vmatmul.f32.gmra.mxu0 %v4186
        %v4259 = vpop.f32.mrf.mxu0
        %4260 = vmatmul.f32.gmra.mxu0 %v4188
        %v4261 = vpop.f32.mrf.mxu0
        %v4262 = vadd.f32 0.0, %v4261
        %4263 = vmatmul.f32.gmra.mxu0 %v4190
        %v4264 = vpop.f32.mrf.mxu0
        %v4265 = vadd.f32 0.0, %v4264
        %4266 = vmatmul.f32.gmra.mxu0 %v4192
        %v4267 = vpop.f32.mrf.mxu0
        %4268 = vmatmul.f32.gmra.mxu0 %v4194
        %v4269 = vpop.f32.mrf.mxu0
        %v4270 = vadd.f32 0.0, %v4269
        %4271 = vmatmul.f32.gmra.mxu0 %v4196
        %v4272 = vpop.f32.mrf.mxu0
        %v4273 = vadd.f32 0.0, %v4272
        %4274 = vmatmul.f32.gmra.mxu0 %v4198
        %v4275 = vpop.f32.mrf.mxu0
        %4276 = vmatmul.f32.gmra.mxu0 %v4200
        %v4277 = vpop.f32.mrf.mxu0
        %v4278 = vadd.f32 0.0, %v4277
        %4279 = vmatmul.f32.gmra.mxu0 %v4202
        %v4280 = vpop.f32.mrf.mxu0
        %v4281 = vadd.f32 0.0, %v4280
        %4282 = vmatmul.f32.gmra.mxu0 %v4204
        %v4283 = vpop.f32.mrf.mxu0
        %4284 = vmatmul.f32.gmra.mxu0 %v4206
        %v4285 = vpop.f32.mrf.mxu0
        %v4286 = vadd.f32 0.0, %v4285
        %4287 = vmatmul.f32.gmra.mxu0 %v4208
        %v4288 = vpop.f32.mrf.mxu0
        %v4289 = vadd.f32 0.0, %v4288
        %4290 = vmatmul.f32.gmra.mxu0 %v4210
        %v4291 = vpop.f32.mrf.mxu0
        %4292 = vdwg.mxu0
        %v4293 = vadd.f32 %v4146, %v4230
        %v4294 = vadd.f32 %v4147, %v4233
        %v4295 = vadd.f32 %v4148, %v4238
        %v4296 = vadd.f32 %v4149, %v4241
        %v4297 = vadd.f32 %v4150, %v4246
        %v4298 = vadd.f32 %v4151, %v4249
        %v4299 = vadd.f32 %v4152, %v4254
        %v4300 = vadd.f32 %v4153, %v4257
        %v4301 = vadd.f32 %v4154, %v4262
        %v4302 = vadd.f32 %v4155, %v4265
        %v4303 = vadd.f32 %v4156, %v4270
        %v4304 = vadd.f32 %v4157, %v4273
        %v4305 = vadd.f32 %v4158, %v4278
        %v4306 = vadd.f32 %v4159, %v4281
        %v4307 = vadd.f32 %v4160, %v4286
        %v4308 = vadd.f32 %v4161, %v4289
        %s4309 = scalar_lea.vmem %s2, 40
        %v4310 = vld [vmem:[%s4309] sm:$0xff]
        %v4311 = vsel %vm279, %v3967, 0
        %v4313 = vsel %vm279, %v3969, 0
        %v4315 = vsel %vm279, %v3971, 0
        %v4317 = vsel %vm279, %v3973, 0
        %v4319 = vsel %vm279, %v3975, 0
        %v4321 = vsel %vm279, %v3977, 0
        %v4323 = vsel %vm279, %v3979, 0
        %v4325 = vsel %vm279, %v3981, 0
        %v4327 = vsel %vm279, %v3983, 0
        %v4329 = vsel %vm279, %v3985, 0
        %v4331 = vsel %vm279, %v3987, 0
        %v4333 = vsel %vm279, %v3989, 0
        %v4335 = vsel %vm279, %v3991, 0
        %v4337 = vsel %vm279, %v3993, 0
        %v4339 = vsel %vm279, %v3995, 0
        %v4341 = vsel %vm279, %v3997, 0
        %v4343 = vsel %vm279, %v3999, 0
        %v4345 = vsel %vm279, %v4001, 0
        %v4347 = vsel %vm279, %v4003, 0
        %v4349 = vsel %vm279, %v4005, 0
        %v4351 = vsel %vm279, %v4007, 0
        %v4353 = vsel %vm279, %v4009, 0
        %v4355 = vsel %vm279, %v4011, 0
        %v4358 = vsel %vm279, %v4013, 0
        %4360 = vmatpush.msra.mxu0 0.0
        %4361 = vmatpush.msra.mxu0 0.0
        %4362 = vmatpush.msra.mxu0 0.0
        %4363 = vmatpush.msra.mxu0 0.0
        %4364 = vmatpush.msra.mxu0 0.0
        %4365 = vmatpush.msra.mxu0 0.0
        %4366 = vmatpush.msra.mxu0 0.0
        %4367 = vmatpush.msra.mxu0 0.0
        %4368 = vmatpush.msra.mxu0 0.0
        %4369 = vmatpush.msra.mxu0 0.0
        %4370 = vmatpush.msra.mxu0 0.0
        %4371 = vmatpush.msra.mxu0 0.0
        %4372 = vmatpush.msra.mxu0 0.0
        %4373 = vmatpush.msra.mxu0 0.0
        %4374 = vmatpush.msra.mxu0 0.0
        %4375 = vmatpush.msra.mxu0 %v4310
        %4376 = vmatmul.f32.gmra.mxu0 %v4311
        %v4377 = vpop.f32.mrf.mxu0
        %v4378 = vadd.f32 0.0, %v4377
        %4379 = vmatmul.f32.gmra.mxu0 %v4313
        %v4380 = vpop.f32.mrf.mxu0
        %v4381 = vadd.f32 0.0, %v4380
        %4382 = vmatmul.f32.gmra.mxu0 %v4315
        %v4383 = vpop.f32.mrf.mxu0
        %4384 = vmatmul.f32.gmra.mxu0 %v4317
        %v4385 = vpop.f32.mrf.mxu0
        %v4386 = vadd.f32 0.0, %v4385
        %4387 = vmatmul.f32.gmra.mxu0 %v4319
        %v4388 = vpop.f32.mrf.mxu0
        %v4389 = vadd.f32 0.0, %v4388
        %4390 = vmatmul.f32.gmra.mxu0 %v4321
        %v4391 = vpop.f32.mrf.mxu0
        %4392 = vmatmul.f32.gmra.mxu0 %v4323
        %v4393 = vpop.f32.mrf.mxu0
        %v4394 = vadd.f32 0.0, %v4393
        %4395 = vmatmul.f32.gmra.mxu0 %v4325
        %v4396 = vpop.f32.mrf.mxu0
        %v4397 = vadd.f32 0.0, %v4396
        %4398 = vmatmul.f32.gmra.mxu0 %v4327
        %v4399 = vpop.f32.mrf.mxu0
        %4400 = vmatmul.f32.gmra.mxu0 %v4329
        %v4401 = vpop.f32.mrf.mxu0
        %v4402 = vadd.f32 0.0, %v4401
        %4403 = vmatmul.f32.gmra.mxu0 %v4331
        %v4404 = vpop.f32.mrf.mxu0
        %v4405 = vadd.f32 0.0, %v4404
        %4406 = vmatmul.f32.gmra.mxu0 %v4333
        %v4407 = vpop.f32.mrf.mxu0
        %4408 = vmatmul.f32.gmra.mxu0 %v4335
        %v4409 = vpop.f32.mrf.mxu0
        %v4410 = vadd.f32 0.0, %v4409
        %4411 = vmatmul.f32.gmra.mxu0 %v4337
        %v4412 = vpop.f32.mrf.mxu0
        %v4413 = vadd.f32 0.0, %v4412
        %4414 = vmatmul.f32.gmra.mxu0 %v4339
        %v4415 = vpop.f32.mrf.mxu0
        %4416 = vmatmul.f32.gmra.mxu0 %v4341
        %v4417 = vpop.f32.mrf.mxu0
        %v4418 = vadd.f32 0.0, %v4417
        %4419 = vmatmul.f32.gmra.mxu0 %v4343
        %v4420 = vpop.f32.mrf.mxu0
        %v4421 = vadd.f32 0.0, %v4420
        %4422 = vmatmul.f32.gmra.mxu0 %v4345
        %v4423 = vpop.f32.mrf.mxu0
        %4424 = vmatmul.f32.gmra.mxu0 %v4347
        %v4425 = vpop.f32.mrf.mxu0
        %v4426 = vadd.f32 0.0, %v4425
        %4427 = vmatmul.f32.gmra.mxu0 %v4349
        %v4428 = vpop.f32.mrf.mxu0
        %v4429 = vadd.f32 0.0, %v4428
        %4430 = vmatmul.f32.gmra.mxu0 %v4351
        %v4431 = vpop.f32.mrf.mxu0
        %4432 = vmatmul.f32.gmra.mxu0 %v4353
        %v4433 = vpop.f32.mrf.mxu0
        %v4434 = vadd.f32 0.0, %v4433
        %4435 = vmatmul.f32.gmra.mxu0 %v4355
        %v4436 = vpop.f32.mrf.mxu0
        %v4437 = vadd.f32 0.0, %v4436
        %4438 = vmatmul.f32.gmra.mxu0 %v4358
        %v4439 = vpop.f32.mrf.mxu0
        %4440 = vdwg.mxu0
        %v4441 = vadd.f32 %v4293, %v4378
        %v4442 = vadd.f32 %v4294, %v4381
        %v4443 = vadd.f32 %v4295, %v4386
        %v4444 = vadd.f32 %v4296, %v4389
        %v4445 = vadd.f32 %v4297, %v4394
        %v4446 = vadd.f32 %v4298, %v4397
        %v4447 = vadd.f32 %v4299, %v4402
        %v4448 = vadd.f32 %v4300, %v4405
        %v4449 = vadd.f32 %v4301, %v4410
        %v4450 = vadd.f32 %v4302, %v4413
        %v4451 = vadd.f32 %v4303, %v4418
        %v4452 = vadd.f32 %v4304, %v4421
        %v4453 = vadd.f32 %v4305, %v4426
        %v4454 = vadd.f32 %v4306, %v4429
        %v4455 = vadd.f32 %v4307, %v4434
        %v4456 = vadd.f32 %v4308, %v4437
        %s4457 = sadd.s32 %s3304, 2
        %s4458 = smul.u32 %s4457, 24
        %s4459 = scalar_lea.vmem [#allocation3], %s4458
        %v4460 = vld [vmem:[%s4459] sm:$0xff]
        %v4461 = vld [vmem:[%s4459 + $0x8] sm:$0xff]
        %v4462 = vld [vmem:[%s4459 + $0x10] sm:$0xff]
        %v4463 = vld [vmem:[%s4459 + $0x18] sm:$0xff]
        %v4464 = vld [vmem:[%s4459 + $0x20] sm:$0xff]
        %v4465 = vld [vmem:[%s4459 + $0x28] sm:$0xff]
        %v4466 = vld [vmem:[%s4459 + $0x30] sm:$0xff]
        %v4467 = vld [vmem:[%s4459 + $0x38] sm:$0xff]
        %v4468 = vld [vmem:[%s4459 + $0x40] sm:$0xff]
        %v4469 = vld [vmem:[%s4459 + $0x48] sm:$0xff]
        %v4470 = vld [vmem:[%s4459 + $0x50] sm:$0xff]
        %v4471 = vld [vmem:[%s4459 + $0x58] sm:$0xff]
        %v4472 = vld [vmem:[%s4459 + $0x60] sm:$0xff]
        %v4473 = vld [vmem:[%s4459 + $0x68] sm:$0xff]
        %v4474 = vld [vmem:[%s4459 + $0x70] sm:$0xff]
        %v4475 = vld [vmem:[%s4459 + $0x78] sm:$0xff]
        %v4476 = vld [vmem:[%s4459 + $0x80] sm:$0xff]
        %v4477 = vld [vmem:[%s4459 + $0x88] sm:$0xff]
        %v4478 = vld [vmem:[%s4459 + $0x90] sm:$0xff]
        %v4479 = vld [vmem:[%s4459 + $0x98] sm:$0xff]
        %v4480 = vld [vmem:[%s4459 + $0xa0] sm:$0xff]
        %v4481 = vld [vmem:[%s4459 + $0xa8] sm:$0xff]
        %v4482 = vld [vmem:[%s4459 + $0xb0] sm:$0xff]
        %v4483 = vld [vmem:[%s4459 + $0xb8] sm:$0xff]
        %v4508 = vrot.slane %v4460, 7
        %v4509 = vrot.slane %v4461, 7
        %v4510 = vsel %vm3355, %v4508, %v4509
        %v4511 = vrot.slane %v4462, 7
        %v4512 = vsel %vm3355, %v4509, %v4511
        %v4513 = vrot.slane %v4463, 7
        %v4514 = vsel %vm3355, %v4511, %v4513
        %v4515 = vrot.slane %v4464, 7
        %v4516 = vsel %vm3355, %v4513, %v4515
        %v4517 = vrot.slane %v4465, 7
        %v4518 = vsel %vm3355, %v4515, %v4517
        %v4519 = vrot.slane %v4466, 7
        %v4520 = vsel %vm3355, %v4517, %v4519
        %v4521 = vrot.slane %v4467, 7
        %v4522 = vsel %vm3355, %v4519, %v4521
        %v4523 = vrot.slane %v4468, 7
        %v4524 = vsel %vm3355, %v4521, %v4523
        %v4525 = vrot.slane %v4469, 7
        %v4526 = vsel %vm3355, %v4523, %v4525
        %v4527 = vrot.slane %v4470, 7
        %v4528 = vsel %vm3355, %v4525, %v4527
        %v4529 = vrot.slane %v4471, 7
        %v4530 = vsel %vm3355, %v4527, %v4529
        %v4531 = vrot.slane %v4472, 7
        %v4532 = vsel %vm3355, %v4529, %v4531
        %v4533 = vrot.slane %v4473, 7
        %v4534 = vsel %vm3355, %v4531, %v4533
        %v4535 = vrot.slane %v4474, 7
        %v4536 = vsel %vm3355, %v4533, %v4535
        %v4537 = vrot.slane %v4475, 7
        %v4538 = vsel %vm3355, %v4535, %v4537
        %v4539 = vrot.slane %v4476, 7
        %v4540 = vsel %vm3355, %v4537, %v4539
        %v4541 = vrot.slane %v4477, 7
        %v4542 = vsel %vm3355, %v4539, %v4541
        %v4543 = vrot.slane %v4478, 7
        %v4544 = vsel %vm3355, %v4541, %v4543
        %v4545 = vrot.slane %v4479, 7
        %v4546 = vsel %vm3355, %v4543, %v4545
        %v4547 = vrot.slane %v4480, 7
        %v4548 = vsel %vm3355, %v4545, %v4547
        %v4549 = vrot.slane %v4481, 7
        %v4550 = vsel %vm3355, %v4547, %v4549
        %v4551 = vrot.slane %v4482, 7
        %v4552 = vsel %vm3355, %v4549, %v4551
        %v4553 = vrot.slane %v4483, 7
        %v4554 = vsel %vm3355, %v4551, %v4553
        %v4556 = vsel %vm3355, 0.0, %v4508
        %v4557 = vrot.slane %v4460, 1
        %v4558 = vrot.slane %v4461, 1
        %v4559 = vsel %vm3405, %v4557, %v4558
        %v4560 = vrot.slane %v4462, 1
        %v4561 = vsel %vm3405, %v4558, %v4560
        %v4562 = vrot.slane %v4463, 1
        %v4563 = vsel %vm3405, %v4560, %v4562
        %v4564 = vrot.slane %v4464, 1
        %v4565 = vsel %vm3405, %v4562, %v4564
        %v4566 = vrot.slane %v4465, 1
        %v4567 = vsel %vm3405, %v4564, %v4566
        %v4568 = vrot.slane %v4466, 1
        %v4569 = vsel %vm3405, %v4566, %v4568
        %v4570 = vrot.slane %v4467, 1
        %v4571 = vsel %vm3405, %v4568, %v4570
        %v4572 = vrot.slane %v4468, 1
        %v4573 = vsel %vm3405, %v4570, %v4572
        %v4574 = vrot.slane %v4469, 1
        %v4575 = vsel %vm3405, %v4572, %v4574
        %v4576 = vrot.slane %v4470, 1
        %v4577 = vsel %vm3405, %v4574, %v4576
        %v4578 = vrot.slane %v4471, 1
        %v4579 = vsel %vm3405, %v4576, %v4578
        %v4580 = vrot.slane %v4472, 1
        %v4581 = vsel %vm3405, %v4578, %v4580
        %v4582 = vrot.slane %v4473, 1
        %v4583 = vsel %vm3405, %v4580, %v4582
        %v4584 = vrot.slane %v4474, 1
        %v4585 = vsel %vm3405, %v4582, %v4584
        %v4586 = vrot.slane %v4475, 1
        %v4587 = vsel %vm3405, %v4584, %v4586
        %v4588 = vrot.slane %v4476, 1
        %v4589 = vsel %vm3405, %v4586, %v4588
        %v4590 = vrot.slane %v4477, 1
        %v4591 = vsel %vm3405, %v4588, %v4590
        %v4592 = vrot.slane %v4478, 1
        %v4593 = vsel %vm3405, %v4590, %v4592
        %v4594 = vrot.slane %v4479, 1
        %v4595 = vsel %vm3405, %v4592, %v4594
        %v4596 = vrot.slane %v4480, 1
        %v4597 = vsel %vm3405, %v4594, %v4596
        %v4598 = vrot.slane %v4481, 1
        %v4599 = vsel %vm3405, %v4596, %v4598
        %v4600 = vrot.slane %v4482, 1
        %v4601 = vsel %vm3405, %v4598, %v4600
        %v4602 = vrot.slane %v4483, 1
        %v4603 = vsel %vm3405, %v4600, %v4602
        %v4605 = vsel %vm3405, %v4602, 0.0
        %s4606 = scalar_lea.vmem %s2, 48
        %v4607 = vld [vmem:[%s4606] sm:$0xff]
        %v4609 = vsel %vm279, %v4556, 0
        %v4611 = vsel %vm279, %v4510, 0
        %v4613 = vsel %vm279, %v4512, 0
        %v4615 = vsel %vm279, %v4514, 0
        %v4617 = vsel %vm279, %v4516, 0
        %v4619 = vsel %vm279, %v4518, 0
        %v4621 = vsel %vm279, %v4520, 0
        %v4623 = vsel %vm279, %v4522, 0
        %v4625 = vsel %vm279, %v4524, 0
        %v4627 = vsel %vm279, %v4526, 0
        %v4629 = vsel %vm279, %v4528, 0
        %v4631 = vsel %vm279, %v4530, 0
        %v4633 = vsel %vm279, %v4532, 0
        %v4635 = vsel %vm279, %v4534, 0
        %v4637 = vsel %vm279, %v4536, 0
        %v4639 = vsel %vm279, %v4538, 0
        %v4641 = vsel %vm279, %v4540, 0
        %v4643 = vsel %vm279, %v4542, 0
        %v4645 = vsel %vm279, %v4544, 0
        %v4647 = vsel %vm279, %v4546, 0
        %v4649 = vsel %vm279, %v4548, 0
        %v4651 = vsel %vm279, %v4550, 0
        %v4653 = vsel %vm279, %v4552, 0
        %v4655 = vsel %vm279, %v4554, 0
        %4657 = vmatpush.msra.mxu0 0.0
        %4658 = vmatpush.msra.mxu0 0.0
        %4659 = vmatpush.msra.mxu0 0.0
        %4660 = vmatpush.msra.mxu0 0.0
        %4661 = vmatpush.msra.mxu0 0.0
        %4662 = vmatpush.msra.mxu0 0.0
        %4663 = vmatpush.msra.mxu0 0.0
        %4664 = vmatpush.msra.mxu0 0.0
        %4665 = vmatpush.msra.mxu0 0.0
        %4666 = vmatpush.msra.mxu0 0.0
        %4667 = vmatpush.msra.mxu0 0.0
        %4668 = vmatpush.msra.mxu0 0.0
        %4669 = vmatpush.msra.mxu0 0.0
        %4670 = vmatpush.msra.mxu0 0.0
        %4671 = vmatpush.msra.mxu0 0.0
        %4672 = vmatpush.msra.mxu0 %v4607
        %4673 = vmatmul.f32.gmra.mxu0 %v4609
        %v4674 = vpop.f32.mrf.mxu0
        %v4675 = vadd.f32 0.0, %v4674
        %4676 = vmatmul.f32.gmra.mxu0 %v4611
        %v4677 = vpop.f32.mrf.mxu0
        %v4678 = vadd.f32 0.0, %v4677
        %4679 = vmatmul.f32.gmra.mxu0 %v4613
        %v4680 = vpop.f32.mrf.mxu0
        %4681 = vmatmul.f32.gmra.mxu0 %v4615
        %v4682 = vpop.f32.mrf.mxu0
        %v4683 = vadd.f32 0.0, %v4682
        %4684 = vmatmul.f32.gmra.mxu0 %v4617
        %v4685 = vpop.f32.mrf.mxu0
        %v4686 = vadd.f32 0.0, %v4685
        %4687 = vmatmul.f32.gmra.mxu0 %v4619
        %v4688 = vpop.f32.mrf.mxu0
        %4689 = vmatmul.f32.gmra.mxu0 %v4621
        %v4690 = vpop.f32.mrf.mxu0
        %v4691 = vadd.f32 0.0, %v4690
        %4692 = vmatmul.f32.gmra.mxu0 %v4623
        %v4693 = vpop.f32.mrf.mxu0
        %v4694 = vadd.f32 0.0, %v4693
        %4695 = vmatmul.f32.gmra.mxu0 %v4625
        %v4696 = vpop.f32.mrf.mxu0
        %4697 = vmatmul.f32.gmra.mxu0 %v4627
        %v4698 = vpop.f32.mrf.mxu0
        %v4699 = vadd.f32 0.0, %v4698
        %4700 = vmatmul.f32.gmra.mxu0 %v4629
        %v4701 = vpop.f32.mrf.mxu0
        %v4702 = vadd.f32 0.0, %v4701
        %4703 = vmatmul.f32.gmra.mxu0 %v4631
        %v4704 = vpop.f32.mrf.mxu0
        %4705 = vmatmul.f32.gmra.mxu0 %v4633
        %v4706 = vpop.f32.mrf.mxu0
        %v4707 = vadd.f32 0.0, %v4706
        %4708 = vmatmul.f32.gmra.mxu0 %v4635
        %v4709 = vpop.f32.mrf.mxu0
        %v4710 = vadd.f32 0.0, %v4709
        %4711 = vmatmul.f32.gmra.mxu0 %v4637
        %v4712 = vpop.f32.mrf.mxu0
        %4713 = vmatmul.f32.gmra.mxu0 %v4639
        %v4714 = vpop.f32.mrf.mxu0
        %v4715 = vadd.f32 0.0, %v4714
        %4716 = vmatmul.f32.gmra.mxu0 %v4641
        %v4717 = vpop.f32.mrf.mxu0
        %v4718 = vadd.f32 0.0, %v4717
        %4719 = vmatmul.f32.gmra.mxu0 %v4643
        %v4720 = vpop.f32.mrf.mxu0
        %4721 = vmatmul.f32.gmra.mxu0 %v4645
        %v4722 = vpop.f32.mrf.mxu0
        %v4723 = vadd.f32 0.0, %v4722
        %4724 = vmatmul.f32.gmra.mxu0 %v4647
        %v4725 = vpop.f32.mrf.mxu0
        %v4726 = vadd.f32 0.0, %v4725
        %4727 = vmatmul.f32.gmra.mxu0 %v4649
        %v4728 = vpop.f32.mrf.mxu0
        %4729 = vmatmul.f32.gmra.mxu0 %v4651
        %v4730 = vpop.f32.mrf.mxu0
        %v4731 = vadd.f32 0.0, %v4730
        %4732 = vmatmul.f32.gmra.mxu0 %v4653
        %v4733 = vpop.f32.mrf.mxu0
        %v4734 = vadd.f32 0.0, %v4733
        %4735 = vmatmul.f32.gmra.mxu0 %v4655
        %v4736 = vpop.f32.mrf.mxu0
        %4737 = vdwg.mxu0
        %v4738 = vadd.f32 %v4441, %v4675
        %v4739 = vadd.f32 %v4442, %v4678
        %v4740 = vadd.f32 %v4443, %v4683
        %v4741 = vadd.f32 %v4444, %v4686
        %v4742 = vadd.f32 %v4445, %v4691
        %v4743 = vadd.f32 %v4446, %v4694
        %v4744 = vadd.f32 %v4447, %v4699
        %v4745 = vadd.f32 %v4448, %v4702
        %v4746 = vadd.f32 %v4449, %v4707
        %v4747 = vadd.f32 %v4450, %v4710
        %v4748 = vadd.f32 %v4451, %v4715
        %v4749 = vadd.f32 %v4452, %v4718
        %v4750 = vadd.f32 %v4453, %v4723
        %v4751 = vadd.f32 %v4454, %v4726
        %v4752 = vadd.f32 %v4455, %v4731
        %v4753 = vadd.f32 %v4456, %v4734
        %s4754 = scalar_lea.vmem %s2, 56
        %v4755 = vld [vmem:[%s4754] sm:$0xff]
        %v4756 = vsel %vm279, %v4460, 0
        %v4758 = vsel %vm279, %v4461, 0
        %v4760 = vsel %vm279, %v4462, 0
        %v4762 = vsel %vm279, %v4463, 0
        %v4764 = vsel %vm279, %v4464, 0
        %v4766 = vsel %vm279, %v4465, 0
        %v4768 = vsel %vm279, %v4466, 0
        %v4770 = vsel %vm279, %v4467, 0
        %v4772 = vsel %vm279, %v4468, 0
        %v4774 = vsel %vm279, %v4469, 0
        %v4776 = vsel %vm279, %v4470, 0
        %v4778 = vsel %vm279, %v4471, 0
        %v4780 = vsel %vm279, %v4472, 0
        %v4782 = vsel %vm279, %v4473, 0
        %v4784 = vsel %vm279, %v4474, 0
        %v4786 = vsel %vm279, %v4475, 0
        %v4788 = vsel %vm279, %v4476, 0
        %v4790 = vsel %vm279, %v4477, 0
        %v4792 = vsel %vm279, %v4478, 0
        %v4794 = vsel %vm279, %v4479, 0
        %v4796 = vsel %vm279, %v4480, 0
        %v4798 = vsel %vm279, %v4481, 0
        %v4800 = vsel %vm279, %v4482, 0
        %v4802 = vsel %vm279, %v4483, 0
        %4804 = vmatpush.msra.mxu0 0.0
        %4805 = vmatpush.msra.mxu0 0.0
        %4806 = vmatpush.msra.mxu0 0.0
        %4807 = vmatpush.msra.mxu0 0.0
        %4808 = vmatpush.msra.mxu0 0.0
        %4809 = vmatpush.msra.mxu0 0.0
        %4810 = vmatpush.msra.mxu0 0.0
        %4811 = vmatpush.msra.mxu0 0.0
        %4812 = vmatpush.msra.mxu0 0.0
        %4813 = vmatpush.msra.mxu0 0.0
        %4814 = vmatpush.msra.mxu0 0.0
        %4815 = vmatpush.msra.mxu0 0.0
        %4816 = vmatpush.msra.mxu0 0.0
        %4817 = vmatpush.msra.mxu0 0.0
        %4818 = vmatpush.msra.mxu0 0.0
        %4819 = vmatpush.msra.mxu0 %v4755
        %4820 = vmatmul.f32.gmra.mxu0 %v4756
        %v4821 = vpop.f32.mrf.mxu0
        %v4822 = vadd.f32 0.0, %v4821
        %4823 = vmatmul.f32.gmra.mxu0 %v4758
        %v4824 = vpop.f32.mrf.mxu0
        %v4825 = vadd.f32 0.0, %v4824
        %4826 = vmatmul.f32.gmra.mxu0 %v4760
        %v4827 = vpop.f32.mrf.mxu0
        %4828 = vmatmul.f32.gmra.mxu0 %v4762
        %v4829 = vpop.f32.mrf.mxu0
        %v4830 = vadd.f32 0.0, %v4829
        %4831 = vmatmul.f32.gmra.mxu0 %v4764
        %v4832 = vpop.f32.mrf.mxu0
        %v4833 = vadd.f32 0.0, %v4832
        %4834 = vmatmul.f32.gmra.mxu0 %v4766
        %v4835 = vpop.f32.mrf.mxu0
        %4836 = vmatmul.f32.gmra.mxu0 %v4768
        %v4837 = vpop.f32.mrf.mxu0
        %v4838 = vadd.f32 0.0, %v4837
        %4839 = vmatmul.f32.gmra.mxu0 %v4770
        %v4840 = vpop.f32.mrf.mxu0
        %v4841 = vadd.f32 0.0, %v4840
        %4842 = vmatmul.f32.gmra.mxu0 %v4772
        %v4843 = vpop.f32.mrf.mxu0
        %4844 = vmatmul.f32.gmra.mxu0 %v4774
        %v4845 = vpop.f32.mrf.mxu0
        %v4846 = vadd.f32 0.0, %v4845
        %4847 = vmatmul.f32.gmra.mxu0 %v4776
        %v4848 = vpop.f32.mrf.mxu0
        %v4849 = vadd.f32 0.0, %v4848
        %4850 = vmatmul.f32.gmra.mxu0 %v4778
        %v4851 = vpop.f32.mrf.mxu0
        %4852 = vmatmul.f32.gmra.mxu0 %v4780
        %v4853 = vpop.f32.mrf.mxu0
        %v4854 = vadd.f32 0.0, %v4853
        %4855 = vmatmul.f32.gmra.mxu0 %v4782
        %v4856 = vpop.f32.mrf.mxu0
        %v4857 = vadd.f32 0.0, %v4856
        %4858 = vmatmul.f32.gmra.mxu0 %v4784
        %v4859 = vpop.f32.mrf.mxu0
        %4860 = vmatmul.f32.gmra.mxu0 %v4786
        %v4861 = vpop.f32.mrf.mxu0
        %v4862 = vadd.f32 0.0, %v4861
        %4863 = vmatmul.f32.gmra.mxu0 %v4788
        %v4864 = vpop.f32.mrf.mxu0
        %v4865 = vadd.f32 0.0, %v4864
        %4866 = vmatmul.f32.gmra.mxu0 %v4790
        %v4867 = vpop.f32.mrf.mxu0
        %4868 = vmatmul.f32.gmra.mxu0 %v4792
        %v4869 = vpop.f32.mrf.mxu0
        %v4870 = vadd.f32 0.0, %v4869
        %4871 = vmatmul.f32.gmra.mxu0 %v4794
        %v4872 = vpop.f32.mrf.mxu0
        %v4873 = vadd.f32 0.0, %v4872
        %4874 = vmatmul.f32.gmra.mxu0 %v4796
        %v4875 = vpop.f32.mrf.mxu0
        %4876 = vmatmul.f32.gmra.mxu0 %v4798
        %v4877 = vpop.f32.mrf.mxu0
        %v4878 = vadd.f32 0.0, %v4877
        %4879 = vmatmul.f32.gmra.mxu0 %v4800
        %v4880 = vpop.f32.mrf.mxu0
        %v4881 = vadd.f32 0.0, %v4880
        %4882 = vmatmul.f32.gmra.mxu0 %v4802
        %v4883 = vpop.f32.mrf.mxu0
        %4884 = vdwg.mxu0
        %v4885 = vadd.f32 %v4738, %v4822
        %v4886 = vadd.f32 %v4739, %v4825
        %v4887 = vadd.f32 %v4740, %v4830
        %v4888 = vadd.f32 %v4741, %v4833
        %v4889 = vadd.f32 %v4742, %v4838
        %v4890 = vadd.f32 %v4743, %v4841
        %v4891 = vadd.f32 %v4744, %v4846
        %v4892 = vadd.f32 %v4745, %v4849
        %v4893 = vadd.f32 %v4746, %v4854
        %v4894 = vadd.f32 %v4747, %v4857
        %v4895 = vadd.f32 %v4748, %v4862
        %v4896 = vadd.f32 %v4749, %v4865
        %v4897 = vadd.f32 %v4750, %v4870
        %v4898 = vadd.f32 %v4751, %v4873
        %v4899 = vadd.f32 %v4752, %v4878
        %v4900 = vadd.f32 %v4753, %v4881
        %s4901 = scalar_lea.vmem %s2, 64
        %v4902 = vld [vmem:[%s4901] sm:$0xff]
        %v4903 = vsel %vm279, %v4559, 0
        %v4905 = vsel %vm279, %v4561, 0
        %v4907 = vsel %vm279, %v4563, 0
        %v4909 = vsel %vm279, %v4565, 0
        %v4911 = vsel %vm279, %v4567, 0
        %v4913 = vsel %vm279, %v4569, 0
        %v4915 = vsel %vm279, %v4571, 0
        %v4917 = vsel %vm279, %v4573, 0
        %v4919 = vsel %vm279, %v4575, 0
        %v4921 = vsel %vm279, %v4577, 0
        %v4923 = vsel %vm279, %v4579, 0
        %v4925 = vsel %vm279, %v4581, 0
        %v4927 = vsel %vm279, %v4583, 0
        %v4929 = vsel %vm279, %v4585, 0
        %v4931 = vsel %vm279, %v4587, 0
        %v4933 = vsel %vm279, %v4589, 0
        %v4935 = vsel %vm279, %v4591, 0
        %v4937 = vsel %vm279, %v4593, 0
        %v4939 = vsel %vm279, %v4595, 0
        %v4941 = vsel %vm279, %v4597, 0
        %v4943 = vsel %vm279, %v4599, 0
        %v4945 = vsel %vm279, %v4601, 0
        %v4947 = vsel %vm279, %v4603, 0
        %v4950 = vsel %vm279, %v4605, 0
        %4952 = vmatpush.msra.mxu0 0.0
        %4953 = vmatpush.msra.mxu0 0.0
        %4954 = vmatpush.msra.mxu0 0.0
        %4955 = vmatpush.msra.mxu0 0.0
        %4956 = vmatpush.msra.mxu0 0.0
        %4957 = vmatpush.msra.mxu0 0.0
        %4958 = vmatpush.msra.mxu0 0.0
        %4959 = vmatpush.msra.mxu0 0.0
        %4960 = vmatpush.msra.mxu0 0.0
        %4961 = vmatpush.msra.mxu0 0.0
        %4962 = vmatpush.msra.mxu0 0.0
        %4963 = vmatpush.msra.mxu0 0.0
        %4964 = vmatpush.msra.mxu0 0.0
        %4965 = vmatpush.msra.mxu0 0.0
        %4966 = vmatpush.msra.mxu0 0.0
        %4967 = vmatpush.msra.mxu0 %v4902
        %4968 = vmatmul.f32.gmra.mxu0 %v4903
        %v4969 = vpop.f32.mrf.mxu0
        %v4970 = vadd.f32 0.0, %v4969
        %4971 = vmatmul.f32.gmra.mxu0 %v4905
        %v4972 = vpop.f32.mrf.mxu0
        %v4973 = vadd.f32 0.0, %v4972
        %4974 = vmatmul.f32.gmra.mxu0 %v4907
        %v4975 = vpop.f32.mrf.mxu0
        %4976 = vmatmul.f32.gmra.mxu0 %v4909
        %v4977 = vpop.f32.mrf.mxu0
        %v4978 = vadd.f32 0.0, %v4977
        %4979 = vmatmul.f32.gmra.mxu0 %v4911
        %v4980 = vpop.f32.mrf.mxu0
        %v4981 = vadd.f32 0.0, %v4980
        %4982 = vmatmul.f32.gmra.mxu0 %v4913
        %v4983 = vpop.f32.mrf.mxu0
        %4984 = vmatmul.f32.gmra.mxu0 %v4915
        %v4985 = vpop.f32.mrf.mxu0
        %v4986 = vadd.f32 0.0, %v4985
        %4987 = vmatmul.f32.gmra.mxu0 %v4917
        %v4988 = vpop.f32.mrf.mxu0
        %v4989 = vadd.f32 0.0, %v4988
        %4990 = vmatmul.f32.gmra.mxu0 %v4919
        %v4991 = vpop.f32.mrf.mxu0
        %4992 = vmatmul.f32.gmra.mxu0 %v4921
        %v4993 = vpop.f32.mrf.mxu0
        %v4994 = vadd.f32 0.0, %v4993
        %4995 = vmatmul.f32.gmra.mxu0 %v4923
        %v4996 = vpop.f32.mrf.mxu0
        %v4997 = vadd.f32 0.0, %v4996
        %4998 = vmatmul.f32.gmra.mxu0 %v4925
        %v4999 = vpop.f32.mrf.mxu0
        %5000 = vmatmul.f32.gmra.mxu0 %v4927
        %v5001 = vpop.f32.mrf.mxu0
        %v5002 = vadd.f32 0.0, %v5001
        %5003 = vmatmul.f32.gmra.mxu0 %v4929
        %v5004 = vpop.f32.mrf.mxu0
        %v5005 = vadd.f32 0.0, %v5004
        %5006 = vmatmul.f32.gmra.mxu0 %v4931
        %v5007 = vpop.f32.mrf.mxu0
        %5008 = vmatmul.f32.gmra.mxu0 %v4933
        %v5009 = vpop.f32.mrf.mxu0
        %v5010 = vadd.f32 0.0, %v5009
        %5011 = vmatmul.f32.gmra.mxu0 %v4935
        %v5012 = vpop.f32.mrf.mxu0
        %v5013 = vadd.f32 0.0, %v5012
        %5014 = vmatmul.f32.gmra.mxu0 %v4937
        %v5015 = vpop.f32.mrf.mxu0
        %5016 = vmatmul.f32.gmra.mxu0 %v4939
        %v5017 = vpop.f32.mrf.mxu0
        %v5018 = vadd.f32 0.0, %v5017
        %5019 = vmatmul.f32.gmra.mxu0 %v4941
        %v5020 = vpop.f32.mrf.mxu0
        %v5021 = vadd.f32 0.0, %v5020
        %5022 = vmatmul.f32.gmra.mxu0 %v4943
        %v5023 = vpop.f32.mrf.mxu0
        %5024 = vmatmul.f32.gmra.mxu0 %v4945
        %v5025 = vpop.f32.mrf.mxu0
        %v5026 = vadd.f32 0.0, %v5025
        %5027 = vmatmul.f32.gmra.mxu0 %v4947
        %v5028 = vpop.f32.mrf.mxu0
        %v5029 = vadd.f32 0.0, %v5028
        %5030 = vmatmul.f32.gmra.mxu0 %v4950
        %v5031 = vpop.f32.mrf.mxu0
        %5032 = vdwg.mxu0
        %v5033 = vadd.f32 %v4885, %v4970
        %v5034 = vadd.f32 %v4886, %v4973
        %v5035 = vadd.f32 %v4887, %v4978
        %v5036 = vadd.f32 %v4888, %v4981
        %v5037 = vadd.f32 %v4889, %v4986
        %v5038 = vadd.f32 %v4890, %v4989
        %v5039 = vadd.f32 %v4891, %v4994
        %v5040 = vadd.f32 %v4892, %v4997
        %v5041 = vadd.f32 %v4893, %v5002
        %v5042 = vadd.f32 %v4894, %v5005
        %v5043 = vadd.f32 %v4895, %v5010
        %v5044 = vadd.f32 %v4896, %v5013
        %v5045 = vadd.f32 %v4897, %v5018
        %v5046 = vadd.f32 %v4898, %v5021
        %v5047 = vadd.f32 %v4899, %v5026
        %v5048 = vadd.f32 %v4900, %v5029
        %s5049 = scalar_lea.vmem [#allocation2], %s3866
        %v5050 = vld [vmem:[%s5049] sm:$0xff]
        %v5051 = vld [vmem:[%s5049 + $0x8] sm:$0xff]
        %v5052 = vld [vmem:[%s5049 + $0x18] sm:$0xff]
        %v5053 = vld [vmem:[%s5049 + $0x20] sm:$0xff]
        %v5054 = vld [vmem:[%s5049 + $0x30] sm:$0xff]
        %v5055 = vld [vmem:[%s5049 + $0x38] sm:$0xff]
        %v5056 = vld [vmem:[%s5049 + $0x48] sm:$0xff]
        %v5057 = vld [vmem:[%s5049 + $0x50] sm:$0xff]
        %v5058 = vld [vmem:[%s5049 + $0x60] sm:$0xff]
        %v5059 = vld [vmem:[%s5049 + $0x68] sm:$0xff]
        %v5060 = vld [vmem:[%s5049 + $0x78] sm:$0xff]
        %v5061 = vld [vmem:[%s5049 + $0x80] sm:$0xff]
        %v5062 = vld [vmem:[%s5049 + $0x90] sm:$0xff]
        %v5063 = vld [vmem:[%s5049 + $0x98] sm:$0xff]
        %v5064 = vld [vmem:[%s5049 + $0xa8] sm:$0xff]
        %v5065 = vld [vmem:[%s5049 + $0xb0] sm:$0xff]
        %v5067 = vperm.slane %v377, 0
        %v5069 = vmul.f32 %v5033, %v5067
        %v5070 = vmul.f32 %v5034, %v5067
        %v5071 = vmul.f32 %v5035, %v5067
        %v5072 = vmul.f32 %v5036, %v5067
        %v5073 = vmul.f32 %v5037, %v5067
        %v5074 = vmul.f32 %v5038, %v5067
        %v5075 = vmul.f32 %v5039, %v5067
        %v5076 = vmul.f32 %v5040, %v5067
        %v5077 = vmul.f32 %v5041, %v5067
        %v5078 = vmul.f32 %v5042, %v5067
        %v5079 = vmul.f32 %v5043, %v5067
        %v5080 = vmul.f32 %v5044, %v5067
        %v5081 = vmul.f32 %v5045, %v5067
        %v5082 = vmul.f32 %v5046, %v5067
        %v5083 = vmul.f32 %v5047, %v5067
        %v5084 = vmul.f32 %v5048, %v5067
        %v5086 = vperm.slane %v378, 0
        %v5088 = vadd.f32 %v5069, %v5086
        %v5089 = vadd.f32 %v5070, %v5086
        %v5090 = vadd.f32 %v5071, %v5086
        %v5091 = vadd.f32 %v5072, %v5086
        %v5092 = vadd.f32 %v5073, %v5086
        %v5093 = vadd.f32 %v5074, %v5086
        %v5094 = vadd.f32 %v5075, %v5086
        %v5095 = vadd.f32 %v5076, %v5086
        %v5096 = vadd.f32 %v5077, %v5086
        %v5097 = vadd.f32 %v5078, %v5086
        %v5098 = vadd.f32 %v5079, %v5086
        %v5099 = vadd.f32 %v5080, %v5086
        %v5100 = vadd.f32 %v5081, %v5086
        %v5101 = vadd.f32 %v5082, %v5086
        %v5102 = vadd.f32 %v5083, %v5086
        %v5103 = vadd.f32 %v5084, %v5086
        %v5104 = vadd.f32 %v5088, %v5050
        %v5105 = vadd.f32 %v5089, %v5051
        %v5106 = vadd.f32 %v5090, %v5052
        %v5107 = vadd.f32 %v5091, %v5053
        %v5108 = vadd.f32 %v5092, %v5054
        %v5109 = vadd.f32 %v5093, %v5055
        %v5110 = vadd.f32 %v5094, %v5056
        %v5111 = vadd.f32 %v5095, %v5057
        %v5112 = vadd.f32 %v5096, %v5058
        %v5113 = vadd.f32 %v5097, %v5059
        %v5114 = vadd.f32 %v5098, %v5060
        %v5115 = vadd.f32 %v5099, %v5061
        %v5116 = vadd.f32 %v5100, %v5062
        %v5117 = vadd.f32 %v5101, %v5063
        %v5118 = vadd.f32 %v5102, %v5064
        %v5119 = vadd.f32 %v5103, %v5065
        %v5120 = vmax.f32 %v5104, 0.0
        %v5121 = vmax.f32 %v5105, 0.0
        %v5122 = vmax.f32 %v5106, 0.0
        %v5123 = vmax.f32 %v5107, 0.0
        %v5124 = vmax.f32 %v5108, 0.0
        %v5125 = vmax.f32 %v5109, 0.0
        %v5126 = vmax.f32 %v5110, 0.0
        %v5127 = vmax.f32 %v5111, 0.0
        %v5128 = vmax.f32 %v5112, 0.0
        %v5129 = vmax.f32 %v5113, 0.0
        %v5130 = vmax.f32 %v5114, 0.0
        %v5131 = vmax.f32 %v5115, 0.0
        %v5132 = vmax.f32 %v5116, 0.0
        %v5133 = vmax.f32 %v5117, 0.0
        %v5134 = vmax.f32 %v5118, 0.0
        %v5135 = vmax.f32 %v5119, 0.0
        %s5136 = smul.u32 %s3304, 16
        %s5137 = scalar_lea.vmem %s278, %s5136
        %5138 = vst.msk [vmem:[%s5137] sm:$0xff] %vm279, %v5120
        %5139 = vst.msk [vmem:[%s5137 + $0x8] sm:$0xff] %vm279, %v5121
        %5140 = vst.msk [vmem:[%s5137 + $0x10] sm:$0xff] %vm279, %v5122
        %5141 = vst.msk [vmem:[%s5137 + $0x18] sm:$0xff] %vm279, %v5123
        %5142 = vst.msk [vmem:[%s5137 + $0x20] sm:$0xff] %vm279, %v5124
        %5143 = vst.msk [vmem:[%s5137 + $0x28] sm:$0xff] %vm279, %v5125
        %5144 = vst.msk [vmem:[%s5137 + $0x30] sm:$0xff] %vm279, %v5126
        %5145 = vst.msk [vmem:[%s5137 + $0x38] sm:$0xff] %vm279, %v5127
        %5146 = vst.msk [vmem:[%s5137 + $0x40] sm:$0xff] %vm279, %v5128
        %5147 = vst.msk [vmem:[%s5137 + $0x48] sm:$0xff] %vm279, %v5129
        %5148 = vst.msk [vmem:[%s5137 + $0x50] sm:$0xff] %vm279, %v5130
        %5149 = vst.msk [vmem:[%s5137 + $0x58] sm:$0xff] %vm279, %v5131
        %5150 = vst.msk [vmem:[%s5137 + $0x60] sm:$0xff] %vm279, %v5132
        %5151 = vst.msk [vmem:[%s5137 + $0x68] sm:$0xff] %vm279, %v5133
        %5152 = vst.msk [vmem:[%s5137 + $0x70] sm:$0xff] %vm279, %v5134
        %5153 = vst.msk [vmem:[%s5137 + $0x78] sm:$0xff] %vm279, %v5135
      $region60: #{basic_block_forward_nhwc.1} parent=47 // loop_footer
        %s3303 = sadd.s32 1, %s3299
      $region61: #{basic_block_forward_nhwc.1} parent=47 // loop_footer_branch
        %3298 = sbr.rel target = $region57
      $region62: #{basic_block_forward_nhwc.1} parent=47 // loop_exit
        _
      %p5154 = scmp.lt.s32.totalorder %s18, 1
      %s5155 = scalar_select %p5154, %s18, 1
      %s5156 = smul.addr %s5155, 32
      %s5157 = smul.addr %s5156, 8
      %s5158 = scalar_lea.vmem %s7, %s5157
      // Predicated region
      $region63: #{basic_block_forward_nhwc.1} parent=47 // pred_check
        %p5159 = pneg %p188
      $region64: #{basic_block_forward_nhwc.1} parent=47 // pred_check_branch
        %5161 = sbr.rel (%p5159) target = $region66
      $region65: #{basic_block_forward_nhwc.1} parent=47 // pred_region
        _
      $region66: #{basic_block_forward_nhwc.1} parent=47 // pred_fallthru
        _
    $region48: #{basic_block_forward_nhwc.1} parent=5 // pred_fallthru
      _
    %p5162 = scmp.le.s32.totalorder 2, %s13
    // Predicated region
    $region67: #{basic_block_forward_nhwc.1} parent=5 // pred_check
      %p5163 = pneg %p5162
    $region68: #{basic_block_forward_nhwc.1} parent=5 // pred_check_branch
      %5165 = sbr.rel (%p5163) target = $region70
    $region69: #{basic_block_forward_nhwc.1} parent=5 // pred_region
      %s5166 = ssub.s32 %s13, 2
      // Predicated region
      $region71: #{basic_block_forward_nhwc.1} parent=69 // pred_check
        %p5167 = pneg %p194
      $region72: #{basic_block_forward_nhwc.1} parent=69 // pred_check_branch
        %5169 = sbr.rel (%p5167) target = $region74
      $region73: #{basic_block_forward_nhwc.1} parent=69 // pred_region
        %p5170 = scmp.lt.s32.totalorder %s19, 1
        %s5171 = scalar_select %p5170, %s19, 1
        %s5172 = smul.addr %s5171, 32
        %s5173 = smul.addr %s5172, 8
        %s5174 = scalar_lea.vmem %s7, %s5173
      $region74: #{basic_block_forward_nhwc.1} parent=69 // pred_fallthru
        _
    $region70: #{basic_block_forward_nhwc.1} parent=5 // pred_fallthru
      _
  $region6: #{basic_block_forward_nhwc.1} parent=0 // loop_footer
    %s17 = sadd.s32 1, %s13
  $region7: #{basic_block_forward_nhwc.1} parent=0 // loop_footer_branch
    %12 = sbr.rel target = $region3
  $region8: #{basic_block_forward_nhwc.1} parent=0 // loop_exit
    _

</llo_original>
